<compile_context>
chip_gen: v7x
topology: tpu7x:2x2x1
jax: 0.10.0
libtpu: 0.0.40
codegen_flags: <defaults>
</compile_context>

<pallas_src>
import functools

import jax
import jax.numpy as jnp
import numpy as np
from jax import lax
from jax.experimental import pallas as pl
from jax.experimental.pallas import tpu as pltpu

BN_EPS = 1e-5
LANES = 128                      # Cout is lane-padded to a multiple of this


def _round_up(x, m):
    return ((x + m - 1) // m) * m


def _hw_budgets():
    # Size the per-call VMEM budget / max tile rows from the actual chip generation:
    # ~3/4 of physical VMEM (96 MiB on v5e/v6e, 48 MiB on v7x).
    try:
        cap = int(pltpu.get_tpu_info().vmem_capacity_bytes)
    except Exception:  # conservative fallback if the query is unavailable
        cap = 64 * 1024 * 1024
    vmem_limit = int(min(cap * 3 // 4, 112 * 1024 * 1024))
    tm_cap = 1024 if cap > 96 * 1024 * 1024 else 512
    return vmem_limit, tm_cap


VMEM_LIMIT, TM_CAP = _hw_budgets()


def _pick_tiles(m, *, target_steps=4):
    """Rows-per-tile + grid length: >=2 steps for DMA/compute overlap, prefer an even
    step count (v7x has 2 TensorCores), tiles a multiple of 16 sublanes (bf16 packing)."""
    tm = max(16, min(TM_CAP, _round_up(pl.cdiv(m, target_steps), 16)))
    g = pl.cdiv(m, tm)
    if g > 1 and g % 2 == 1:
        tm_alt = max(16, _round_up(pl.cdiv(m, g + 1), 16))
        if pl.cdiv(m, tm_alt) % 2 == 0:
            tm, g = tm_alt, pl.cdiv(m, tm_alt)
    return tm, g


def _mosaic_params():
    return pltpu.CompilerParams(dimension_semantics=("parallel",),
                                vmem_limit_bytes=VMEM_LIMIT)


# ---------------------------------------------------------------------------
# Pallas kernels
# ---------------------------------------------------------------------------
def _matmul_stats_kernel(a_ref, b_ref, y_ref, st_ref, *, m_total, tm, need_mask):
    # (tm, K) bf16 x (K, Cp) bf16 -> f32 on the MXU; y stored bf16, BN partials in f32
    # taken from the f32 accumulator before the cast.
    y = jnp.dot(a_ref[...], b_ref[...], preferred_element_type=jnp.float32)
    y_ref[...] = y.astype(y_ref.dtype)
    if need_mask:  # trace-time branch: only emitted when M % tm != 0
        row = pl.program_id(0) * tm + lax.broadcasted_iota(jnp.int32, (tm, 1), 0)
        y = jnp.where(row < m_total, y, 0.0)
    st_ref[0:1, :] = jnp.sum(y, axis=0, keepdims=True)        # per-channel sum
    st_ref[1:2, :] = jnp.sum(y * y, axis=0, keepdims=True)    # per-channel sumsq


def _conv_taps_stats_kernel(x_ref, w_ref, m_ref, y_ref, st_ref, *, k, wp, ck, length):
    # Implicit-GEMM stride-1 conv: one padded, row-flattened image resident in VMEM;
    # k*k shifted contiguous row windows matmul'd against the per-tap weight blocks,
    # accumulated in f32.  Columns >= Wo of each output row are over-compute garbage
    # (wrap across the row boundary) and are masked out of the BN statistics.
    acc = None
    for ki in range(k):
        for kj in range(k):
            t = ki * k + kj
            off = ki * wp + kj
            a = x_ref[0, off:off + length, :]                 # (length, ck) bf16
            wt = w_ref[t * ck:(t + 1) * ck, :]                # (ck, Cp) bf16
            d = jnp.dot(a, wt, preferred_element_type=jnp.float32)
            acc = d if acc is None else acc + d
    y_ref[0] = acc.astype(y_ref.dtype)
    masked = acc * m_ref[...]                                 # zero invalid columns
    st_ref[0:1, :] = jnp.sum(masked, axis=0, keepdims=True)
    st_ref[1:2, :] = jnp.sum(masked * acc, axis=0, keepdims=True)


def _bn_relu_kernel(y_ref, sc_ref, sh_ref, o_ref):
    # Fused BN apply (precomputed scale/shift) + ReLU; bf16 in, f32 math, cast on store.
    y = y_ref[...].astype(jnp.float32) * sc_ref[...] + sh_ref[...]
    o_ref[...] = jnp.maximum(y, 0.0).astype(o_ref.dtype)


def _bn_add_relu_pad_kernel(y_ref, r_ref, e_ref, sc_ref, sh_ref, o_ref):
    # Fused BN apply + residual add + final ReLU.  The (tm, Cr) shortcut is channel-
    # padded to (tm, Cp) in-register via a tiny identity matmul (MXU is idle here),
    # avoiding a mostly-zero HBM slab.
    y = y_ref[...].astype(jnp.float32) * sc_ref[...] + sh_ref[...]
    r = jnp.dot(r_ref[...], e_ref[...], preferred_element_type=jnp.float32)
    o_ref[...] = jnp.maximum(y + r, 0.0).astype(o_ref.dtype)


def _bn_add_relu_kernel(y_ref, r_ref, sc_ref, sh_ref, o_ref):
    # Same as above when the shortcut already has Cp channels.
    y = y_ref[...].astype(jnp.float32) * sc_ref[...] + sh_ref[...]
    o_ref[...] = jnp.maximum(y + r_ref[...].astype(jnp.float32), 0.0).astype(o_ref.dtype)


# ---------------------------------------------------------------------------
# Pallas wrappers
# ---------------------------------------------------------------------------
def conv_matmul_stats(a, b):
    """a: (M, K) bf16 patches, b: (K, Cp) bf16 weights (Cp % 128 == 0).
    Returns y: (M, Cp) bf16 plus per-channel f32 (sum, sumsq) over the true M rows."""
    M, K = a.shape
    _, Cp = b.shape
    tm, g = _pick_tiles(M)
    kernel = functools.partial(_matmul_stats_kernel, m_total=M, tm=tm,
                               need_mask=(M % tm) != 0)
    y, st = pl.pallas_call(
        kernel,
        out_shape=(jax.ShapeDtypeStruct((M, Cp), jnp.bfloat16),
                   jax.ShapeDtypeStruct((g * 8, Cp), jnp.float32)),
        grid=(g,),
        in_specs=[pl.BlockSpec((tm, K), lambda i: (i, 0)),    # A tile streamed over M
                  pl.BlockSpec((K, Cp), lambda i: (0, 0))],   # B resident across grid
        out_specs=(pl.BlockSpec((tm, Cp), lambda i: (i, 0)),
                   pl.BlockSpec((8, Cp), lambda i: (i, 0))),
        compiler_params=_mosaic_params(),
    )(a, b)
    # TODO(synk): add Cp (tn=256) and K ("arbitrary" + f32 VMEM accumulator) grid axes for
    # wide layers so the resident weight block stays inside v7x's 64 MiB VMEM.
    st = st.reshape(g, 8, Cp)
    return y, jnp.sum(st[:, 0, :], axis=0), jnp.sum(st[:, 1, :], axis=0)


def conv_implicit_stats(xp_flat, w_mat, col_mask, *, k, wp, length):
    """Stride-1 conv as an implicit GEMM over the k*k taps of a padded, row-flattened
    image.  xp_flat: (N, Lp, Ck) bf16, w_mat: (k*k*Ck, Cp) bf16, col_mask: (length, 1)
    f32 with 1.0 on valid output columns.  Returns y_wide: (N, length, Cp) bf16 plus
    per-channel f32 (sum, sumsq) over the valid output positions only."""
    N, Lp, Ck = xp_flat.shape
    KK, Cp = w_mat.shape
    kernel = functools.partial(_conv_taps_stats_kernel, k=k, wp=wp, ck=Ck, length=length)
    y, st = pl.pallas_call(
        kernel,
        out_shape=(jax.ShapeDtypeStruct((N, length, Cp), jnp.bfloat16),
                   jax.ShapeDtypeStruct((N * 8, Cp), jnp.float32)),
        grid=(N,),
        in_specs=[pl.BlockSpec((1, Lp, Ck), lambda n: (n, 0, 0)),
                  pl.BlockSpec((KK, Cp), lambda n: (0, 0)),       # weights resident
                  pl.BlockSpec((length, 1), lambda n: (0, 0))],   # column-valid mask
        out_specs=(pl.BlockSpec((1, length, Cp), lambda n: (n, 0, 0)),
                   pl.BlockSpec((8, Cp), lambda n: (n, 0))),
        compiler_params=_mosaic_params(),
    )(xp_flat, w_mat, col_mask)
    # TODO(synk): for very large images / batch-1 add an H-tile grid axis (haloed dynamic
    # pl.ds slices) so the accumulator stays small and the grid keeps >= 4 steps.
    st = st.reshape(N, 8, Cp)
    return y, jnp.sum(st[:, 0, :], axis=0), jnp.sum(st[:, 1, :], axis=0)


def bn_scale_shift(s1, s2, gamma_p, beta_p, m):
    """Fold batch statistics + gamma/beta into per-channel scale/shift vectors."""
    mean = s1 / m
    # E[x^2]-E[x]^2 (biased), matching BatchNorm2d training statistics.  Beware of
    # cancellation if reused where conv outputs are far from zero-mean.
    var = jnp.maximum(s2 / m - mean * mean, 0.0)
    inv = lax.rsqrt(var + BN_EPS)
    scale = gamma_p * inv
    shift = beta_p - mean * scale
    return scale, shift


def bn_apply_relu(y, scale, shift, *, out_dtype, residual=None, embed=None):
    """Tiled fused (x*scale + shift) [+ channel-padded residual] -> ReLU over (M, Cp)."""
    M, Cp = y.shape
    tm, g = _pick_tiles(M)
    tile = pl.BlockSpec((tm, Cp), lambda i: (i, 0))
    vec = pl.BlockSpec((1, Cp), lambda i: (0, 0))      # grid-invariant resident block
    sc = scale.reshape(1, Cp).astype(jnp.float32)
    sh = shift.reshape(1, Cp).astype(jnp.float32)
    if residual is None:
        return pl.pallas_call(
            _bn_relu_kernel,
            out_shape=jax.ShapeDtypeStruct((M, Cp), out_dtype),
            grid=(g,), in_specs=[tile, vec, vec], out_specs=tile,
            compiler_params=_mosaic_params(),
        )(y, sc, sh)
    Cr = residual.shape[1]
    rtile = pl.BlockSpec((tm, Cr), lambda i: (i, 0))
    if Cr == Cp:
        return pl.pallas_call(
            _bn_add_relu_kernel,
            out_shape=jax.ShapeDtypeStruct((M, Cp), out_dtype),
            grid=(g,), in_specs=[tile, rtile, vec, vec], out_specs=tile,
            compiler_params=_mosaic_params(),
        )(y, residual, sc, sh)
    emat = pl.BlockSpec((Cr, Cp), lambda i: (0, 0))
    return pl.pallas_call(
        _bn_add_relu_pad_kernel,
        out_shape=jax.ShapeDtypeStruct((M, Cp), out_dtype),
        grid=(g,), in_specs=[tile, rtile, emat, vec, vec], out_specs=tile,
        compiler_params=_mosaic_params(),
    )(y, residual, embed, sc, sh)


# ---------------------------------------------------------------------------
# Glue: patch / weight packing + BasicBlock forward
# ---------------------------------------------------------------------------
def _im2col(x, k, stride):
    """(N, H, W, C) -> (N*Ho*Wo, k*k*C) bf16 patch matrix (tap-major, channel-minor)."""
    N, H, W, C = x.shape
    p = k // 2
    xp = jnp.pad(x, ((0, 0), (p, p), (p, p), (0, 0)))
    Ho = (H + 2 * p - k) // stride + 1
    Wo = (W + 2 * p - k) // stride + 1
    cols = [xp[:, ki:ki + stride * Ho:stride, kj:kj + stride * Wo:stride, :]
            for ki in range(k) for kj in range(k)]
    patches = jnp.concatenate(cols, axis=-1)
    return patches.reshape(N * Ho * Wo, k * k * C), Ho, Wo


def _w1_mat(w, cp):
    """(Cout, Cin, k, k) -> (k*k*Cin, cp) bf16 with lane-padded output channels."""
    cout, cin, k, _ = w.shape
    m = jnp.transpose(w, (2, 3, 1, 0)).reshape(k * k * cin, cout)
    return jnp.pad(m, ((0, 0), (0, cp - cout))).astype(jnp.bfloat16)


def _w2_mat(w, cp):
    """(Cout, Cin, k, k) -> (k*k*cp, cp) bf16: zero rows for the lane-padded input
    channels so conv2 consumes act1 at full Cp lanes (no act1 lane-slice relayout)."""
    cout, cin, k, _ = w.shape
    m = jnp.transpose(w, (2, 3, 1, 0))                              # (k, k, Cin, Cout)
    m = jnp.pad(m, ((0, 0), (0, 0), (0, cp - cin), (0, cp - cout)))
    return m.reshape(k * k * cp, cp).astype(jnp.bfloat16)


def _pad_vec(v, cp):
    return jnp.pad(v.astype(jnp.float32), (0, cp - v.shape[0]))


@functools.partial(jax.jit, static_argnames=("k", "stride"))
def basic_block_forward(x_nchw, params, *, k, stride):
    x_f32 = jnp.transpose(x_nchw, (0, 2, 3, 1)).astype(jnp.float32)  # NHWC (shortcut)
    x_bf = x_f32.astype(jnp.bfloat16)                                # bf16 conv feed
    N, H, W, Cin = x_f32.shape
    Cout = params["w1"].shape[0]
    Cp = _round_up(Cout, LANES)
    p = k // 2

    # conv1 (stride s, pad k//2, no bias) + BN1 batch stats; fused apply + ReLU -> bf16.
    # TODO(synk): a stride-1 first conv should route through conv_implicit_stats like
    # conv2; with stride >= 2 the patch build is only a k*k/s^2 blow-up of the smallest
    # tensor in the block.
    a1, Ho, Wo = _im2col(x_bf, k, stride)
    M1 = N * Ho * Wo
    y1, s1, s2 = conv_matmul_stats(a1, _w1_mat(params["w1"], Cp))
    sc1, sh1 = bn_scale_shift(s1, s2, _pad_vec(params["g1"], Cp),
                              _pad_vec(params["b1"], Cp), M1)
    act1 = bn_apply_relu(y1, sc1, sh1, out_dtype=jnp.bfloat16)       # (M1, Cp) bf16

    # conv2 (stride 1) as an in-kernel implicit GEMM over the k*k taps (no im2col slab).
    Hp2, Wp2 = Ho + 2 * p, Wo + 2 * p
    L2 = Ho * Wp2                      # wide rows: Wp2 - Wo over-computed cols per row
    # TODO(synk): the spatial zero-pad / flatten of act1 is still an XLA copy pass;
    # folding it into the BN1 apply kernel needs a non-block-aligned output offset.
    xp2 = jnp.pad(act1.reshape(N, Ho, Wo, Cp), ((0, 0), (p, p), (p, p), (0, 0)))
    xp2 = xp2.reshape(N, Hp2 * Wp2, Cp)
    xp2 = jnp.pad(xp2, ((0, 0), (0, k - 1), (0, 0)))   # tail rows so every tap slice fits
    col_mask = jnp.asarray(
        (np.arange(L2) % Wp2 < Wo).astype(np.float32).reshape(L2, 1))
    y2, t1, t2 = conv_implicit_stats(xp2, _w2_mat(params["w2"], Cp), col_mask,
                                     k=k, wp=Wp2, length=L2)
    sc2, sh2 = bn_scale_shift(t1, t2, _pad_vec(params["g2"], Cp),
                              _pad_vec(params["b2"], Cp), M1)

    # ResidualAdapter shortcut: SimpleSubsampling (::2) when stride > 1.  Channel padding
    # to Cout happens in-register inside the fused BN2 + add + ReLU kernel; the shortcut
    # stays f32 (tiny: only Cin lanes wide) for an exact final add.
    shortcut = x_f32[:, ::2, ::2, :] if stride > 1 else x_f32        # (N, Ho, Wo, Cin)
    assert shortcut.shape[1] == Ho and shortcut.shape[2] == Wo
    shortcut = jnp.pad(shortcut, ((0, 0), (0, 0), (0, Wp2 - Wo), (0, 0)))
    shortcut = shortcut.reshape(N * L2, Cin)
    embed = None if Cin == Cp else jnp.eye(Cin, Cp, dtype=jnp.float32)
    out = bn_apply_relu(y2.reshape(N * L2, Cp), sc2, sh2, out_dtype=jnp.float32,
                        residual=shortcut, embed=embed)
    out = out.reshape(N, Ho, Wp2, Cp)[:, :, :Wo, :Cout]  # drop over-compute cols + lanes
    return jnp.transpose(out, (0, 3, 1, 2))              # back to NCHW


# ---------------------------------------------------------------------------
# Pure-JAX reference (mirrors the PyTorch module) for a sanity check
# ---------------------------------------------------------------------------
def _ref_conv(x_nchw, w, stride):
    return lax.conv_general_dilated(
        x_nchw, w, window_strides=(stride, stride),
        padding=[(w.shape[2] // 2,) * 2, (w.shape[3] // 2,) * 2],
        dimension_numbers=("NCHW", "OIHW", "NCHW"),
        precision=lax.Precision.HIGHEST)


def _ref_bn(x_nchw, g, b):
    mean = jnp.mean(x_nchw, axis=(0, 2, 3), keepdims=True)
    var = jnp.mean(jnp.square(x_nchw), axis=(0, 2, 3), keepdims=True) - mean ** 2
    return (x_nchw - mean) * lax.rsqrt(var + BN_EPS) * g[None, :, None, None] \
        + b[None, :, None, None]


def basic_block_reference(x, params, *, k, stride):
    y = _ref_conv(x, params["w1"], stride)
    y = jnp.maximum(_ref_bn(y, params["g1"], params["b1"]), 0.0)
    y = _ref_conv(y, params["w2"], 1)
    y = _ref_bn(y, params["g2"], params["b2"])
    sc = x[..., ::2, ::2] if stride > 1 else x
    cout = y.shape[1]
    if sc.shape[1] != cout:
        sc = jnp.pad(sc, ((0, 0), (0, cout - sc.shape[1]), (0, 0), (0, 0)))
    return jnp.maximum(y + sc, 0.0)


# ---------------------------------------------------------------------------
# Main
# ---------------------------------------------------------------------------
if __name__ == "__main__":
    in_dim, out_dim, k, stride = 4, 8, 3, 2
    key = jax.random.PRNGKey(0)
    kx, k1, k2, kg1, kb1, kg2, kb2 = jax.random.split(key, 7)

    x = jax.random.normal(kx, (2, in_dim, 16, 16), dtype=jnp.float32)

    params = {
        "w1": 0.2 * jax.random.normal(k1, (out_dim, in_dim, k, k), jnp.float32),
        "w2": 0.2 * jax.random.normal(k2, (out_dim, out_dim, k, k), jnp.float32),
        "g1": 1.0 + 0.1 * jax.random.normal(kg1, (out_dim,), jnp.float32),
        "b1": 0.1 * jax.random.normal(kb1, (out_dim,), jnp.float32),
        "g2": 1.0 + 0.1 * jax.random.normal(kg2, (out_dim,), jnp.float32),
        "b2": 0.1 * jax.random.normal(kb2, (out_dim,), jnp.float32),
    }

    out = jax.block_until_ready(basic_block_forward(x, params, k=k, stride=stride))
    ref = jax.block_until_ready(basic_block_reference(x, params, k=k, stride=stride))

    assert out.shape == (2, out_dim, 8, 8), out.shape
    # Tolerance accounts for bf16 MXU inputs and bf16-stored conv intermediates
    # (f32 accumulation / BN math) vs. the all-f32 reference.
    np.testing.assert_allclose(np.asarray(out), np.asarray(ref),
                               rtol=2.5e-2, atol=2.5e-2)
    print("KERNEL_OK")
</pallas_src>

<mosaic_0001>
module attributes {stable_mosaic.version = 11 : i64} {
  func.func @_bn_relu_kernel(%arg0: i32, %arg1: memref<32x128xbf16, #tpu.memory_space<vmem>>, %arg2: memref<1x128xf32, #tpu.memory_space<vmem>>, %arg3: memref<1x128xf32, #tpu.memory_space<vmem>>, %arg4: memref<32x128xbf16, #tpu.memory_space<vmem>>) attributes {dimension_semantics = [#tpu.dimension_semantics<parallel>], iteration_bounds = array<i64: 4>, scalar_prefetch = 0 : i64, scratch_operands = 0 : i64, tpu.core_type = #tpu.core_type<tc>, window_params = [{transform_indices = @transform_0, window_bounds = array<i64: 32, 128>}, {pipeline_mode = #tpu.pipeline_mode<synchronous>, transform_indices = @transform_1, window_bounds = array<i64: 1, 128>}, {pipeline_mode = #tpu.pipeline_mode<synchronous>, transform_indices = @transform_2, window_bounds = array<i64: 1, 128>}, {transform_indices = @transform_3, window_bounds = array<i64: 32, 128>}]} {
    %c0 = arith.constant 0 : index
    %c0_0 = arith.constant 0 : index
    %0 = vector.load %arg1[%c0, %c0_0] : memref<32x128xbf16, #tpu.memory_space<vmem>>, vector<32x128xbf16>
    %1 = arith.extf %0 : vector<32x128xbf16> to vector<32x128xf32>
    %c0_1 = arith.constant 0 : index
    %c0_2 = arith.constant 0 : index
    %2 = vector.load %arg2[%c0_1, %c0_2] : memref<1x128xf32, #tpu.memory_space<vmem>>, vector<1x128xf32>
    %3 = vector.broadcast %2 : vector<1x128xf32> to vector<32x128xf32>
    %4 = arith.mulf %1, %3 : vector<32x128xf32>
    %c0_3 = arith.constant 0 : index
    %c0_4 = arith.constant 0 : index
    %5 = vector.load %arg3[%c0_3, %c0_4] : memref<1x128xf32, #tpu.memory_space<vmem>>, vector<1x128xf32>
    %6 = vector.broadcast %5 : vector<1x128xf32> to vector<32x128xf32>
    %7 = arith.addf %4, %6 : vector<32x128xf32>
    %cst = arith.constant 0.000000e+00 : f32
    %8 = vector.broadcast %cst : f32 to vector<32x128xf32>
    %9 = arith.maximumf %7, %8 : vector<32x128xf32>
    %10 = arith.truncf %9 : vector<32x128xf32> to vector<32x128xbf16>
    %c0_5 = arith.constant 0 : index
    %c0_6 = arith.constant 0 : index
    %11 = vector.load %arg4[%c0_5, %c0_6] : memref<32x128xbf16, #tpu.memory_space<vmem>>, vector<32x128xbf16>
    tpu.vector_store %arg4[%c0_5, %c0_6], %10 {strides = array<i32>} : memref<32x128xbf16, #tpu.memory_space<vmem>>, vector<32x128xbf16>,
    return
  }
  func.func @transform_0(%arg0: i32) -> (i32, i32) {
    %c0_i32 = arith.constant 0 : i32
    %c0_i32_0 = arith.constant 0 : i32
    return %arg0, %c0_i32 : i32, i32
  }
  func.func @transform_1(%arg0: i32) -> (i32, i32) {
    %c0_i32 = arith.constant 0 : i32
    %c0_i32_0 = arith.constant 0 : i32
    %c0_i32_1 = arith.constant 0 : i32
    return %c0_i32, %c0_i32_0 : i32, i32
  }
  func.func @transform_2(%arg0: i32) -> (i32, i32) {
    %c0_i32 = arith.constant 0 : i32
    %c0_i32_0 = arith.constant 0 : i32
    %c0_i32_1 = arith.constant 0 : i32
    return %c0_i32, %c0_i32_0 : i32, i32
  }
  func.func @transform_3(%arg0: i32) -> (i32, i32) {
    %c0_i32 = arith.constant 0 : i32
    %c0_i32_0 = arith.constant 0 : i32
    return %arg0, %c0_i32 : i32, i32
  }
}

module attributes {stable_mosaic.version = 11 : i64} {
  func.func @_matmul_stats_kernel(%arg0: i32, %arg1: memref<32x36xbf16, #tpu.memory_space<vmem>>, %arg2: memref<36x128xbf16, #tpu.memory_space<vmem>>, %arg3: memref<32x128xbf16, #tpu.memory_space<vmem>>, %arg4: memref<8x128xf32, #tpu.memory_space<vmem>>) attributes {dimension_semantics = [#tpu.dimension_semantics<parallel>], iteration_bounds = array<i64: 4>, scalar_prefetch = 0 : i64, scratch_operands = 0 : i64, tpu.core_type = #tpu.core_type<tc>, window_params = [{transform_indices = @transform_0, window_bounds = array<i64: 32, 36>}, {pipeline_mode = #tpu.pipeline_mode<synchronous>, transform_indices = @transform_1, window_bounds = array<i64: 36, 128>}, {transform_indices = @transform_2, window_bounds = array<i64: 32, 128>}, {transform_indices = @transform_3, window_bounds = array<i64: 8, 128>}]} {
    %c0 = arith.constant 0 : index
    %c0_0 = arith.constant 0 : index
    %0 = vector.load %arg1[%c0, %c0_0] : memref<32x36xbf16, #tpu.memory_space<vmem>>, vector<32x36xbf16>
    %c0_1 = arith.constant 0 : index
    %c0_2 = arith.constant 0 : index
    %1 = vector.load %arg2[%c0_1, %c0_2] : memref<36x128xbf16, #tpu.memory_space<vmem>>, vector<36x128xbf16>
    %cst = arith.constant dense<0.000000e+00> : vector<32x128xf32>
    %2 = tpu.matmul %0, %1, %cst {dimension_numbers = #tpu.dot_dimension_numbers<[1], [0], [0], [1], [0, 0, 1, 1], [], []>} : vector<32x36xbf16>, vector<36x128xbf16>, vector<32x128xf32> -> vector<32x128xf32>
    %3 = arith.truncf %2 : vector<32x128xf32> to vector<32x128xbf16>
    %c0_3 = arith.constant 0 : index
    %c0_4 = arith.constant 0 : index
    %4 = vector.load %arg3[%c0_3, %c0_4] : memref<32x128xbf16, #tpu.memory_space<vmem>>, vector<32x128xbf16>
    tpu.vector_store %arg3[%c0_3, %c0_4], %3 {strides = array<i32>} : memref<32x128xbf16, #tpu.memory_space<vmem>>, vector<32x128xbf16>,
    %cst_5 = arith.constant dense<0.000000e+00> : vector<128xf32>
    %5 = vector.multi_reduction <add>, %2, %cst_5 [0] : vector<32x128xf32> to vector<128xf32>
    %6 = vector.shape_cast %5 : vector<128xf32> to vector<1x128xf32>
    %c0_6 = arith.constant 0 : index
    %c0_7 = arith.constant 0 : index
    %7 = vector.load %arg4[%c0_6, %c0_7] : memref<8x128xf32, #tpu.memory_space<vmem>>, vector<1x128xf32>
    tpu.vector_store %arg4[%c0_6, %c0_7], %6 {strides = array<i32>} : memref<8x128xf32, #tpu.memory_space<vmem>>, vector<1x128xf32>,
    %8 = arith.mulf %2, %2 : vector<32x128xf32>
    %cst_8 = arith.constant dense<0.000000e+00> : vector<128xf32>
    %9 = vector.multi_reduction <add>, %8, %cst_8 [0] : vector<32x128xf32> to vector<128xf32>
    %10 = vector.shape_cast %9 : vector<128xf32> to vector<1x128xf32>
    %c1 = arith.constant 1 : index
    %c0_9 = arith.constant 0 : index
    %11 = vector.load %arg4[%c1, %c0_9] : memref<8x128xf32, #tpu.memory_space<vmem>>, vector<1x128xf32>
    tpu.vector_store %arg4[%c1, %c0_9], %10 {strides = array<i32>} : memref<8x128xf32, #tpu.memory_space<vmem>>, vector<1x128xf32>,
    return
  }
  func.func @transform_0(%arg0: i32) -> (i32, i32) {
    %c0_i32 = arith.constant 0 : i32
    %c0_i32_0 = arith.constant 0 : i32
    return %arg0, %c0_i32 : i32, i32
  }
  func.func @transform_1(%arg0: i32) -> (i32, i32) {
    %c0_i32 = arith.constant 0 : i32
    %c0_i32_0 = arith.constant 0 : i32
    %c0_i32_1 = arith.constant 0 : i32
    return %c0_i32, %c0_i32_0 : i32, i32
  }
  func.func @transform_2(%arg0: i32) -> (i32, i32) {
    %c0_i32 = arith.constant 0 : i32
    %c0_i32_0 = arith.constant 0 : i32
    return %arg0, %c0_i32 : i32, i32
  }
  func.func @transform_3(%arg0: i32) -> (i32, i32) {
    %c0_i32 = arith.constant 0 : i32
    %c0_i32_0 = arith.constant 0 : i32
    return %arg0, %c0_i32 : i32, i32
  }
}

module attributes {stable_mosaic.version = 11 : i64} {
  func.func @_conv_taps_stats_kernel(%arg0: i32, %arg1: memref<1x102x128xbf16, #tpu.memory_space<vmem>>, %arg2: memref<1152x128xbf16, #tpu.memory_space<vmem>>, %arg3: memref<80x1xf32, #tpu.memory_space<vmem>>, %arg4: memref<1x80x128xbf16, #tpu.memory_space<vmem>>, %arg5: memref<8x128xf32, #tpu.memory_space<vmem>>) attributes {dimension_semantics = [#tpu.dimension_semantics<parallel>], iteration_bounds = array<i64: 2>, scalar_prefetch = 0 : i64, scratch_operands = 0 : i64, tpu.core_type = #tpu.core_type<tc>, window_params = [{transform_indices = @transform_0, window_bounds = array<i64: 1, 102, 128>}, {pipeline_mode = #tpu.pipeline_mode<synchronous>, transform_indices = @transform_1, window_bounds = array<i64: 1152, 128>}, {pipeline_mode = #tpu.pipeline_mode<synchronous>, transform_indices = @transform_2, window_bounds = array<i64: 80, 1>}, {transform_indices = @transform_3, window_bounds = array<i64: 1, 80, 128>}, {transform_indices = @transform_4, window_bounds = array<i64: 8, 128>}]} {
    %c0 = arith.constant 0 : index
    %c0_0 = arith.constant 0 : index
    %c0_1 = arith.constant 0 : index
    %0 = vector.load %arg1[%c0, %c0_0, %c0_1] : memref<1x102x128xbf16, #tpu.memory_space<vmem>>, vector<1x80x128xbf16>
    %1 = vector.shape_cast %0 : vector<1x80x128xbf16> to vector<80x128xbf16>
    %c0_2 = arith.constant 0 : index
    %c0_3 = arith.constant 0 : index
    %2 = vector.load %arg2[%c0_2, %c0_3] : memref<1152x128xbf16, #tpu.memory_space<vmem>>, vector<128x128xbf16>
    %cst = arith.constant dense<0.000000e+00> : vector<80x128xf32>
    %3 = tpu.matmul %1, %2, %cst {dimension_numbers = #tpu.dot_dimension_numbers<[1], [0], [0], [1], [0, 0, 1, 1], [], []>} : vector<80x128xbf16>, vector<128x128xbf16>, vector<80x128xf32> -> vector<80x128xf32>
    %c0_4 = arith.constant 0 : index
    %c1 = arith.constant 1 : index
    %c0_5 = arith.constant 0 : index
    %4 = vector.load %arg1[%c0_4, %c1, %c0_5] : memref<1x102x128xbf16, #tpu.memory_space<vmem>>, vector<1x80x128xbf16>
    %5 = vector.shape_cast %4 : vector<1x80x128xbf16> to vector<80x128xbf16>
    %c128 = arith.constant 128 : index
    %c0_6 = arith.constant 0 : index
    %6 = vector.load %arg2[%c128, %c0_6] : memref<1152x128xbf16, #tpu.memory_space<vmem>>, vector<128x128xbf16>
    %cst_7 = arith.constant dense<0.000000e+00> : vector<80x128xf32>
    %7 = tpu.matmul %5, %6, %cst_7 {dimension_numbers = #tpu.dot_dimension_numbers<[1], [0], [0], [1], [0, 0, 1, 1], [], []>} : vector<80x128xbf16>, vector<128x128xbf16>, vector<80x128xf32> -> vector<80x128xf32>
    %8 = arith.addf %3, %7 : vector<80x128xf32>
    %c0_8 = arith.constant 0 : index
    %c2 = arith.constant 2 : index
    %c0_9 = arith.constant 0 : index
    %9 = vector.load %arg1[%c0_8, %c2, %c0_9] : memref<1x102x128xbf16, #tpu.memory_space<vmem>>, vector<1x80x128xbf16>
    %10 = vector.shape_cast %9 : vector<1x80x128xbf16> to vector<80x128xbf16>
    %c256 = arith.constant 256 : index
    %c0_10 = arith.constant 0 : index
    %11 = vector.load %arg2[%c256, %c0_10] : memref<1152x128xbf16, #tpu.memory_space<vmem>>, vector<128x128xbf16>
    %cst_11 = arith.constant dense<0.000000e+00> : vector<80x128xf32>
    %12 = tpu.matmul %10, %11, %cst_11 {dimension_numbers = #tpu.dot_dimension_numbers<[1], [0], [0], [1], [0, 0, 1, 1], [], []>} : vector<80x128xbf16>, vector<128x128xbf16>, vector<80x128xf32> -> vector<80x128xf32>
    %13 = arith.addf %8, %12 : vector<80x128xf32>
    %c0_12 = arith.constant 0 : index
    %c10 = arith.constant 10 : index
    %c0_13 = arith.constant 0 : index
    %14 = vector.load %arg1[%c0_12, %c10, %c0_13] : memref<1x102x128xbf16, #tpu.memory_space<vmem>>, vector<1x80x128xbf16>
    %15 = vector.shape_cast %14 : vector<1x80x128xbf16> to vector<80x128xbf16>
    %c384 = arith.constant 384 : index
    %c0_14 = arith.constant 0 : index
    %16 = vector.load %arg2[%c384, %c0_14] : memref<1152x128xbf16, #tpu.memory_space<vmem>>, vector<128x128xbf16>
    %cst_15 = arith.constant dense<0.000000e+00> : vector<80x128xf32>
    %17 = tpu.matmul %15, %16, %cst_15 {dimension_numbers = #tpu.dot_dimension_numbers<[1], [0], [0], [1], [0, 0, 1, 1], [], []>} : vector<80x128xbf16>, vector<128x128xbf16>, vector<80x128xf32> -> vector<80x128xf32>
    %18 = arith.addf %13, %17 : vector<80x128xf32>
    %c0_16 = arith.constant 0 : index
    %c11 = arith.constant 11 : index
    %c0_17 = arith.constant 0 : index
    %19 = vector.load %arg1[%c0_16, %c11, %c0_17] : memref<1x102x128xbf16, #tpu.memory_space<vmem>>, vector<1x80x128xbf16>
    %20 = vector.shape_cast %19 : vector<1x80x128xbf16> to vector<80x128xbf16>
    %c512 = arith.constant 512 : index
    %c0_18 = arith.constant 0 : index
    %21 = vector.load %arg2[%c512, %c0_18] : memref<1152x128xbf16, #tpu.memory_space<vmem>>, vector<128x128xbf16>
    %cst_19 = arith.constant dense<0.000000e+00> : vector<80x128xf32>
    %22 = tpu.matmul %20, %21, %cst_19 {dimension_numbers = #tpu.dot_dimension_numbers<[1], [0], [0], [1], [0, 0, 1, 1], [], []>} : vector<80x128xbf16>, vector<128x128xbf16>, vector<80x128xf32> -> vector<80x128xf32>
    %23 = arith.addf %18, %22 : vector<80x128xf32>
    %c0_20 = arith.constant 0 : index
    %c12 = arith.constant 12 : index
    %c0_21 = arith.constant 0 : index
    %24 = vector.load %arg1[%c0_20, %c12, %c0_21] : memref<1x102x128xbf16, #tpu.memory_space<vmem>>, vector<1x80x128xbf16>
    %25 = vector.shape_cast %24 : vector<1x80x128xbf16> to vector<80x128xbf16>
    %c640 = arith.constant 640 : index
    %c0_22 = arith.constant 0 : index
    %26 = vector.load %arg2[%c640, %c0_22] : memref<1152x128xbf16, #tpu.memory_space<vmem>>, vector<128x128xbf16>
    %cst_23 = arith.constant dense<0.000000e+00> : vector<80x128xf32>
    %27 = tpu.matmul %25, %26, %cst_23 {dimension_numbers = #tpu.dot_dimension_numbers<[1], [0], [0], [1], [0, 0, 1, 1], [], []>} : vector<80x128xbf16>, vector<128x128xbf16>, vector<80x128xf32> -> vector<80x128xf32>
    %28 = arith.addf %23, %27 : vector<80x128xf32>
    %c0_24 = arith.constant 0 : index
    %c20 = arith.constant 20 : index
    %c0_25 = arith.constant 0 : index
    %29 = vector.load %arg1[%c0_24, %c20, %c0_25] : memref<1x102x128xbf16, #tpu.memory_space<vmem>>, vector<1x80x128xbf16>
    %30 = vector.shape_cast %29 : vector<1x80x128xbf16> to vector<80x128xbf16>
    %c768 = arith.constant 768 : index
    %c0_26 = arith.constant 0 : index
    %31 = vector.load %arg2[%c768, %c0_26] : memref<1152x128xbf16, #tpu.memory_space<vmem>>, vector<128x128xbf16>
    %cst_27 = arith.constant dense<0.000000e+00> : vector<80x128xf32>
    %32 = tpu.matmul %30, %31, %cst_27 {dimension_numbers = #tpu.dot_dimension_numbers<[1], [0], [0], [1], [0, 0, 1, 1], [], []>} : vector<80x128xbf16>, vector<128x128xbf16>, vector<80x128xf32> -> vector<80x128xf32>
    %33 = arith.addf %28, %32 : vector<80x128xf32>
    %c0_28 = arith.constant 0 : index
    %c21 = arith.constant 21 : index
    %c0_29 = arith.constant 0 : index
    %34 = vector.load %arg1[%c0_28, %c21, %c0_29] : memref<1x102x128xbf16, #tpu.memory_space<vmem>>, vector<1x80x128xbf16>
    %35 = vector.shape_cast %34 : vector<1x80x128xbf16> to vector<80x128xbf16>
    %c896 = arith.constant 896 : index
    %c0_30 = arith.constant 0 : index
    %36 = vector.load %arg2[%c896, %c0_30] : memref<1152x128xbf16, #tpu.memory_space<vmem>>, vector<128x128xbf16>
    %cst_31 = arith.constant dense<0.000000e+00> : vector<80x128xf32>
    %37 = tpu.matmul %35, %36, %cst_31 {dimension_numbers = #tpu.dot_dimension_numbers<[1], [0], [0], [1], [0, 0, 1, 1], [], []>} : vector<80x128xbf16>, vector<128x128xbf16>, vector<80x128xf32> -> vector<80x128xf32>
    %38 = arith.addf %33, %37 : vector<80x128xf32>
    %c0_32 = arith.constant 0 : index
    %c22 = arith.constant 22 : index
    %c0_33 = arith.constant 0 : index
    %39 = vector.load %arg1[%c0_32, %c22, %c0_33] : memref<1x102x128xbf16, #tpu.memory_space<vmem>>, vector<1x80x128xbf16>
    %40 = vector.shape_cast %39 : vector<1x80x128xbf16> to vector<80x128xbf16>
    %c1024 = arith.constant 1024 : index
    %c0_34 = arith.constant 0 : index
    %41 = vector.load %arg2[%c1024, %c0_34] : memref<1152x128xbf16, #tpu.memory_space<vmem>>, vector<128x128xbf16>
    %cst_35 = arith.constant dense<0.000000e+00> : vector<80x128xf32>
    %42 = tpu.matmul %40, %41, %cst_35 {dimension_numbers = #tpu.dot_dimension_numbers<[1], [0], [0], [1], [0, 0, 1, 1], [], []>} : vector<80x128xbf16>, vector<128x128xbf16>, vector<80x128xf32> -> vector<80x128xf32>
    %43 = arith.addf %38, %42 : vector<80x128xf32>
    %44 = arith.truncf %43 : vector<80x128xf32> to vector<80x128xbf16>
    %c0_36 = arith.constant 0 : index
    %c0_37 = arith.constant 0 : index
    %c0_38 = arith.constant 0 : index
    %45 = vector.load %arg4[%c0_36, %c0_37, %c0_38] : memref<1x80x128xbf16, #tpu.memory_space<vmem>>, vector<1x80x128xbf16>
    %46 = vector.shape_cast %45 : vector<1x80x128xbf16> to vector<80x128xbf16>
    %47 = vector.shape_cast %44 : vector<80x128xbf16> to vector<1x80x128xbf16>
    tpu.vector_store %arg4[%c0_36, %c0_37, %c0_38], %47 {strides = array<i32>} : memref<1x80x128xbf16, #tpu.memory_space<vmem>>, vector<1x80x128xbf16>,
    %c0_39 = arith.constant 0 : index
    %c0_40 = arith.constant 0 : index
    %48 = vector.load %arg3[%c0_39, %c0_40] : memref<80x1xf32, #tpu.memory_space<vmem>>, vector<80x1xf32>
    %49 = vector.broadcast %48 : vector<80x1xf32> to vector<80x128xf32>
    %50 = arith.mulf %43, %49 : vector<80x128xf32>
    %cst_41 = arith.constant dense<0.000000e+00> : vector<128xf32>
    %51 = vector.multi_reduction <add>, %50, %cst_41 [0] : vector<80x128xf32> to vector<128xf32>
    %52 = vector.shape_cast %51 : vector<128xf32> to vector<1x128xf32>
    %c0_42 = arith.constant 0 : index
    %c0_43 = arith.constant 0 : index
    %53 = vector.load %arg5[%c0_42, %c0_43] : memref<8x128xf32, #tpu.memory_space<vmem>>, vector<1x128xf32>
    tpu.vector_store %arg5[%c0_42, %c0_43], %52 {strides = array<i32>} : memref<8x128xf32, #tpu.memory_space<vmem>>, vector<1x128xf32>,
    %54 = arith.mulf %50, %43 : vector<80x128xf32>
    %cst_44 = arith.constant dense<0.000000e+00> : vector<128xf32>
    %55 = vector.multi_reduction <add>, %54, %cst_44 [0] : vector<80x128xf32> to vector<128xf32>
    %56 = vector.shape_cast %55 : vector<128xf32> to vector<1x128xf32>
    %c1_45 = arith.constant 1 : index
    %c0_46 = arith.constant 0 : index
    %57 = vector.load %arg5[%c1_45, %c0_46] : memref<8x128xf32, #tpu.memory_space<vmem>>, vector<1x128xf32>
    tpu.vector_store %arg5[%c1_45, %c0_46], %56 {strides = array<i32>} : memref<8x128xf32, #tpu.memory_space<vmem>>, vector<1x128xf32>,
    return
  }
  func.func @transform_0(%arg0: i32) -> (i32, i32, i32) {
    %c0_i32 = arith.constant 0 : i32
    %c0_i32_0 = arith.constant 0 : i32
    %c0_i32_1 = arith.constant 0 : i32
    return %arg0, %c0_i32, %c0_i32_0 : i32, i32, i32
  }
  func.func @transform_1(%arg0: i32) -> (i32, i32) {
    %c0_i32 = arith.constant 0 : i32
    %c0_i32_0 = arith.constant 0 : i32
    %c0_i32_1 = arith.constant 0 : i32
    return %c0_i32, %c0_i32_0 : i32, i32
  }
  func.func @transform_2(%arg0: i32) -> (i32, i32) {
    %c0_i32 = arith.constant 0 : i32
    %c0_i32_0 = arith.constant 0 : i32
    %c0_i32_1 = arith.constant 0 : i32
    return %c0_i32, %c0_i32_0 : i32, i32
  }
  func.func @transform_3(%arg0: i32) -> (i32, i32, i32) {
    %c0_i32 = arith.constant 0 : i32
    %c0_i32_0 = arith.constant 0 : i32
    %c0_i32_1 = arith.constant 0 : i32
    return %arg0, %c0_i32, %c0_i32_0 : i32, i32, i32
  }
  func.func @transform_4(%arg0: i32) -> (i32, i32) {
    %c0_i32 = arith.constant 0 : i32
    %c0_i32_0 = arith.constant 0 : i32
    return %arg0, %c0_i32 : i32, i32
  }
}

module attributes {stable_mosaic.version = 11 : i64} {
  func.func @_bn_add_relu_pad_kernel(%arg0: i32, %arg1: memref<48x128xbf16, #tpu.memory_space<vmem>>, %arg2: memref<48x4xf32, #tpu.memory_space<vmem>>, %arg3: memref<4x128xf32, #tpu.memory_space<vmem>>, %arg4: memref<1x128xf32, #tpu.memory_space<vmem>>, %arg5: memref<1x128xf32, #tpu.memory_space<vmem>>, %arg6: memref<48x128xf32, #tpu.memory_space<vmem>>) attributes {dimension_semantics = [#tpu.dimension_semantics<parallel>], iteration_bounds = array<i64: 4>, scalar_prefetch = 0 : i64, scratch_operands = 0 : i64, tpu.core_type = #tpu.core_type<tc>, window_params = [{transform_indices = @transform_0, window_bounds = array<i64: 48, 128>}, {transform_indices = @transform_1, window_bounds = array<i64: 48, 4>}, {pipeline_mode = #tpu.pipeline_mode<synchronous>, transform_indices = @transform_2, window_bounds = array<i64: 4, 128>}, {pipeline_mode = #tpu.pipeline_mode<synchronous>, transform_indices = @transform_3, window_bounds = array<i64: 1, 128>}, {pipeline_mode = #tpu.pipeline_mode<synchronous>, transform_indices = @transform_4, window_bounds = array<i64: 1, 128>}, {transform_indices = @transform_5, window_bounds = array<i64: 48, 128>}]} {
    %c0 = arith.constant 0 : index
    %c0_0 = arith.constant 0 : index
    %0 = vector.load %arg1[%c0, %c0_0] : memref<48x128xbf16, #tpu.memory_space<vmem>>, vector<48x128xbf16>
    %1 = arith.extf %0 : vector<48x128xbf16> to vector<48x128xf32>
    %c0_1 = arith.constant 0 : index
    %c0_2 = arith.constant 0 : index
    %2 = vector.load %arg4[%c0_1, %c0_2] : memref<1x128xf32, #tpu.memory_space<vmem>>, vector<1x128xf32>
    %3 = vector.broadcast %2 : vector<1x128xf32> to vector<48x128xf32>
    %4 = arith.mulf %1, %3 : vector<48x128xf32>
    %c0_3 = arith.constant 0 : index
    %c0_4 = arith.constant 0 : index
    %5 = vector.load %arg5[%c0_3, %c0_4] : memref<1x128xf32, #tpu.memory_space<vmem>>, vector<1x128xf32>
    %6 = vector.broadcast %5 : vector<1x128xf32> to vector<48x128xf32>
    %7 = arith.addf %4, %6 : vector<48x128xf32>
    %c0_5 = arith.constant 0 : index
    %c0_6 = arith.constant 0 : index
    %8 = vector.load %arg2[%c0_5, %c0_6] : memref<48x4xf32, #tpu.memory_space<vmem>>, vector<48x4xf32>
    %c0_7 = arith.constant 0 : index
    %c0_8 = arith.constant 0 : index
    %9 = vector.load %arg3[%c0_7, %c0_8] : memref<4x128xf32, #tpu.memory_space<vmem>>, vector<4x128xf32>
    %cst = arith.constant dense<0.000000e+00> : vector<48x128xf32>
    %10 = tpu.matmul %8, %9, %cst {dimension_numbers = #tpu.dot_dimension_numbers<[1], [0], [0], [1], [0, 0, 1, 1], [], []>} : vector<48x4xf32>, vector<4x128xf32>, vector<48x128xf32> -> vector<48x128xf32>
    %11 = arith.addf %7, %10 : vector<48x128xf32>
    %cst_9 = arith.constant 0.000000e+00 : f32
    %12 = vector.broadcast %cst_9 : f32 to vector<48x128xf32>
    %13 = arith.maximumf %11, %12 : vector<48x128xf32>
    %c0_10 = arith.constant 0 : index
    %c0_11 = arith.constant 0 : index
    %14 = vector.load %arg6[%c0_10, %c0_11] : memref<48x128xf32, #tpu.memory_space<vmem>>, vector<48x128xf32>
    tpu.vector_store %arg6[%c0_10, %c0_11], %13 {strides = array<i32>} : memref<48x128xf32, #tpu.memory_space<vmem>>, vector<48x128xf32>,
    return
  }
  func.func @transform_0(%arg0: i32) -> (i32, i32) {
    %c0_i32 = arith.constant 0 : i32
    %c0_i32_0 = arith.constant 0 : i32
    return %arg0, %c0_i32 : i32, i32
  }
  func.func @transform_1(%arg0: i32) -> (i32, i32) {
    %c0_i32 = arith.constant 0 : i32
    %c0_i32_0 = arith.constant 0 : i32
    return %arg0, %c0_i32 : i32, i32
  }
  func.func @transform_2(%arg0: i32) -> (i32, i32) {
    %c0_i32 = arith.constant 0 : i32
    %c0_i32_0 = arith.constant 0 : i32
    %c0_i32_1 = arith.constant 0 : i32
    return %c0_i32, %c0_i32_0 : i32, i32
  }
  func.func @transform_3(%arg0: i32) -> (i32, i32) {
    %c0_i32 = arith.constant 0 : i32
    %c0_i32_0 = arith.constant 0 : i32
    %c0_i32_1 = arith.constant 0 : i32
    return %c0_i32, %c0_i32_0 : i32, i32
  }
  func.func @transform_4(%arg0: i32) -> (i32, i32) {
    %c0_i32 = arith.constant 0 : i32
    %c0_i32_0 = arith.constant 0 : i32
    %c0_i32_1 = arith.constant 0 : i32
    return %c0_i32, %c0_i32_0 : i32, i32
  }
  func.func @transform_5(%arg0: i32) -> (i32, i32) {
    %c0_i32 = arith.constant 0 : i32
    %c0_i32_0 = arith.constant 0 : i32
    return %arg0, %c0_i32 : i32, i32
  }
}

</mosaic_0001>

<llo_original>
// kernel: basic_block_forward.5
$region0: #{basic_block_forward.5}
  #allocation0 [shape = 'u32[]', space=smem, size = 0x4, offset = 0x4, fixed_abs, tag = 'smem constant byte address 0x4 - core index']
  #allocation1 [shape = 'u32[144,128]{1,0:T(1,128)}', space=vmem, size = 0x12000, scoped, tag = 'internal scratch']
  %s0 = inlined_call_operand.vmem [shape: bf16[128,128], index: 0, kind: input, shape index: {}]
  %s1 = inlined_call_operand.vmem [shape: f32[1,128], index: 1, kind: input, shape index: {}]
  %s2 = inlined_call_operand.vmem [shape: f32[1,128], index: 2, kind: input, shape index: {}]
  %s3 = inlined_call_operand.vmem [shape: bf16[128,128], index: 3, kind: output, shape index: {}]
  %s4 = sld [smem:[#allocation0]]
  $region45: #{basic_block_forward.5} parent=0
    _
  %s6 = ssub.s32 1, %s4
  %s7 = scalar_select 0, %s6, %s4
  loop: start=0, step=1, limit=6
  $region2: #{basic_block_forward.5} parent=0 // loop_pre_header
    _
  $region3: #{basic_block_forward.5} parent=0 // loop_header
    %s9 = sphi 0, %s13
    %p10 = scmp.ge.s32.totalorder %s9, 6
    %s19 = sphi 0, %s21
    %s22 = sphi 0, %s19
    %s23 = sphi 0, %s22
    %s39 = sphi 0, %s23
    %s43 = sphi 0, %s43
    %s45 = sphi 0, %s43
    %s46 = sphi 0, %s45
    %s60 = sphi 0, %s46
    %s64 = sphi 0, %s64
    %s66 = sphi 0, %s64
    %s67 = sphi 0, %s66
    %s81 = sphi 0, %s67
    %s87 = sphi 0, %s89
    %s90 = sphi 0, %s87
    %s91 = sphi 0, %s90
    %s107 = sphi 0, %s91
  $region4: #{basic_block_forward.5} parent=0 // loop_header_branch
    %12 = sbr.rel (%p10) target = $region8
  $region5: #{basic_block_forward.5} parent=0 // loop_body
    %s14 = ssub.s32 %s9, 1
    %s15 = ssub.s32 %s9, 2
    %s16 = sadd.s32 %s9, 1
    %s17 = ssub.s32 %s9, %s16
    %p18 = scmp.eq.s32.totalorder %s17, 0
    %s20 = sadd.s32 %s19, 1
    %s21 = scalar_select %p18, %s19, %s20
    %p24 = pneg %p18
    %p25 = scmp.eq.s32.totalorder %s9, 3
    %p26 = por %p24, %p25
    %p27 = scmp.ne.s32.totalorder %s19, %s22
    %p28 = scmp.eq.s32.totalorder %s9, 0
    %p29 = por %p27, %p28
    %p30 = scmp.ne.s32.totalorder %s19, %s22
    %p31 = scmp.eq.s32.totalorder %s14, 3
    %p32 = por %p30, %p31
    %p33 = scmp.ne.s32.totalorder %s22, %s23
    %p34 = scmp.eq.s32.totalorder %s14, 0
    %p35 = por %p33, %p34
    %p36 = scmp.ne.s32.totalorder %s22, %s23
    %p37 = scmp.eq.s32.totalorder %s15, 3
    %p38 = por %p36, %p37
    %p40 = scmp.ne.s32.totalorder %s23, %s39
    %p41 = scmp.eq.s32.totalorder %s15, 0
    %p42 = por %p40, %p41
    %s44 = sadd.s32 %s43, 1
    %p47 = scmp.eq.s32.totalorder %s9, 3
    %p48 = scmp.ne.s32.totalorder %s43, %s45
    %p49 = scmp.eq.s32.totalorder %s9, 0
    %p50 = por %p48, %p49
    %p51 = scmp.ne.s32.totalorder %s43, %s45
    %p52 = scmp.eq.s32.totalorder %s14, 3
    %p53 = por %p51, %p52
    %p54 = scmp.ne.s32.totalorder %s45, %s46
    %p55 = scmp.eq.s32.totalorder %s14, 0
    %p56 = por %p54, %p55
    %p57 = scmp.ne.s32.totalorder %s45, %s46
    %p58 = scmp.eq.s32.totalorder %s15, 3
    %p59 = por %p57, %p58
    %p61 = scmp.ne.s32.totalorder %s46, %s60
    %p62 = scmp.eq.s32.totalorder %s15, 0
    %p63 = por %p61, %p62
    %s65 = sadd.s32 %s64, 1
    %p68 = scmp.eq.s32.totalorder %s9, 3
    %p69 = scmp.ne.s32.totalorder %s64, %s66
    %p70 = scmp.eq.s32.totalorder %s9, 0
    %p71 = por %p69, %p70
    %p72 = scmp.ne.s32.totalorder %s64, %s66
    %p73 = scmp.eq.s32.totalorder %s14, 3
    %p74 = por %p72, %p73
    %p75 = scmp.ne.s32.totalorder %s66, %s67
    %p76 = scmp.eq.s32.totalorder %s14, 0
    %p77 = por %p75, %p76
    %p78 = scmp.ne.s32.totalorder %s66, %s67
    %p79 = scmp.eq.s32.totalorder %s15, 3
    %p80 = por %p78, %p79
    %p82 = scmp.ne.s32.totalorder %s67, %s81
    %p83 = scmp.eq.s32.totalorder %s15, 0
    %p84 = por %p82, %p83
    %s85 = ssub.s32 %s9, %s16
    %p86 = scmp.eq.s32.totalorder %s85, 0
    %s88 = sadd.s32 %s87, 1
    %s89 = scalar_select %p86, %s87, %s88
    %p92 = pneg %p86
    %p93 = scmp.eq.s32.totalorder %s9, 3
    %p94 = por %p92, %p93
    %p95 = scmp.ne.s32.totalorder %s87, %s90
    %p96 = scmp.eq.s32.totalorder %s9, 0
    %p97 = por %p95, %p96
    %p98 = scmp.ne.s32.totalorder %s87, %s90
    %p99 = scmp.eq.s32.totalorder %s14, 3
    %p100 = por %p98, %p99
    %p101 = scmp.ne.s32.totalorder %s90, %s91
    %p102 = scmp.eq.s32.totalorder %s14, 0
    %p103 = por %p101, %p102
    %p104 = scmp.ne.s32.totalorder %s90, %s91
    %p105 = scmp.eq.s32.totalorder %s15, 3
    %p106 = por %p104, %p105
    %p108 = scmp.ne.s32.totalorder %s91, %s107
    %p109 = scmp.eq.s32.totalorder %s15, 0
    %p110 = por %p108, %p109
    %p111 = scmp.le.s32.totalorder 1, %s9
    %p112 = scmp.lt.s32.totalorder %s9, 5
    %p113 = pnand %p111, %p112
    %p114 = pneg %p113
    // Predicated region
    $region9: #{basic_block_forward.5} parent=5 // pred_check
      _
    $region10: #{basic_block_forward.5} parent=5 // pred_check_branch
      %116 = sbr.rel (%p113) target = $region12
    $region11: #{basic_block_forward.5} parent=5 // pred_region
      %s117 = ssub.s32 %s9, 1
      // Predicated region
      $region13: #{basic_block_forward.5} parent=11 // pred_check
        %p118 = pneg %p56
      $region14: #{basic_block_forward.5} parent=11 // pred_check_branch
        %120 = sbr.rel (%p118) target = $region16
      $region15: #{basic_block_forward.5} parent=11 // pred_region
        _
      $region16: #{basic_block_forward.5} parent=11 // pred_fallthru
        _
      // Predicated region
      $region17: #{basic_block_forward.5} parent=11 // pred_check
        %p121 = pneg %p77
      $region18: #{basic_block_forward.5} parent=11 // pred_check_branch
        %123 = sbr.rel (%p121) target = $region20
      $region19: #{basic_block_forward.5} parent=11 // pred_region
        _
      $region20: #{basic_block_forward.5} parent=11 // pred_fallthru
        _
    $region12: #{basic_block_forward.5} parent=5 // pred_fallthru
      _
    %p124 = scmp.lt.s32.totalorder %s9, 4
    // Predicated region
    $region21: #{basic_block_forward.5} parent=5 // pred_check
      %p125 = pneg %p124
    $region22: #{basic_block_forward.5} parent=5 // pred_check_branch
      %127 = sbr.rel (%p125) target = $region24
    $region23: #{basic_block_forward.5} parent=5 // pred_region
      // Predicated region
      $region25: #{basic_block_forward.5} parent=23 // pred_check
        %p128 = pneg %p29
      $region26: #{basic_block_forward.5} parent=23 // pred_check_branch
        %130 = sbr.rel (%p128) target = $region28
      $region27: #{basic_block_forward.5} parent=23 // pred_region
        %s131 = smul.u32 4, %s9
        %p132 = scmp.lt.s32.totalorder %s131, 15
        %s133 = scalar_select %p132, %s131, 15
        %s134 = smul.addr %s133, 4
        %s135 = scalar_lea.vmem %s0, %s134
        %s136 = smul.u32 4, %s9
      $region28: #{basic_block_forward.5} parent=23 // pred_fallthru
        _
    $region24: #{basic_block_forward.5} parent=5 // pred_fallthru
      _
    %p137 = scmp.le.s32.totalorder 1, %s9
    %p138 = scmp.lt.s32.totalorder %s9, 5
    %p139 = pnand %p137, %p138
    %p140 = pneg %p139
    // Predicated region
    $region29: #{basic_block_forward.5} parent=5 // pred_check
      _
    $region30: #{basic_block_forward.5} parent=5 // pred_check_branch
      %142 = sbr.rel (%p139) target = $region32
    $region31: #{basic_block_forward.5} parent=5 // pred_region
      %s143 = ssub.s32 %s9, 1
      %s144 = smul.u32 4, %s14
      %p145 = scmp.lt.s32.totalorder %s144, 15
      %s146 = scalar_select %p145, %s144, 15
      %s147 = smul.addr %s146, 4
      %s148 = scalar_lea.vmem %s0, %s147
      %p149 = pneg %p35
      %p150 = pneg %p32
      %p151 = pneg %p56
      %p152 = pneg %p53
      %p153 = pneg %p77
      %p154 = pneg %p74
      %p155 = pneg %p103
      %p156 = pneg %p100
      %s157 = smul.u32 4, %s14
      %p158 = scmp.lt.s32.totalorder %s157, 15
      %s159 = scalar_select %p158, %s157, 15
      %s160 = smul.addr %s159, 4
      %s161 = scalar_lea.vmem %s3, %s160
      %s162 = smul.u32 4, %s14
      %p163 = scmp.lt.s32.totalorder %s162, 15
      %s164 = scalar_select %p163, %s162, 15
      %s165 = smul.addr %s164, 4
      %s166 = scalar_lea.vmem %s0, %s165
      %s167 = smul.u32 4, %s14
      %s168 = smul.u32 4, %s14
      %p169 = scmp.lt.s32.totalorder %s168, 15
      %s170 = scalar_select %p169, %s168, 15
      %s171 = smul.addr %s170, 4
      %s172 = scalar_lea.vmem %s3, %s171
      %s173 = smul.u32 4, %s14
      %v174 = vld [vmem:[%s166] sm:$0xf]
      %v175 = vld [vmem:[%s166 + $0x4] sm:$0xf]
      %v176 = vld [vmem:[%s166 + $0x8] sm:$0xf]
      %v177 = vld [vmem:[%s166 + $0xc] sm:$0xf]
      %v178 = vunpack.c.l.bf16 %v174
      %v179 = vunpack.c.l.bf16 %v175
      %v180 = vunpack.c.l.bf16 %v176
      %v181 = vunpack.c.l.bf16 %v177
      %v182 = vld [vmem:[%s1] sm:$0x1]
      %v184 = vlaneseq
      %v185 = vshrl.u32 %v184, 7
      %v186 = vsub.s32 0, %v185
      %v187 = vrot.slane %v182, %v186
      %v189 = vmul.f32 %v178, %v187
      %v190 = vmul.f32 %v179, %v187
      %v191 = vmul.f32 %v180, %v187
      %v192 = vmul.f32 %v181, %v187
      %v193 = vld [vmem:[%s2] sm:$0x1]
      %v195 = vlaneseq
      %v196 = vshrl.u32 %v195, 7
      %v197 = vsub.s32 0, %v196
      %v198 = vrot.slane %v193, %v197
      %v200 = vadd.f32 %v189, %v198
      %v201 = vadd.f32 %v190, %v198
      %v202 = vadd.f32 %v191, %v198
      %v203 = vadd.f32 %v192, %v198
      %v204 = vmax.f32 %v200, 0.0
      %v205 = vmax.f32 %v201, 0.0
      %v206 = vmax.f32 %v202, 0.0
      %v207 = vmax.f32 %v203, 0.0
      %v208 = vpack.c.bf16 %v205, %v204
      %v209 = vpack.c.bf16 %v207, %v206
      %v212 = vunpack.c.l.b16 %v208
      %v213 = vunpack.c.h.b16 %v208
      %v214 = vunpack.c.l.b16 %v209
      %v215 = vunpack.c.h.b16 %v209
      %v216 = vpack.c.b16 %v212, %v212
      %v217 = vpack.c.b16 %v213, %v213
      %v218 = vpack.c.b16 %v214, %v214
      %v219 = vpack.c.b16 %v215, %v215
      %224 = vst [vmem:[%s172] sm:$0xf] %v216
      %225 = vst [vmem:[%s172 + $0x4] sm:$0xf] %v217
      %226 = vst [vmem:[%s172 + $0x8] sm:$0xf] %v218
      %227 = vst [vmem:[%s172 + $0xc] sm:$0xf] %v219
      %s228 = smul.u32 4, %s14
      %p229 = scmp.lt.s32.totalorder %s228, 15
      %s230 = scalar_select %p229, %s228, 15
      %s231 = smul.addr %s230, 4
      %s232 = scalar_lea.vmem %s3, %s231
      // Predicated region
      $region33: #{basic_block_forward.5} parent=31 // pred_check
        %p233 = pneg %p100
      $region34: #{basic_block_forward.5} parent=31 // pred_check_branch
        %235 = sbr.rel (%p233) target = $region36
      $region35: #{basic_block_forward.5} parent=31 // pred_region
        %s236 = smul.u32 4, %s14
      $region36: #{basic_block_forward.5} parent=31 // pred_fallthru
        _
    $region32: #{basic_block_forward.5} parent=5 // pred_fallthru
      _
    %p237 = scmp.le.s32.totalorder 2, %s9
    // Predicated region
    $region37: #{basic_block_forward.5} parent=5 // pred_check
      %p238 = pneg %p237
    $region38: #{basic_block_forward.5} parent=5 // pred_check_branch
      %240 = sbr.rel (%p238) target = $region40
    $region39: #{basic_block_forward.5} parent=5 // pred_region
      %s241 = ssub.s32 %s9, 2
      // Predicated region
      $region41: #{basic_block_forward.5} parent=39 // pred_check
        %p242 = pneg %p106
      $region42: #{basic_block_forward.5} parent=39 // pred_check_branch
        %244 = sbr.rel (%p242) target = $region44
      $region43: #{basic_block_forward.5} parent=39 // pred_region
        %s245 = smul.u32 4, %s15
        %p246 = scmp.lt.s32.totalorder %s245, 15
        %s247 = scalar_select %p246, %s245, 15
        %s248 = smul.addr %s247, 4
        %s249 = scalar_lea.vmem %s3, %s248
      $region44: #{basic_block_forward.5} parent=39 // pred_fallthru
        _
    $region40: #{basic_block_forward.5} parent=5 // pred_fallthru
      _
  $region6: #{basic_block_forward.5} parent=0 // loop_footer
    %s13 = sadd.s32 1, %s9
  $region7: #{basic_block_forward.5} parent=0 // loop_footer_branch
    %8 = sbr.rel target = $region3
  $region8: #{basic_block_forward.5} parent=0 // loop_exit
    _

// kernel: basic_block_forward.4
$region0: #{basic_block_forward.4}
  #allocation0 [shape = 'u32[]', space=smem, size = 0x4, offset = 0x4, fixed_abs, tag = 'smem constant byte address 0x4 - core index']
  #allocation1 [shape = 'u32[144,128]{1,0:T(1,128)}', space=vmem, size = 0x12000, scoped, tag = 'internal scratch']
  %s0 = inlined_call_operand.vmem [shape: bf16[128,36], index: 0, kind: input, shape index: {}]
  %s1 = inlined_call_operand.vmem [shape: bf16[36,128], index: 1, kind: input, shape index: {}]
  %s2 = inlined_call_operand.vmem [shape: bf16[128,128], index: 2, kind: output, shape index: {0}]
  %s3 = inlined_call_operand.vmem [shape: f32[32,128], index: 3, kind: output, shape index: {1}]
  %4 = xla_tuple %s2, %s3
  %s5 = sld [smem:[#allocation0]]
  $region49: #{basic_block_forward.4} parent=0
    _
  %s7 = ssub.s32 1, %s5
  %s8 = scalar_select 0, %s7, %s5
  loop: start=0, step=1, limit=6
  $region2: #{basic_block_forward.4} parent=0 // loop_pre_header
    _
  $region3: #{basic_block_forward.4} parent=0 // loop_header
    %s10 = sphi 0, %s14
    %p11 = scmp.ge.s32.totalorder %s10, 6
    %s20 = sphi 0, %s22
    %s23 = sphi 0, %s20
    %s24 = sphi 0, %s23
    %s40 = sphi 0, %s24
    %s44 = sphi 0, %s44
    %s46 = sphi 0, %s44
    %s47 = sphi 0, %s46
    %s61 = sphi 0, %s47
    %s67 = sphi 0, %s69
    %s70 = sphi 0, %s67
    %s71 = sphi 0, %s70
    %s87 = sphi 0, %s71
    %s93 = sphi 0, %s95
    %s96 = sphi 0, %s93
    %s97 = sphi 0, %s96
    %s113 = sphi 0, %s97
  $region4: #{basic_block_forward.4} parent=0 // loop_header_branch
    %13 = sbr.rel (%p11) target = $region8
  $region5: #{basic_block_forward.4} parent=0 // loop_body
    %s15 = ssub.s32 %s10, 1
    %s16 = ssub.s32 %s10, 2
    %s17 = sadd.s32 %s10, 1
    %s18 = ssub.s32 %s10, %s17
    %p19 = scmp.eq.s32.totalorder %s18, 0
    %s21 = sadd.s32 %s20, 1
    %s22 = scalar_select %p19, %s20, %s21
    %p25 = pneg %p19
    %p26 = scmp.eq.s32.totalorder %s10, 3
    %p27 = por %p25, %p26
    %p28 = scmp.ne.s32.totalorder %s20, %s23
    %p29 = scmp.eq.s32.totalorder %s10, 0
    %p30 = por %p28, %p29
    %p31 = scmp.ne.s32.totalorder %s20, %s23
    %p32 = scmp.eq.s32.totalorder %s15, 3
    %p33 = por %p31, %p32
    %p34 = scmp.ne.s32.totalorder %s23, %s24
    %p35 = scmp.eq.s32.totalorder %s15, 0
    %p36 = por %p34, %p35
    %p37 = scmp.ne.s32.totalorder %s23, %s24
    %p38 = scmp.eq.s32.totalorder %s16, 3
    %p39 = por %p37, %p38
    %p41 = scmp.ne.s32.totalorder %s24, %s40
    %p42 = scmp.eq.s32.totalorder %s16, 0
    %p43 = por %p41, %p42
    %s45 = sadd.s32 %s44, 1
    %p48 = scmp.eq.s32.totalorder %s10, 3
    %p49 = scmp.ne.s32.totalorder %s44, %s46
    %p50 = scmp.eq.s32.totalorder %s10, 0
    %p51 = por %p49, %p50
    %p52 = scmp.ne.s32.totalorder %s44, %s46
    %p53 = scmp.eq.s32.totalorder %s15, 3
    %p54 = por %p52, %p53
    %p55 = scmp.ne.s32.totalorder %s46, %s47
    %p56 = scmp.eq.s32.totalorder %s15, 0
    %p57 = por %p55, %p56
    %p58 = scmp.ne.s32.totalorder %s46, %s47
    %p59 = scmp.eq.s32.totalorder %s16, 3
    %p60 = por %p58, %p59
    %p62 = scmp.ne.s32.totalorder %s47, %s61
    %p63 = scmp.eq.s32.totalorder %s16, 0
    %p64 = por %p62, %p63
    %s65 = ssub.s32 %s10, %s17
    %p66 = scmp.eq.s32.totalorder %s65, 0
    %s68 = sadd.s32 %s67, 1
    %s69 = scalar_select %p66, %s67, %s68
    %p72 = pneg %p66
    %p73 = scmp.eq.s32.totalorder %s10, 3
    %p74 = por %p72, %p73
    %p75 = scmp.ne.s32.totalorder %s67, %s70
    %p76 = scmp.eq.s32.totalorder %s10, 0
    %p77 = por %p75, %p76
    %p78 = scmp.ne.s32.totalorder %s67, %s70
    %p79 = scmp.eq.s32.totalorder %s15, 3
    %p80 = por %p78, %p79
    %p81 = scmp.ne.s32.totalorder %s70, %s71
    %p82 = scmp.eq.s32.totalorder %s15, 0
    %p83 = por %p81, %p82
    %p84 = scmp.ne.s32.totalorder %s70, %s71
    %p85 = scmp.eq.s32.totalorder %s16, 3
    %p86 = por %p84, %p85
    %p88 = scmp.ne.s32.totalorder %s71, %s87
    %p89 = scmp.eq.s32.totalorder %s16, 0
    %p90 = por %p88, %p89
    %s91 = ssub.s32 %s10, %s17
    %p92 = scmp.eq.s32.totalorder %s91, 0
    %s94 = sadd.s32 %s93, 1
    %s95 = scalar_select %p92, %s93, %s94
    %p98 = pneg %p92
    %p99 = scmp.eq.s32.totalorder %s10, 3
    %p100 = por %p98, %p99
    %p101 = scmp.ne.s32.totalorder %s93, %s96
    %p102 = scmp.eq.s32.totalorder %s10, 0
    %p103 = por %p101, %p102
    %p104 = scmp.ne.s32.totalorder %s93, %s96
    %p105 = scmp.eq.s32.totalorder %s15, 3
    %p106 = por %p104, %p105
    %p107 = scmp.ne.s32.totalorder %s96, %s97
    %p108 = scmp.eq.s32.totalorder %s15, 0
    %p109 = por %p107, %p108
    %p110 = scmp.ne.s32.totalorder %s96, %s97
    %p111 = scmp.eq.s32.totalorder %s16, 3
    %p112 = por %p110, %p111
    %p114 = scmp.ne.s32.totalorder %s97, %s113
    %p115 = scmp.eq.s32.totalorder %s16, 0
    %p116 = por %p114, %p115
    %p117 = scmp.le.s32.totalorder 1, %s10
    %p118 = scmp.lt.s32.totalorder %s10, 5
    %p119 = pnand %p117, %p118
    %p120 = pneg %p119
    // Predicated region
    $region9: #{basic_block_forward.4} parent=5 // pred_check
      _
    $region10: #{basic_block_forward.4} parent=5 // pred_check_branch
      %122 = sbr.rel (%p119) target = $region12
    $region11: #{basic_block_forward.4} parent=5 // pred_region
      %s123 = ssub.s32 %s10, 1
      // Predicated region
      $region13: #{basic_block_forward.4} parent=11 // pred_check
        %p124 = pneg %p57
      $region14: #{basic_block_forward.4} parent=11 // pred_check_branch
        %126 = sbr.rel (%p124) target = $region16
      $region15: #{basic_block_forward.4} parent=11 // pred_region
        _
      $region16: #{basic_block_forward.4} parent=11 // pred_fallthru
        _
    $region12: #{basic_block_forward.4} parent=5 // pred_fallthru
      _
    %p127 = scmp.lt.s32.totalorder %s10, 4
    // Predicated region
    $region17: #{basic_block_forward.4} parent=5 // pred_check
      %p128 = pneg %p127
    $region18: #{basic_block_forward.4} parent=5 // pred_check_branch
      %130 = sbr.rel (%p128) target = $region20
    $region19: #{basic_block_forward.4} parent=5 // pred_region
      // Predicated region
      $region21: #{basic_block_forward.4} parent=19 // pred_check
        %p131 = pneg %p30
      $region22: #{basic_block_forward.4} parent=19 // pred_check_branch
        %133 = sbr.rel (%p131) target = $region24
      $region23: #{basic_block_forward.4} parent=19 // pred_region
        %s134 = smul.u32 4, %s10
        %p135 = scmp.lt.s32.totalorder %s134, 15
        %s136 = scalar_select %p135, %s134, 15
        %s137 = smul.addr %s136, 4
        %s138 = scalar_lea.vmem %s0, %s137
        %s139 = smul.u32 4, %s10
      $region24: #{basic_block_forward.4} parent=19 // pred_fallthru
        _
    $region20: #{basic_block_forward.4} parent=5 // pred_fallthru
      _
    %p140 = scmp.le.s32.totalorder 1, %s10
    %p141 = scmp.lt.s32.totalorder %s10, 5
    %p142 = pnand %p140, %p141
    %p143 = pneg %p142
    // Predicated region
    $region25: #{basic_block_forward.4} parent=5 // pred_check
      _
    $region26: #{basic_block_forward.4} parent=5 // pred_check_branch
      %145 = sbr.rel (%p142) target = $region28
    $region27: #{basic_block_forward.4} parent=5 // pred_region
      %s146 = ssub.s32 %s10, 1
      %s147 = smul.u32 4, %s15
      %p148 = scmp.lt.s32.totalorder %s147, 15
      %s149 = scalar_select %p148, %s147, 15
      %s150 = smul.addr %s149, 4
      %s151 = scalar_lea.vmem %s0, %s150
      %p152 = pneg %p36
      %p153 = pneg %p33
      %p154 = pneg %p57
      %p155 = pneg %p54
      %p156 = pneg %p83
      %p157 = pneg %p80
      %s158 = smul.u32 4, %s15
      %p159 = scmp.lt.s32.totalorder %s158, 15
      %s160 = scalar_select %p159, %s158, 15
      %s161 = smul.addr %s160, 4
      %s162 = scalar_lea.vmem %s2, %s161
      %p163 = pneg %p109
      %p164 = pneg %p106
      %p165 = scmp.lt.s32.totalorder %s15, 3
      %s166 = scalar_select %p165, %s15, 3
      %s167 = smul.addr %s166, 8
      %s168 = scalar_lea.vmem %s3, %s167
      %s169 = smul.u32 4, %s15
      %p170 = scmp.lt.s32.totalorder %s169, 15
      %s171 = scalar_select %p170, %s169, 15
      %s172 = smul.addr %s171, 4
      %s173 = scalar_lea.vmem %s0, %s172
      %s174 = smul.u32 4, %s15
      %s175 = smul.u32 4, %s15
      %p176 = scmp.lt.s32.totalorder %s175, 15
      %s177 = scalar_select %p176, %s175, 15
      %s178 = smul.addr %s177, 4
      %s179 = scalar_lea.vmem %s2, %s178
      %s180 = smul.u32 4, %s15
      %p181 = scmp.lt.s32.totalorder %s15, 3
      %s182 = scalar_select %p181, %s15, 3
      %s183 = smul.addr %s182, 8
      %s184 = scalar_lea.vmem %s3, %s183
      %v186 = vld [vmem:[%s173] sm:$0xf]
      %v187 = vld [vmem:[%s173 + $0x4] sm:$0xf]
      %v188 = vld [vmem:[%s173 + $0x8] sm:$0xf]
      %v189 = vld [vmem:[%s173 + $0xc] sm:$0xf]
      %v190 = vld [vmem:[%s1] sm:$0xf]
      %v191 = vld [vmem:[%s1 + $0x4] sm:$0xf]
      %v192 = vld [vmem:[%s1 + $0x8] sm:$0xf]
      %v193 = vld [vmem:[%s1 + $0xc] sm:$0xf]
      %v194 = vld [vmem:[%s1 + $0x10] sm:$0x3]
      %v199 = vunpack.c.l.b16 %v186
      %v200 = vunpack.c.l.b16 %v187
      %v201 = vunpack.c.l.b16 %v188
      %v202 = vunpack.c.l.b16 %v189
      %v203 = vpack.c.b16 %v200, %v199
      %v204 = vpack.c.b16 %v202, %v201
      %v210 = vunpack.c.l.b16 %v190
      %v211 = vunpack.c.l.b16 %v191
      %v212 = vunpack.c.l.b16 %v192
      %v213 = vunpack.c.l.b16 %v193
      %v214 = vunpack.c.l.b16 %v194
      %v215 = vpack.c.b16 %v211, %v210
      %v216 = vpack.c.b16 %v213, %v212
      %v217 = vpack.c.b16 %v214, %v214
      %vm220 = vcmask 293888
      %v222 = vsel %vm220, %v203, 0
      %v225 = vsel %vm220, %v204, 0
      %vm227 = vcmask 1041408
      %v229 = vsel %vm227, %v217, 0
      %231 = vmatprep.subr.bf16.mxu0 0
      %232 = vmatpush1.bf16.msra.mxu0 %v215
      %233 = vmatprep.subr.bf16.mxu0 0
      %234 = vmatpush1.bf16.msra.mxu0 %v216
      %235 = vmatprep.subr.bf16.mxu0 0
      %236 = vmatpush1.bf16.msra.mxu0 %v229
      %237 = vmatprep.subr.bf16.mxu0 0
      %238 = vmatpush1.bf16.msra.mxu0 0
      %239 = vmatprep.subr.bf16.mxu0 0
      %240 = vmatpush1.bf16.msra.mxu0 0
      %241 = vmatprep.subr.bf16.mxu0 0
      %242 = vmatpush1.bf16.msra.mxu0 0
      %243 = vmatprep.subr.bf16.mxu0 0
      %244 = vmatpush1.bf16.msra.mxu0 0
      %245 = vmatprep.subr.bf16.mxu0 0
      %246 = vmatpush1.bf16.msra.mxu0 0
      %247 = vmatprep.subr.bf16.mxu0 0
      %248 = vmatpush1.bf16.msra.mxu0 0
      %249 = vmatprep.subr.bf16.mxu0 0
      %250 = vmatpush1.bf16.msra.mxu0 0
      %251 = vmatprep.subr.bf16.mxu0 0
      %252 = vmatpush1.bf16.msra.mxu0 0
      %253 = vmatprep.subr.bf16.mxu0 0
      %254 = vmatpush1.bf16.msra.mxu0 0
      %255 = vmatprep.subr.bf16.mxu0 0
      %256 = vmatpush1.bf16.msra.mxu0 0
      %257 = vmatprep.subr.bf16.mxu0 0
      %258 = vmatpush1.bf16.msra.mxu0 0
      %259 = vmatprep.subr.bf16.mxu0 0
      %260 = vmatpush1.bf16.msra.mxu0 0
      %261 = vmatprep.subr.bf16.mxu0 0
      %262 = vmatpush1.bf16.msra.mxu0 0
      %263 = vmatprep.mubr.bf16.mxu0 0
      %264 = vmatmul.mubr.bf16.gmra.mrb[0].mxu0 %v222
      %v265 = vpop.f32.mrb[0].mxu0
      %v266 = vadd.f32 0.0, %v265
      %v267 = vpop.f32.mrb[0].mxu0
      %v268 = vpop.f32.mrb[0].mxu0
      %v269 = vadd.f32 0.0, %v268
      %v270 = vpop.f32.mrb[0].mxu0
      %271 = vmatprep.mubr.bf16.mxu0 0
      %272 = vmatmul.mubr.bf16.gmra.mrb[0].mxu0 %v225
      %v273 = vpop.f32.mrb[0].mxu0
      %v274 = vadd.f32 0.0, %v273
      %v275 = vpop.f32.mrb[0].mxu0
      %v276 = vpop.f32.mrb[0].mxu0
      %v277 = vadd.f32 0.0, %v276
      %v278 = vpop.f32.mrb[0].mxu0
      %279 = vdwg.mxu0
      %v280 = vpack.c.bf16 %v269, %v266
      %v281 = vpack.c.bf16 %v277, %v274
      %v284 = vunpack.c.l.b16 %v280
      %v285 = vunpack.c.h.b16 %v280
      %v286 = vunpack.c.l.b16 %v281
      %v287 = vunpack.c.h.b16 %v281
      %v288 = vpack.c.b16 %v284, %v284
      %v289 = vpack.c.b16 %v285, %v285
      %v290 = vpack.c.b16 %v286, %v286
      %v291 = vpack.c.b16 %v287, %v287
      %296 = vst [vmem:[%s179] sm:$0xf] %v288
      %297 = vst [vmem:[%s179 + $0x4] sm:$0xf] %v289
      %298 = vst [vmem:[%s179 + $0x8] sm:$0xf] %v290
      %299 = vst [vmem:[%s179 + $0xc] sm:$0xf] %v291
      %v300 = vadd.f32 %v266, %v269
      %v301 = vadd.f32 %v300, %v274
      %v302 = vadd.f32 %v301, %v277
      %v303 = vrot.slane %v302, 4
      %v304 = vadd.f32 %v302, %v303
      %v305 = vrot.slane %v304, 2
      %v306 = vadd.f32 %v304, %v305
      %v307 = vrot.slane %v306, 1
      %v308 = vadd.f32 %v306, %v307
      %309 = vst [vmem:[%s184] sm:$0x1] %v308
      %v310 = vmul.f32 %v266, %v266
      %v311 = vmul.f32 %v269, %v269
      %v312 = vmul.f32 %v274, %v274
      %v313 = vmul.f32 %v277, %v277
      %v314 = vadd.f32 %v310, %v311
      %v315 = vadd.f32 %v314, %v312
      %v316 = vadd.f32 %v315, %v313
      %v317 = vrot.slane %v316, 4
      %v318 = vadd.f32 %v316, %v317
      %v319 = vrot.slane %v318, 2
      %v320 = vadd.f32 %v318, %v319
      %v321 = vrot.slane %v320, 1
      %v322 = vadd.f32 %v320, %v321
      %323 = vst [vmem:[%s184 + $0x1] sm:$0x1] %v322
      %s324 = smul.u32 4, %s15
      %p325 = scmp.lt.s32.totalorder %s324, 15
      %s326 = scalar_select %p325, %s324, 15
      %s327 = smul.addr %s326, 4
      %s328 = scalar_lea.vmem %s2, %s327
      %p329 = scmp.lt.s32.totalorder %s15, 3
      %s330 = scalar_select %p329, %s15, 3
      %s331 = smul.addr %s330, 8
      %s332 = scalar_lea.vmem %s3, %s331
      // Predicated region
      $region29: #{basic_block_forward.4} parent=27 // pred_check
        %p333 = pneg %p80
      $region30: #{basic_block_forward.4} parent=27 // pred_check_branch
        %335 = sbr.rel (%p333) target = $region32
      $region31: #{basic_block_forward.4} parent=27 // pred_region
        %s336 = smul.u32 4, %s15
      $region32: #{basic_block_forward.4} parent=27 // pred_fallthru
        _
      // Predicated region
      $region33: #{basic_block_forward.4} parent=27 // pred_check
        %p337 = pneg %p106
      $region34: #{basic_block_forward.4} parent=27 // pred_check_branch
        %339 = sbr.rel (%p337) target = $region36
      $region35: #{basic_block_forward.4} parent=27 // pred_region
        _
      $region36: #{basic_block_forward.4} parent=27 // pred_fallthru
        _
    $region28: #{basic_block_forward.4} parent=5 // pred_fallthru
      _
    %p340 = scmp.le.s32.totalorder 2, %s10
    // Predicated region
    $region37: #{basic_block_forward.4} parent=5 // pred_check
      %p341 = pneg %p340
    $region38: #{basic_block_forward.4} parent=5 // pred_check_branch
      %343 = sbr.rel (%p341) target = $region40
    $region39: #{basic_block_forward.4} parent=5 // pred_region
      %s344 = ssub.s32 %s10, 2
      // Predicated region
      $region41: #{basic_block_forward.4} parent=39 // pred_check
        %p345 = pneg %p86
      $region42: #{basic_block_forward.4} parent=39 // pred_check_branch
        %347 = sbr.rel (%p345) target = $region44
      $region43: #{basic_block_forward.4} parent=39 // pred_region
        %s348 = smul.u32 4, %s16
        %p349 = scmp.lt.s32.totalorder %s348, 15
        %s350 = scalar_select %p349, %s348, 15
        %s351 = smul.addr %s350, 4
        %s352 = scalar_lea.vmem %s2, %s351
      $region44: #{basic_block_forward.4} parent=39 // pred_fallthru
        _
      // Predicated region
      $region45: #{basic_block_forward.4} parent=39 // pred_check
        %p353 = pneg %p112
      $region46: #{basic_block_forward.4} parent=39 // pred_check_branch
        %355 = sbr.rel (%p353) target = $region48
      $region47: #{basic_block_forward.4} parent=39 // pred_region
        %p356 = scmp.lt.s32.totalorder %s16, 3
        %s357 = scalar_select %p356, %s16, 3
        %s358 = smul.addr %s357, 8
        %s359 = scalar_lea.vmem %s3, %s358
      $region48: #{basic_block_forward.4} parent=39 // pred_fallthru
        _
    $region40: #{basic_block_forward.4} parent=5 // pred_fallthru
      _
  $region6: #{basic_block_forward.4} parent=0 // loop_footer
    %s14 = sadd.s32 1, %s10
  $region7: #{basic_block_forward.4} parent=0 // loop_footer_branch
    %9 = sbr.rel target = $region3
  $region8: #{basic_block_forward.4} parent=0 // loop_exit
    _

// kernel: basic_block_forward.7
$region0: #{basic_block_forward.7}
  #allocation0 [shape = 'u32[]', space=smem, size = 0x4, offset = 0x4, fixed_abs, tag = 'smem constant byte address 0x4 - core index']
  #allocation1 [shape = 'u32[144,128]{1,0:T(1,128)}', space=vmem, size = 0x12000, scoped, tag = 'internal scratch']
  %s0 = inlined_call_operand.vmem [shape: bf16[160,128], index: 0, kind: input, shape index: {}]
  %s1 = inlined_call_operand.vmem [shape: f32[160,4], index: 1, kind: input, shape index: {}]
  %s2 = inlined_call_operand.vmem [shape: f32[4,128], index: 2, kind: input, shape index: {}]
  %s3 = inlined_call_operand.vmem [shape: f32[1,128], index: 3, kind: input, shape index: {}]
  %s4 = inlined_call_operand.vmem [shape: f32[1,128], index: 4, kind: input, shape index: {}]
  %s5 = inlined_call_operand.vmem [shape: f32[160,128], index: 5, kind: output, shape index: {}]
  %s6 = sld [smem:[#allocation0]]
  $region101: #{basic_block_forward.7} parent=0
    _
  %s8 = ssub.s32 1, %s6
  %s9 = scalar_select 0, %s8, %s6
  $region1: #{basic_block_forward.7} parent=0
    #allocation2 [shape = 'u8[49152]{0}', space=vmem, size = 0xc000, scoped, tag = 'output window, operand 0']
    loop: start=0, step=1, limit=6
    $region2: #{basic_block_forward.7} parent=1 // loop_pre_header
      _
    $region3: #{basic_block_forward.7} parent=1 // loop_header
      %s11 = sphi 0, %s15
      %p12 = scmp.ge.s32.totalorder %s11, 6
      %s21 = sphi 0, %s23
      %s24 = sphi 0, %s21
      %s25 = sphi 0, %s24
      %s41 = sphi 0, %s25
      %s47 = sphi 0, %s49
      %s50 = sphi 0, %s47
      %s51 = sphi 0, %s50
      %s67 = sphi 0, %s51
      %s71 = sphi 0, %s71
      %s73 = sphi 0, %s71
      %s74 = sphi 0, %s73
      %s88 = sphi 0, %s74
      %s92 = sphi 0, %s92
      %s94 = sphi 0, %s92
      %s95 = sphi 0, %s94
      %s109 = sphi 0, %s95
      %s113 = sphi 0, %s113
      %s115 = sphi 0, %s113
      %s116 = sphi 0, %s115
      %s130 = sphi 0, %s116
      %s136 = sphi 0, %s138
      %s139 = sphi 0, %s136
      %s140 = sphi 0, %s139
      %s156 = sphi 0, %s140
    $region4: #{basic_block_forward.7} parent=1 // loop_header_branch
      %14 = sbr.rel (%p12) target = $region8
    $region5: #{basic_block_forward.7} parent=1 // loop_body
      %s16 = ssub.s32 %s11, 1
      %s17 = ssub.s32 %s11, 2
      %s18 = sadd.s32 %s11, 1
      %s19 = ssub.s32 %s11, %s18
      %p20 = scmp.eq.s32.totalorder %s19, 0
      %s22 = sadd.s32 %s21, 1
      %s23 = scalar_select %p20, %s21, %s22
      %p26 = pneg %p20
      %p27 = scmp.eq.s32.totalorder %s11, 3
      %p28 = por %p26, %p27
      %p29 = scmp.ne.s32.totalorder %s21, %s24
      %p30 = scmp.eq.s32.totalorder %s11, 0
      %p31 = por %p29, %p30
      %p32 = scmp.ne.s32.totalorder %s21, %s24
      %p33 = scmp.eq.s32.totalorder %s16, 3
      %p34 = por %p32, %p33
      %p35 = scmp.ne.s32.totalorder %s24, %s25
      %p36 = scmp.eq.s32.totalorder %s16, 0
      %p37 = por %p35, %p36
      %p38 = scmp.ne.s32.totalorder %s24, %s25
      %p39 = scmp.eq.s32.totalorder %s17, 3
      %p40 = por %p38, %p39
      %p42 = scmp.ne.s32.totalorder %s25, %s41
      %p43 = scmp.eq.s32.totalorder %s17, 0
      %p44 = por %p42, %p43
      %s45 = ssub.s32 %s11, %s18
      %p46 = scmp.eq.s32.totalorder %s45, 0
      %s48 = sadd.s32 %s47, 1
      %s49 = scalar_select %p46, %s47, %s48
      %p52 = pneg %p46
      %p53 = scmp.eq.s32.totalorder %s11, 3
      %p54 = por %p52, %p53
      %p55 = scmp.ne.s32.totalorder %s47, %s50
      %p56 = scmp.eq.s32.totalorder %s11, 0
      %p57 = por %p55, %p56
      %p58 = scmp.ne.s32.totalorder %s47, %s50
      %p59 = scmp.eq.s32.totalorder %s16, 3
      %p60 = por %p58, %p59
      %p61 = scmp.ne.s32.totalorder %s50, %s51
      %p62 = scmp.eq.s32.totalorder %s16, 0
      %p63 = por %p61, %p62
      %p64 = scmp.ne.s32.totalorder %s50, %s51
      %p65 = scmp.eq.s32.totalorder %s17, 3
      %p66 = por %p64, %p65
      %p68 = scmp.ne.s32.totalorder %s51, %s67
      %p69 = scmp.eq.s32.totalorder %s17, 0
      %p70 = por %p68, %p69
      %s72 = sadd.s32 %s71, 1
      %p75 = scmp.eq.s32.totalorder %s11, 3
      %p76 = scmp.ne.s32.totalorder %s71, %s73
      %p77 = scmp.eq.s32.totalorder %s11, 0
      %p78 = por %p76, %p77
      %p79 = scmp.ne.s32.totalorder %s71, %s73
      %p80 = scmp.eq.s32.totalorder %s16, 3
      %p81 = por %p79, %p80
      %p82 = scmp.ne.s32.totalorder %s73, %s74
      %p83 = scmp.eq.s32.totalorder %s16, 0
      %p84 = por %p82, %p83
      %p85 = scmp.ne.s32.totalorder %s73, %s74
      %p86 = scmp.eq.s32.totalorder %s17, 3
      %p87 = por %p85, %p86
      %p89 = scmp.ne.s32.totalorder %s74, %s88
      %p90 = scmp.eq.s32.totalorder %s17, 0
      %p91 = por %p89, %p90
      %s93 = sadd.s32 %s92, 1
      %p96 = scmp.eq.s32.totalorder %s11, 3
      %p97 = scmp.ne.s32.totalorder %s92, %s94
      %p98 = scmp.eq.s32.totalorder %s11, 0
      %p99 = por %p97, %p98
      %p100 = scmp.ne.s32.totalorder %s92, %s94
      %p101 = scmp.eq.s32.totalorder %s16, 3
      %p102 = por %p100, %p101
      %p103 = scmp.ne.s32.totalorder %s94, %s95
      %p104 = scmp.eq.s32.totalorder %s16, 0
      %p105 = por %p103, %p104
      %p106 = scmp.ne.s32.totalorder %s94, %s95
      %p107 = scmp.eq.s32.totalorder %s17, 3
      %p108 = por %p106, %p107
      %p110 = scmp.ne.s32.totalorder %s95, %s109
      %p111 = scmp.eq.s32.totalorder %s17, 0
      %p112 = por %p110, %p111
      %s114 = sadd.s32 %s113, 1
      %p117 = scmp.eq.s32.totalorder %s11, 3
      %p118 = scmp.ne.s32.totalorder %s113, %s115
      %p119 = scmp.eq.s32.totalorder %s11, 0
      %p120 = por %p118, %p119
      %p121 = scmp.ne.s32.totalorder %s113, %s115
      %p122 = scmp.eq.s32.totalorder %s16, 3
      %p123 = por %p121, %p122
      %p124 = scmp.ne.s32.totalorder %s115, %s116
      %p125 = scmp.eq.s32.totalorder %s16, 0
      %p126 = por %p124, %p125
      %p127 = scmp.ne.s32.totalorder %s115, %s116
      %p128 = scmp.eq.s32.totalorder %s17, 3
      %p129 = por %p127, %p128
      %p131 = scmp.ne.s32.totalorder %s116, %s130
      %p132 = scmp.eq.s32.totalorder %s17, 0
      %p133 = por %p131, %p132
      %s134 = ssub.s32 %s11, %s18
      %p135 = scmp.eq.s32.totalorder %s134, 0
      %s137 = sadd.s32 %s136, 1
      %s138 = scalar_select %p135, %s136, %s137
      %p141 = pneg %p135
      %p142 = scmp.eq.s32.totalorder %s11, 3
      %p143 = por %p141, %p142
      %p144 = scmp.ne.s32.totalorder %s136, %s139
      %p145 = scmp.eq.s32.totalorder %s11, 0
      %p146 = por %p144, %p145
      %p147 = scmp.ne.s32.totalorder %s136, %s139
      %p148 = scmp.eq.s32.totalorder %s16, 3
      %p149 = por %p147, %p148
      %p150 = scmp.ne.s32.totalorder %s139, %s140
      %p151 = scmp.eq.s32.totalorder %s16, 0
      %p152 = por %p150, %p151
      %p153 = scmp.ne.s32.totalorder %s139, %s140
      %p154 = scmp.eq.s32.totalorder %s17, 3
      %p155 = por %p153, %p154
      %p157 = scmp.ne.s32.totalorder %s140, %s156
      %p158 = scmp.eq.s32.totalorder %s17, 0
      %p159 = por %p157, %p158
      %p160 = scmp.le.s32.totalorder 1, %s11
      %p161 = scmp.lt.s32.totalorder %s11, 5
      %p162 = pnand %p160, %p161
      %p163 = pneg %p162
      // Predicated region
      $region9: #{basic_block_forward.7} parent=5 // pred_check
        _
      $region10: #{basic_block_forward.7} parent=5 // pred_check_branch
        %165 = sbr.rel (%p162) target = $region12
      $region11: #{basic_block_forward.7} parent=5 // pred_region
        %s166 = ssub.s32 %s11, 1
        // Predicated region
        $region13: #{basic_block_forward.7} parent=11 // pred_check
          %p167 = pneg %p84
        $region14: #{basic_block_forward.7} parent=11 // pred_check_branch
          %169 = sbr.rel (%p167) target = $region16
        $region15: #{basic_block_forward.7} parent=11 // pred_region
          _
        $region16: #{basic_block_forward.7} parent=11 // pred_fallthru
          _
        // Predicated region
        $region17: #{basic_block_forward.7} parent=11 // pred_check
          %p170 = pneg %p105
        $region18: #{basic_block_forward.7} parent=11 // pred_check_branch
          %172 = sbr.rel (%p170) target = $region20
        $region19: #{basic_block_forward.7} parent=11 // pred_region
          _
        $region20: #{basic_block_forward.7} parent=11 // pred_fallthru
          _
        // Predicated region
        $region21: #{basic_block_forward.7} parent=11 // pred_check
          %p173 = pneg %p126
        $region22: #{basic_block_forward.7} parent=11 // pred_check_branch
          %175 = sbr.rel (%p173) target = $region24
        $region23: #{basic_block_forward.7} parent=11 // pred_region
          _
        $region24: #{basic_block_forward.7} parent=11 // pred_fallthru
          _
      $region12: #{basic_block_forward.7} parent=5 // pred_fallthru
        _
      %p176 = scmp.lt.s32.totalorder %s11, 4
      // Predicated region
      $region25: #{basic_block_forward.7} parent=5 // pred_check
        %p177 = pneg %p176
      $region26: #{basic_block_forward.7} parent=5 // pred_check_branch
        %179 = sbr.rel (%p177) target = $region28
      $region27: #{basic_block_forward.7} parent=5 // pred_region
        // Predicated region
        $region29: #{basic_block_forward.7} parent=27 // pred_check
          %p180 = pneg %p31
        $region30: #{basic_block_forward.7} parent=27 // pred_check_branch
          %182 = sbr.rel (%p180) target = $region32
        $region31: #{basic_block_forward.7} parent=27 // pred_region
          %s183 = smul.u32 6, %s11
          %s184 = ssub.s32 20, %s183
          %p185 = scmp.lt.s32.totalorder %s184, 6
          %s186 = scalar_select %p185, %s184, 6
          %s187 = smul.u32 64, %s186
          %p188 = scmp.lt.s32.totalorder %s183, 19
          %s189 = scalar_select %p188, %s183, 19
          %s190 = smul.addr %s189, 4
          %s191 = scalar_lea.vmem %s0, %s190
          %s192 = smul.u32 6, %s11
          %s193 = ssub.s32 20, %s192
          %p194 = scmp.lt.s32.totalorder %s193, 6
          %s195 = scalar_select %p194, %s193, 6
          %s196 = smul.u32 64, %s195
        $region32: #{basic_block_forward.7} parent=27 // pred_fallthru
          _
        // Predicated region
        $region33: #{basic_block_forward.7} parent=27 // pred_check
          %p197 = pneg %p57
        $region34: #{basic_block_forward.7} parent=27 // pred_check_branch
          %199 = sbr.rel (%p197) target = $region36
        $region35: #{basic_block_forward.7} parent=27 // pred_region
          %s200 = smul.u32 6, %s11
          %s201 = ssub.s32 20, %s200
          %p202 = scmp.lt.s32.totalorder %s201, 6
          %s203 = scalar_select %p202, %s201, 6
          %s204 = smul.u32 128, %s203
          %p205 = scmp.lt.s32.totalorder %s200, 19
          %s206 = scalar_select %p205, %s200, 19
          %s207 = smul.addr %s206, 8
          %s208 = scalar_lea.vmem %s1, %s207
          %s209 = smul.u32 6, %s11
          %s210 = ssub.s32 20, %s209
          %p211 = scmp.lt.s32.totalorder %s210, 6
          %s212 = scalar_select %p211, %s210, 6
          %s213 = smul.u32 128, %s212
        $region36: #{basic_block_forward.7} parent=27 // pred_fallthru
          _
      $region28: #{basic_block_forward.7} parent=5 // pred_fallthru
        _
      %p214 = scmp.le.s32.totalorder 1, %s11
      %p215 = scmp.lt.s32.totalorder %s11, 5
      %p216 = pnand %p214, %p215
      %p217 = pneg %p216
      // Predicated region
      $region37: #{basic_block_forward.7} parent=5 // pred_check
        _
      $region38: #{basic_block_forward.7} parent=5 // pred_check_branch
        %219 = sbr.rel (%p216) target = $region40
      $region39: #{basic_block_forward.7} parent=5 // pred_region
        %s220 = ssub.s32 %s11, 1
        %s221 = smul.u32 6, %s16
        %s222 = ssub.s32 20, %s221
        %p223 = scmp.lt.s32.totalorder %s222, 6
        %s224 = scalar_select %p223, %s222, 6
        %s225 = smul.u32 64, %s224
        %p226 = scmp.lt.s32.totalorder %s221, 19
        %s227 = scalar_select %p226, %s221, 19
        %s228 = smul.addr %s227, 4
        %s229 = scalar_lea.vmem %s0, %s228
        %p230 = pneg %p37
        %p231 = pneg %p34
        %s232 = smul.u32 6, %s16
        %s233 = ssub.s32 20, %s232
        %p234 = scmp.lt.s32.totalorder %s233, 6
        %s235 = scalar_select %p234, %s233, 6
        %s236 = smul.u32 128, %s235
        %p237 = scmp.lt.s32.totalorder %s232, 19
        %s238 = scalar_select %p237, %s232, 19
        %s239 = smul.addr %s238, 8
        %s240 = scalar_lea.vmem %s1, %s239
        %p241 = pneg %p63
        %p242 = pneg %p60
        %p243 = pneg %p84
        %p244 = pneg %p81
        %p245 = pneg %p105
        %p246 = pneg %p102
        %p247 = pneg %p126
        %p248 = pneg %p123
        %p249 = pneg %p152
        %p250 = pneg %p149
        %s251 = sand.u32 %s139, 1
        %s252 = sand.u32 %s139, 1
        %s253 = smul.addr %s252, 48
        %s254 = scalar_lea.vmem [#allocation2], %s253
        %s255 = smul.u32 6, %s16
        %s256 = ssub.s32 20, %s255
        %p257 = scmp.lt.s32.totalorder %s256, 6
        %s258 = scalar_select %p257, %s256, 6
        %s259 = smul.u32 64, %s258
        %p260 = scmp.lt.s32.totalorder %s255, 19
        %s261 = scalar_select %p260, %s255, 19
        %s262 = smul.addr %s261, 4
        %s263 = scalar_lea.vmem %s0, %s262
        %s264 = smul.u32 6, %s16
        %s265 = ssub.s32 20, %s264
        %p266 = scmp.lt.s32.totalorder %s265, 6
        %s267 = scalar_select %p266, %s265, 6
        %s268 = smul.u32 64, %s267
        %s269 = smul.u32 6, %s16
        %s270 = ssub.s32 20, %s269
        %p271 = scmp.lt.s32.totalorder %s270, 6
        %s272 = scalar_select %p271, %s270, 6
        %s273 = smul.u32 128, %s272
        %p274 = scmp.lt.s32.totalorder %s269, 19
        %s275 = scalar_select %p274, %s269, 19
        %s276 = smul.addr %s275, 8
        %s277 = scalar_lea.vmem %s1, %s276
        %s278 = smul.u32 6, %s16
        %s279 = ssub.s32 20, %s278
        %p280 = scmp.lt.s32.totalorder %s279, 6
        %s281 = scalar_select %p280, %s279, 6
        %s282 = smul.u32 128, %s281
        %s283 = smul.u32 6, %s16
        %s284 = ssub.s32 20, %s283
        %p285 = scmp.lt.s32.totalorder %s284, 6
        %s286 = scalar_select %p285, %s284, 6
        %s287 = smul.u32 128, %s286
        %v288 = vld [vmem:[%s263] sm:$0xf]
        %v289 = vld [vmem:[%s263 + $0x4] sm:$0xf]
        %v290 = vld [vmem:[%s263 + $0x8] sm:$0xf]
        %v291 = vld [vmem:[%s263 + $0xc] sm:$0xf]
        %v292 = vld [vmem:[%s263 + $0x10] sm:$0xf]
        %v293 = vld [vmem:[%s263 + $0x14] sm:$0xf]
        %v294 = vunpack.c.l.bf16 %v288
        %v295 = vunpack.c.l.bf16 %v289
        %v296 = vunpack.c.l.bf16 %v290
        %v297 = vunpack.c.l.bf16 %v291
        %v298 = vunpack.c.l.bf16 %v292
        %v299 = vunpack.c.l.bf16 %v293
        %v300 = vld [vmem:[%s3] sm:$0x1]
        %v302 = vlaneseq
        %v303 = vshrl.u32 %v302, 7
        %v304 = vsub.s32 0, %v303
        %v305 = vrot.slane %v300, %v304
        %v307 = vmul.f32 %v294, %v305
        %v308 = vmul.f32 %v295, %v305
        %v309 = vmul.f32 %v296, %v305
        %v310 = vmul.f32 %v297, %v305
        %v311 = vmul.f32 %v298, %v305
        %v312 = vmul.f32 %v299, %v305
        %v313 = vld [vmem:[%s4] sm:$0x1]
        %v315 = vlaneseq
        %v316 = vshrl.u32 %v315, 7
        %v317 = vsub.s32 0, %v316
        %v318 = vrot.slane %v313, %v317
        %v320 = vadd.f32 %v307, %v318
        %v321 = vadd.f32 %v308, %v318
        %v322 = vadd.f32 %v309, %v318
        %v323 = vadd.f32 %v310, %v318
        %v324 = vadd.f32 %v311, %v318
        %v325 = vadd.f32 %v312, %v318
        %v326 = vld [vmem:[%s277] sm:$0xff]
        %v327 = vld [vmem:[%s277 + $0x8] sm:$0xff]
        %v328 = vld [vmem:[%s277 + $0x10] sm:$0xff]
        %v329 = vld [vmem:[%s277 + $0x18] sm:$0xff]
        %v330 = vld [vmem:[%s277 + $0x20] sm:$0xff]
        %v331 = vld [vmem:[%s277 + $0x28] sm:$0xff]
        %v332 = vld [vmem:[%s2] sm:$0xf]
        %vm333 = vcmask 31744
        %v335 = vsel %vm333, %v326, 0
        %v338 = vsel %vm333, %v327, 0
        %v341 = vsel %vm333, %v328, 0
        %v344 = vsel %vm333, %v329, 0
        %v347 = vsel %vm333, %v330, 0
        %v350 = vsel %vm333, %v331, 0
        %vm352 = vcmask 1043456
        %v354 = vsel %vm352, %v332, 0
        %356 = vmatprep.subr.mxu0 0.0
        %357 = vmatpush1.msra.mxu0 %v354
        %358 = vmatprep.subr.mxu0 0.0
        %359 = vmatpush1.msra.mxu0 0.0
        %360 = vmatprep.subr.mxu0 0.0
        %361 = vmatpush1.msra.mxu0 0.0
        %362 = vmatprep.subr.mxu0 0.0
        %363 = vmatpush1.msra.mxu0 0.0
        %364 = vmatprep.subr.mxu0 0.0
        %365 = vmatpush1.msra.mxu0 0.0
        %366 = vmatprep.subr.mxu0 0.0
        %367 = vmatpush1.msra.mxu0 0.0
        %368 = vmatprep.subr.mxu0 0.0
        %369 = vmatpush1.msra.mxu0 0.0
        %370 = vmatprep.subr.mxu0 0.0
        %371 = vmatpush1.msra.mxu0 0.0
        %372 = vmatprep.subr.mxu0 0.0
        %373 = vmatpush1.msra.mxu0 0.0
        %374 = vmatprep.subr.mxu0 0.0
        %375 = vmatpush1.msra.mxu0 0.0
        %376 = vmatprep.subr.mxu0 0.0
        %377 = vmatpush1.msra.mxu0 0.0
        %378 = vmatprep.subr.mxu0 0.0
        %379 = vmatpush1.msra.mxu0 0.0
        %380 = vmatprep.subr.mxu0 0.0
        %381 = vmatpush1.msra.mxu0 0.0
        %382 = vmatprep.subr.mxu0 0.0
        %383 = vmatpush1.msra.mxu0 0.0
        %384 = vmatprep.subr.mxu0 0.0
        %385 = vmatpush1.msra.mxu0 0.0
        %386 = vmatprep.subr.mxu0 0.0
        %387 = vmatpush1.msra.mxu0 0.0
        %388 = vmatprep.subr.mxu0 0.0
        %389 = vmatpush1.msra.mxu0 0.0
        %390 = vmatprep.subr.mxu0 0.0
        %391 = vmatpush1.msra.mxu0 0.0
        %392 = vmatprep.subr.mxu0 0.0
        %393 = vmatpush1.msra.mxu0 0.0
        %394 = vmatprep.subr.mxu0 0.0
        %395 = vmatpush1.msra.mxu0 0.0
        %396 = vmatprep.subr.mxu0 0.0
        %397 = vmatpush1.msra.mxu0 0.0
        %398 = vmatprep.subr.mxu0 0.0
        %399 = vmatpush1.msra.mxu0 0.0
        %400 = vmatprep.subr.mxu0 0.0
        %401 = vmatpush1.msra.mxu0 0.0
        %402 = vmatprep.subr.mxu0 0.0
        %403 = vmatpush1.msra.mxu0 0.0
        %404 = vmatprep.subr.mxu0 0.0
        %405 = vmatpush1.msra.mxu0 0.0
        %406 = vmatprep.subr.mxu0 0.0
        %407 = vmatpush1.msra.mxu0 0.0
        %408 = vmatprep.subr.mxu0 0.0
        %409 = vmatpush1.msra.mxu0 0.0
        %410 = vmatprep.subr.mxu0 0.0
        %411 = vmatpush1.msra.mxu0 0.0
        %412 = vmatprep.subr.mxu0 0.0
        %413 = vmatpush1.msra.mxu0 0.0
        %414 = vmatprep.subr.mxu0 0.0
        %415 = vmatpush1.msra.mxu0 0.0
        %416 = vmatprep.subr.mxu0 0.0
        %417 = vmatpush1.msra.mxu0 0.0
        %418 = vmatprep.subr.mxu0 0.0
        %419 = vmatpush1.msra.mxu0 0.0
        %420 = vmatprep.mubr.f32.mxu0 0.0
        %421 = vmatmul.mubr.f32.gmra.mrb[0].mxu0 %v335
        %v422 = vpop.f32.mrb[0].mxu0
        %v423 = vadd.f32 0.0, %v422
        %v424 = vpop.f32.mrb[0].mxu0
        %425 = vmatprep.mubr.f32.mxu0 0.0
        %426 = vmatmul.mubr.f32.gmra.mrb[0].mxu0 %v338
        %v427 = vpop.f32.mrb[0].mxu0
        %v428 = vadd.f32 0.0, %v427
        %v429 = vpop.f32.mrb[0].mxu0
        %430 = vmatprep.mubr.f32.mxu0 0.0
        %431 = vmatmul.mubr.f32.gmra.mrb[0].mxu0 %v341
        %v432 = vpop.f32.mrb[0].mxu0
        %v433 = vadd.f32 0.0, %v432
        %v434 = vpop.f32.mrb[0].mxu0
        %435 = vmatprep.mubr.f32.mxu0 0.0
        %436 = vmatmul.mubr.f32.gmra.mrb[0].mxu0 %v344
        %v437 = vpop.f32.mrb[0].mxu0
        %v438 = vadd.f32 0.0, %v437
        %v439 = vpop.f32.mrb[0].mxu0
        %440 = vmatprep.mubr.f32.mxu0 0.0
        %441 = vmatmul.mubr.f32.gmra.mrb[0].mxu0 %v347
        %v442 = vpop.f32.mrb[0].mxu0
        %v443 = vadd.f32 0.0, %v442
        %v444 = vpop.f32.mrb[0].mxu0
        %445 = vmatprep.mubr.f32.mxu0 0.0
        %446 = vmatmul.mubr.f32.gmra.mrb[0].mxu0 %v350
        %v447 = vpop.f32.mrb[0].mxu0
        %v448 = vadd.f32 0.0, %v447
        %v449 = vpop.f32.mrb[0].mxu0
        %450 = vdwg.mxu0
        %v451 = vadd.f32 %v320, %v423
        %v452 = vadd.f32 %v321, %v428
        %v453 = vadd.f32 %v322, %v433
        %v454 = vadd.f32 %v323, %v438
        %v455 = vadd.f32 %v324, %v443
        %v456 = vadd.f32 %v325, %v448
        %v457 = vmax.f32 %v451, 0.0
        %v458 = vmax.f32 %v452, 0.0
        %v459 = vmax.f32 %v453, 0.0
        %v460 = vmax.f32 %v454, 0.0
        %v461 = vmax.f32 %v455, 0.0
        %v462 = vmax.f32 %v456, 0.0
        %463 = vst [vmem:[%s254] sm:$0xff] %v457
        %464 = vst [vmem:[%s254 + $0x8] sm:$0xff] %v458
        %465 = vst [vmem:[%s254 + $0x10] sm:$0xff] %v459
        %466 = vst [vmem:[%s254 + $0x18] sm:$0xff] %v460
        %467 = vst [vmem:[%s254 + $0x20] sm:$0xff] %v461
        %468 = vst [vmem:[%s254 + $0x28] sm:$0xff] %v462
        %s469 = sand.u32 %s139, 1
        %s470 = sand.u32 %s139, 1
        %s471 = smul.addr %s470, 48
        %s472 = scalar_lea.vmem [#allocation2], %s471
        // Predicated region
        $region41: #{basic_block_forward.7} parent=39 // pred_check
          %p473 = pneg %p149
        $region42: #{basic_block_forward.7} parent=39 // pred_check_branch
          %475 = sbr.rel (%p473) target = $region44
        $region43: #{basic_block_forward.7} parent=39 // pred_region
          %s476 = smul.u32 6, %s16
          %s477 = ssub.s32 20, %s476
          %p478 = scmp.lt.s32.totalorder %s477, 6
          %s479 = scalar_select %p478, %s477, 6
          %s480 = smul.u32 128, %s479
          %p481 = scmp.ne.s32.totalorder 0, %s480
          %s482 = smul.addr %s476, 8
          %s483 = scalar_lea.vmem %s5, %s482
          // Predicated region
          $region45: #{basic_block_forward.7} parent=43 // pred_check
            %p484 = pneg %p481
          $region46: #{basic_block_forward.7} parent=43 // pred_check_branch
            %486 = sbr.rel (%p484) target = $region48
          $region47: #{basic_block_forward.7} parent=43 // pred_region
            // Predicated region
            $region49: #{basic_block_forward.7} parent=47 // pred_check
              _
            $region50: #{basic_block_forward.7} parent=47 // pred_check_branch
              %488 = sbr.rel (0) target = $region52
            $region51: #{basic_block_forward.7} parent=47 // pred_region
              // Predicated region
              $region71: #{basic_block_forward.7} parent=51 // pred_check
                _
              $region72: #{basic_block_forward.7} parent=51 // pred_check_branch
                %548 = sbr.rel (0) target = $region74
              $region73: #{basic_block_forward.7} parent=51 // pred_region
                %s549 = sdiv.u32.pop %s479, 6
                %s550 = srem.u32.pop %s479, 6
                // While loop
                $region75: #{basic_block_forward.7} parent=73 // loop_pre_header
                  _
                $region76: #{basic_block_forward.7} parent=73 // loop_header
                  %s552 = sphi 0, %s554
                  %p553 = scmp.ge.s32.totalorder %s552, %s549
                  %s557 = sphi 0, %s574
                  %s558 = sphi %s472, %s577
                  %s559 = sphi %s483, %s578
                $region77: #{basic_block_forward.7} parent=73 // loop_header_branch
                  %556 = sbr.rel (%p553) target = $region81
                $region78: #{basic_block_forward.7} parent=73 // loop_body
                  %v560 = vld [vmem:[%s558] sm:$0xff]
                  %561 = vst [vmem:[%s559] sm:$0xff] %v560
                  %v562 = vld [vmem:[%s558 + $0x8] sm:$0xff]
                  %563 = vst [vmem:[%s559 + $0x8] sm:$0xff] %v562
                  %v564 = vld [vmem:[%s558 + $0x10] sm:$0xff]
                  %565 = vst [vmem:[%s559 + $0x10] sm:$0xff] %v564
                  %v566 = vld [vmem:[%s558 + $0x18] sm:$0xff]
                  %567 = vst [vmem:[%s559 + $0x18] sm:$0xff] %v566
                  %v568 = vld [vmem:[%s558 + $0x20] sm:$0xff]
                  %569 = vst [vmem:[%s559 + $0x20] sm:$0xff] %v568
                  %v570 = vld [vmem:[%s558 + $0x28] sm:$0xff]
                  %571 = vst [vmem:[%s559 + $0x28] sm:$0xff] %v570
                  %s572 = sadd.s32 1, %s557
                  %p573 = scmp.ge.s32.totalorder %s572, %s549
                  %s574 = scalar_select %p573, 0, %s572
                  %s575 = smul.u32 %s574, 48
                  %s576 = smul.u32 %s574, 48
                  %s577 = scalar_lea.vmem %s472, %s575 [#allocation2]
                  %s578 = scalar_lea.vmem %s483, %s576
                $region79: #{basic_block_forward.7} parent=73 // loop_footer
                  %s554 = sadd.s32 %s552, 1
                $region80: #{basic_block_forward.7} parent=73 // loop_footer_branch
                  %551 = sbr.rel target = $region76
                $region81: #{basic_block_forward.7} parent=73 // loop_exit
                  _
                %s579 = sdiv.u32.pop %s479, 6
                %s580 = srem.u32.pop %s479, 6
                %s581 = smul.u32 %s579, 6
                %s582 = smul.u32 8, %s581
                %s583 = scalar_lea.vmem %s472, %s582 [#allocation2]
                %s584 = smul.u32 8, %s581
                %s585 = scalar_lea.vmem %s483, %s584
                // While loop
                $region82: #{basic_block_forward.7} parent=73 // loop_pre_header
                  _
                $region83: #{basic_block_forward.7} parent=73 // loop_header
                  %s587 = sphi 0, %s589
                  %p588 = scmp.ge.s32.totalorder %s587, %s580
                  %s592 = sphi 0, %s599
                  %s593 = sphi %s583, %s602
                  %s594 = sphi %s585, %s603
                $region84: #{basic_block_forward.7} parent=73 // loop_header_branch
                  %591 = sbr.rel (%p588) target = $region88
                $region85: #{basic_block_forward.7} parent=73 // loop_body
                  %v595 = vld [vmem:[%s593] sm:$0xff]
                  %596 = vst [vmem:[%s594] sm:$0xff] %v595
                  %s597 = sadd.s32 1, %s592
                  %p598 = scmp.ge.s32.totalorder %s597, %s580
                  %s599 = scalar_select %p598, 0, %s597
                  %s600 = smul.u32 %s599, 8
                  %s601 = smul.u32 %s599, 8
                  %s602 = scalar_lea.vmem %s583, %s600 [#allocation2]
                  %s603 = scalar_lea.vmem %s585, %s601
                $region86: #{basic_block_forward.7} parent=73 // loop_footer
                  %s589 = sadd.s32 %s587, 1
                $region87: #{basic_block_forward.7} parent=73 // loop_footer_branch
                  %586 = sbr.rel target = $region83
                $region88: #{basic_block_forward.7} parent=73 // loop_exit
                  _
              $region74: #{basic_block_forward.7} parent=51 // pred_fallthru
                _
              // Predicated region
              $region89: #{basic_block_forward.7} parent=51 // pred_check
                _
              $region90: #{basic_block_forward.7} parent=51 // pred_check_branch
                %605 = sbr.rel target = $region92
              $region91: #{basic_block_forward.7} parent=51 // pred_region
                _
              $region92: #{basic_block_forward.7} parent=51 // pred_fallthru
                _
            $region52: #{basic_block_forward.7} parent=47 // pred_fallthru
              _
            // Predicated region
            $region53: #{basic_block_forward.7} parent=47 // pred_check
              _
            $region54: #{basic_block_forward.7} parent=47 // pred_check_branch
              %490 = sbr.rel target = $region56
            $region55: #{basic_block_forward.7} parent=47 // pred_region
              %s492 = sdiv.u32.pop %s479, 6
              %s493 = srem.u32.pop %s479, 6
              // While loop
              $region57: #{basic_block_forward.7} parent=55 // loop_pre_header
                _
              $region58: #{basic_block_forward.7} parent=55 // loop_header
                %s495 = sphi 0, %s497
                %p496 = scmp.ge.s32.totalorder %s495, %s492
                %s500 = sphi 0, %s517
                %s501 = sphi %s472, %s520
                %s502 = sphi %s483, %s521
              $region59: #{basic_block_forward.7} parent=55 // loop_header_branch
                %499 = sbr.rel (%p496) target = $region63
              $region60: #{basic_block_forward.7} parent=55 // loop_body
                %v503 = vld [vmem:[%s501] sm:$0xff]
                %504 = vst [vmem:[%s502] sm:$0xff] %v503
                %v505 = vld [vmem:[%s501 + $0x8] sm:$0xff]
                %506 = vst [vmem:[%s502 + $0x8] sm:$0xff] %v505
                %v507 = vld [vmem:[%s501 + $0x10] sm:$0xff]
                %508 = vst [vmem:[%s502 + $0x10] sm:$0xff] %v507
                %v509 = vld [vmem:[%s501 + $0x18] sm:$0xff]
                %510 = vst [vmem:[%s502 + $0x18] sm:$0xff] %v509
                %v511 = vld [vmem:[%s501 + $0x20] sm:$0xff]
                %512 = vst [vmem:[%s502 + $0x20] sm:$0xff] %v511
                %v513 = vld [vmem:[%s501 + $0x28] sm:$0xff]
                %514 = vst [vmem:[%s502 + $0x28] sm:$0xff] %v513
                %s515 = sadd.s32 1, %s500
                %p516 = scmp.ge.s32.totalorder %s515, %s492
                %s517 = scalar_select %p516, 0, %s515
                %s518 = smul.u32 %s517, 48
                %s519 = smul.u32 %s517, 48
                %s520 = scalar_lea.vmem %s472, %s518 [#allocation2]
                %s521 = scalar_lea.vmem %s483, %s519
              $region61: #{basic_block_forward.7} parent=55 // loop_footer
                %s497 = sadd.s32 %s495, 1
              $region62: #{basic_block_forward.7} parent=55 // loop_footer_branch
                %494 = sbr.rel target = $region58
              $region63: #{basic_block_forward.7} parent=55 // loop_exit
                _
              %s522 = sdiv.u32.pop %s479, 6
              %s523 = srem.u32.pop %s479, 6
              %s524 = smul.u32 %s522, 6
              %s525 = smul.u32 8, %s524
              %s526 = scalar_lea.vmem %s472, %s525 [#allocation2]
              %s527 = smul.u32 8, %s524
              %s528 = scalar_lea.vmem %s483, %s527
              // While loop
              $region64: #{basic_block_forward.7} parent=55 // loop_pre_header
                _
              $region65: #{basic_block_forward.7} parent=55 // loop_header
                %s530 = sphi 0, %s532
                %p531 = scmp.ge.s32.totalorder %s530, %s523
                %s535 = sphi 0, %s542
                %s536 = sphi %s526, %s545
                %s537 = sphi %s528, %s546
              $region66: #{basic_block_forward.7} parent=55 // loop_header_branch
                %534 = sbr.rel (%p531) target = $region70
              $region67: #{basic_block_forward.7} parent=55 // loop_body
                %v538 = vld [vmem:[%s536] sm:$0xff]
                %539 = vst [vmem:[%s537] sm:$0xff] %v538
                %s540 = sadd.s32 1, %s535
                %p541 = scmp.ge.s32.totalorder %s540, %s523
                %s542 = scalar_select %p541, 0, %s540
                %s543 = smul.u32 %s542, 8
                %s544 = smul.u32 %s542, 8
                %s545 = scalar_lea.vmem %s526, %s543 [#allocation2]
                %s546 = scalar_lea.vmem %s528, %s544
              $region68: #{basic_block_forward.7} parent=55 // loop_footer
                %s532 = sadd.s32 %s530, 1
              $region69: #{basic_block_forward.7} parent=55 // loop_footer_branch
                %529 = sbr.rel target = $region65
              $region70: #{basic_block_forward.7} parent=55 // loop_exit
                _
            $region56: #{basic_block_forward.7} parent=47 // pred_fallthru
              _
          $region48: #{basic_block_forward.7} parent=43 // pred_fallthru
            _
          %606 = vnop
        $region44: #{basic_block_forward.7} parent=39 // pred_fallthru
          _
      $region40: #{basic_block_forward.7} parent=5 // pred_fallthru
        _
      %p607 = scmp.le.s32.totalorder 2, %s11
      // Predicated region
      $region93: #{basic_block_forward.7} parent=5 // pred_check
        %p608 = pneg %p607
      $region94: #{basic_block_forward.7} parent=5 // pred_check_branch
        %610 = sbr.rel (%p608) target = $region96
      $region95: #{basic_block_forward.7} parent=5 // pred_region
        %s611 = ssub.s32 %s11, 2
        // Predicated region
        $region97: #{basic_block_forward.7} parent=95 // pred_check
          %p612 = pneg %p155
        $region98: #{basic_block_forward.7} parent=95 // pred_check_branch
          %614 = sbr.rel (%p612) target = $region100
        $region99: #{basic_block_forward.7} parent=95 // pred_region
          %s615 = sand.u32 %s140, 1
          %s616 = sand.u32 %s140, 1
          %s617 = smul.addr %s616, 48
          %s618 = scalar_lea.vmem [#allocation2], %s617
        $region100: #{basic_block_forward.7} parent=95 // pred_fallthru
          _
      $region96: #{basic_block_forward.7} parent=5 // pred_fallthru
        _
    $region6: #{basic_block_forward.7} parent=1 // loop_footer
      %s15 = sadd.s32 1, %s11
    $region7: #{basic_block_forward.7} parent=1 // loop_footer_branch
      %10 = sbr.rel target = $region3
    $region8: #{basic_block_forward.7} parent=1 // loop_exit
      _

// kernel: basic_block_forward.6
$region0: #{basic_block_forward.6}
  #allocation0 [shape = 'u32[]', space=smem, size = 0x4, offset = 0x4, fixed_abs, tag = 'smem constant byte address 0x4 - core index']
  #allocation1 [shape = 'u32[144,128]{1,0:T(1,128)}', space=vmem, size = 0x12000, scoped, tag = 'internal scratch']
  %s0 = inlined_call_operand.vmem [shape: bf16[2,102,128], index: 0, kind: input, shape index: {}]
  %s1 = inlined_call_operand.vmem [shape: bf16[1152,128], index: 1, kind: input, shape index: {}]
  %s2 = inlined_call_operand.vmem [shape: f32[80,1], index: 2, kind: input, shape index: {}]
  %s3 = inlined_call_operand.vmem [shape: bf16[2,80,128], index: 3, kind: output, shape index: {0}]
  %s4 = inlined_call_operand.vmem [shape: f32[16,128], index: 4, kind: output, shape index: {1}]
  %5 = xla_tuple %s3, %s4
  %s6 = sld [smem:[#allocation0]]
  $region53: #{basic_block_forward.6} parent=0
    _
  %s8 = ssub.s32 1, %s6
  %s9 = scalar_select 0, %s8, %s6
  loop: start=0, step=1, limit=4
  $region2: #{basic_block_forward.6} parent=0 // loop_pre_header
    _
  $region3: #{basic_block_forward.6} parent=0 // loop_header
    %s11 = sphi 0, %s15
    %p12 = scmp.ge.s32.totalorder %s11, 4
    %s21 = sphi 0, %s23
    %s24 = sphi 0, %s21
    %s25 = sphi 0, %s24
    %s41 = sphi 0, %s25
    %s45 = sphi 0, %s45
    %s47 = sphi 0, %s45
    %s48 = sphi 0, %s47
    %s62 = sphi 0, %s48
    %s66 = sphi 0, %s66
    %s68 = sphi 0, %s66
    %s69 = sphi 0, %s68
    %s83 = sphi 0, %s69
    %s89 = sphi 0, %s91
    %s92 = sphi 0, %s89
    %s93 = sphi 0, %s92
    %s109 = sphi 0, %s93
    %s115 = sphi 0, %s117
    %s118 = sphi 0, %s115
    %s119 = sphi 0, %s118
    %s135 = sphi 0, %s119
  $region4: #{basic_block_forward.6} parent=0 // loop_header_branch
    %14 = sbr.rel (%p12) target = $region8
  $region5: #{basic_block_forward.6} parent=0 // loop_body
    %s16 = ssub.s32 %s11, 1
    %s17 = ssub.s32 %s11, 2
    %s18 = sadd.s32 %s11, 1
    %s19 = ssub.s32 %s11, %s18
    %p20 = scmp.eq.s32.totalorder %s19, 0
    %s22 = sadd.s32 %s21, 1
    %s23 = scalar_select %p20, %s21, %s22
    %p26 = pneg %p20
    %p27 = scmp.eq.s32.totalorder %s11, 1
    %p28 = por %p26, %p27
    %p29 = scmp.ne.s32.totalorder %s21, %s24
    %p30 = scmp.eq.s32.totalorder %s11, 0
    %p31 = por %p29, %p30
    %p32 = scmp.ne.s32.totalorder %s21, %s24
    %p33 = scmp.eq.s32.totalorder %s16, 1
    %p34 = por %p32, %p33
    %p35 = scmp.ne.s32.totalorder %s24, %s25
    %p36 = scmp.eq.s32.totalorder %s16, 0
    %p37 = por %p35, %p36
    %p38 = scmp.ne.s32.totalorder %s24, %s25
    %p39 = scmp.eq.s32.totalorder %s17, 1
    %p40 = por %p38, %p39
    %p42 = scmp.ne.s32.totalorder %s25, %s41
    %p43 = scmp.eq.s32.totalorder %s17, 0
    %p44 = por %p42, %p43
    %s46 = sadd.s32 %s45, 1
    %p49 = scmp.eq.s32.totalorder %s11, 1
    %p50 = scmp.ne.s32.totalorder %s45, %s47
    %p51 = scmp.eq.s32.totalorder %s11, 0
    %p52 = por %p50, %p51
    %p53 = scmp.ne.s32.totalorder %s45, %s47
    %p54 = scmp.eq.s32.totalorder %s16, 1
    %p55 = por %p53, %p54
    %p56 = scmp.ne.s32.totalorder %s47, %s48
    %p57 = scmp.eq.s32.totalorder %s16, 0
    %p58 = por %p56, %p57
    %p59 = scmp.ne.s32.totalorder %s47, %s48
    %p60 = scmp.eq.s32.totalorder %s17, 1
    %p61 = por %p59, %p60
    %p63 = scmp.ne.s32.totalorder %s48, %s62
    %p64 = scmp.eq.s32.totalorder %s17, 0
    %p65 = por %p63, %p64
    %s67 = sadd.s32 %s66, 1
    %p70 = scmp.eq.s32.totalorder %s11, 1
    %p71 = scmp.ne.s32.totalorder %s66, %s68
    %p72 = scmp.eq.s32.totalorder %s11, 0
    %p73 = por %p71, %p72
    %p74 = scmp.ne.s32.totalorder %s66, %s68
    %p75 = scmp.eq.s32.totalorder %s16, 1
    %p76 = por %p74, %p75
    %p77 = scmp.ne.s32.totalorder %s68, %s69
    %p78 = scmp.eq.s32.totalorder %s16, 0
    %p79 = por %p77, %p78
    %p80 = scmp.ne.s32.totalorder %s68, %s69
    %p81 = scmp.eq.s32.totalorder %s17, 1
    %p82 = por %p80, %p81
    %p84 = scmp.ne.s32.totalorder %s69, %s83
    %p85 = scmp.eq.s32.totalorder %s17, 0
    %p86 = por %p84, %p85
    %s87 = ssub.s32 %s11, %s18
    %p88 = scmp.eq.s32.totalorder %s87, 0
    %s90 = sadd.s32 %s89, 1
    %s91 = scalar_select %p88, %s89, %s90
    %p94 = pneg %p88
    %p95 = scmp.eq.s32.totalorder %s11, 1
    %p96 = por %p94, %p95
    %p97 = scmp.ne.s32.totalorder %s89, %s92
    %p98 = scmp.eq.s32.totalorder %s11, 0
    %p99 = por %p97, %p98
    %p100 = scmp.ne.s32.totalorder %s89, %s92
    %p101 = scmp.eq.s32.totalorder %s16, 1
    %p102 = por %p100, %p101
    %p103 = scmp.ne.s32.totalorder %s92, %s93
    %p104 = scmp.eq.s32.totalorder %s16, 0
    %p105 = por %p103, %p104
    %p106 = scmp.ne.s32.totalorder %s92, %s93
    %p107 = scmp.eq.s32.totalorder %s17, 1
    %p108 = por %p106, %p107
    %p110 = scmp.ne.s32.totalorder %s93, %s109
    %p111 = scmp.eq.s32.totalorder %s17, 0
    %p112 = por %p110, %p111
    %s113 = ssub.s32 %s11, %s18
    %p114 = scmp.eq.s32.totalorder %s113, 0
    %s116 = sadd.s32 %s115, 1
    %s117 = scalar_select %p114, %s115, %s116
    %p120 = pneg %p114
    %p121 = scmp.eq.s32.totalorder %s11, 1
    %p122 = por %p120, %p121
    %p123 = scmp.ne.s32.totalorder %s115, %s118
    %p124 = scmp.eq.s32.totalorder %s11, 0
    %p125 = por %p123, %p124
    %p126 = scmp.ne.s32.totalorder %s115, %s118
    %p127 = scmp.eq.s32.totalorder %s16, 1
    %p128 = por %p126, %p127
    %p129 = scmp.ne.s32.totalorder %s118, %s119
    %p130 = scmp.eq.s32.totalorder %s16, 0
    %p131 = por %p129, %p130
    %p132 = scmp.ne.s32.totalorder %s118, %s119
    %p133 = scmp.eq.s32.totalorder %s17, 1
    %p134 = por %p132, %p133
    %p136 = scmp.ne.s32.totalorder %s119, %s135
    %p137 = scmp.eq.s32.totalorder %s17, 0
    %p138 = por %p136, %p137
    %p139 = scmp.le.s32.totalorder 1, %s11
    %p140 = scmp.lt.s32.totalorder %s11, 3
    %p141 = pnand %p139, %p140
    %p142 = pneg %p141
    // Predicated region
    $region9: #{basic_block_forward.6} parent=5 // pred_check
      _
    $region10: #{basic_block_forward.6} parent=5 // pred_check_branch
      %144 = sbr.rel (%p141) target = $region12
    $region11: #{basic_block_forward.6} parent=5 // pred_region
      %s145 = ssub.s32 %s11, 1
      // Predicated region
      $region13: #{basic_block_forward.6} parent=11 // pred_check
        %p146 = pneg %p58
      $region14: #{basic_block_forward.6} parent=11 // pred_check_branch
        %148 = sbr.rel (%p146) target = $region16
      $region15: #{basic_block_forward.6} parent=11 // pred_region
        _
      $region16: #{basic_block_forward.6} parent=11 // pred_fallthru
        _
      // Predicated region
      $region17: #{basic_block_forward.6} parent=11 // pred_check
        %p149 = pneg %p79
      $region18: #{basic_block_forward.6} parent=11 // pred_check_branch
        %151 = sbr.rel (%p149) target = $region20
      $region19: #{basic_block_forward.6} parent=11 // pred_region
        _
      $region20: #{basic_block_forward.6} parent=11 // pred_fallthru
        _
    $region12: #{basic_block_forward.6} parent=5 // pred_fallthru
      _
    %p152 = scmp.lt.s32.totalorder %s11, 2
    // Predicated region
    $region21: #{basic_block_forward.6} parent=5 // pred_check
      %p153 = pneg %p152
    $region22: #{basic_block_forward.6} parent=5 // pred_check_branch
      %155 = sbr.rel (%p153) target = $region24
    $region23: #{basic_block_forward.6} parent=5 // pred_region
      // Predicated region
      $region25: #{basic_block_forward.6} parent=23 // pred_check
        %p156 = pneg %p31
      $region26: #{basic_block_forward.6} parent=23 // pred_check_branch
        %158 = sbr.rel (%p156) target = $region28
      $region27: #{basic_block_forward.6} parent=23 // pred_region
        %p159 = scmp.lt.s32.totalorder %s11, 1
        %s160 = scalar_select %p159, %s11, 1
        %s161 = smul.addr %s160, 13
        %s162 = smul.addr %s161, 4
        %s163 = scalar_lea.vmem %s0, %s162
      $region28: #{basic_block_forward.6} parent=23 // pred_fallthru
        _
    $region24: #{basic_block_forward.6} parent=5 // pred_fallthru
      _
    %p164 = scmp.le.s32.totalorder 1, %s11
    %p165 = scmp.lt.s32.totalorder %s11, 3
    %p166 = pnand %p164, %p165
    %p167 = pneg %p166
    // Predicated region
    $region29: #{basic_block_forward.6} parent=5 // pred_check
      _
    $region30: #{basic_block_forward.6} parent=5 // pred_check_branch
      %169 = sbr.rel (%p166) target = $region32
    $region31: #{basic_block_forward.6} parent=5 // pred_region
      %s170 = ssub.s32 %s11, 1
      %p171 = scmp.lt.s32.totalorder %s16, 1
      %s172 = scalar_select %p171, %s16, 1
      %s173 = smul.addr %s172, 13
      %s174 = smul.addr %s173, 4
      %s175 = scalar_lea.vmem %s0, %s174
      %p176 = pneg %p37
      %p177 = pneg %p34
      %p178 = pneg %p58
      %p179 = pneg %p55
      %p180 = pneg %p79
      %p181 = pneg %p76
      %p182 = pneg %p105
      %p183 = pneg %p102
      %p184 = scmp.lt.s32.totalorder %s16, 1
      %s185 = scalar_select %p184, %s16, 1
      %s186 = smul.addr %s185, 10
      %s187 = smul.addr %s186, 4
      %s188 = scalar_lea.vmem %s3, %s187
      %p189 = pneg %p131
      %p190 = pneg %p128
      %p191 = scmp.lt.s32.totalorder %s16, 1
      %s192 = scalar_select %p191, %s16, 1
      %s193 = smul.addr %s192, 8
      %s194 = scalar_lea.vmem %s4, %s193
      %p195 = scmp.lt.s32.totalorder %s16, 1
      %s196 = scalar_select %p195, %s16, 1
      %s197 = smul.addr %s196, 13
      %s198 = smul.addr %s197, 4
      %s199 = scalar_lea.vmem %s0, %s198
      %p200 = scmp.lt.s32.totalorder %s16, 1
      %s201 = scalar_select %p200, %s16, 1
      %s202 = smul.addr %s201, 10
      %s203 = smul.addr %s202, 4
      %s204 = scalar_lea.vmem %s3, %s203
      %p205 = scmp.lt.s32.totalorder %s16, 1
      %s206 = scalar_select %p205, %s16, 1
      %s207 = smul.addr %s206, 8
      %s208 = scalar_lea.vmem %s4, %s207
      %v210 = vld [vmem:[%s199] sm:$0xf]
      %v211 = vld [vmem:[%s199 + $0x4] sm:$0xf]
      %v212 = vld [vmem:[%s199 + $0x8] sm:$0xf]
      %v213 = vld [vmem:[%s199 + $0xc] sm:$0xf]
      %v214 = vld [vmem:[%s199 + $0x10] sm:$0xf]
      %v215 = vld [vmem:[%s199 + $0x14] sm:$0xf]
      %v216 = vld [vmem:[%s199 + $0x18] sm:$0xf]
      %v217 = vld [vmem:[%s199 + $0x1c] sm:$0xf]
      %v218 = vld [vmem:[%s199 + $0x20] sm:$0xf]
      %v219 = vld [vmem:[%s199 + $0x24] sm:$0xf]
      %v220 = vld [vmem:[%s1] sm:$0xf]
      %v221 = vld [vmem:[%s1 + $0x4] sm:$0xf]
      %v222 = vld [vmem:[%s1 + $0x8] sm:$0xf]
      %v223 = vld [vmem:[%s1 + $0xc] sm:$0xf]
      %v224 = vld [vmem:[%s1 + $0x10] sm:$0xf]
      %v225 = vld [vmem:[%s1 + $0x14] sm:$0xf]
      %v226 = vld [vmem:[%s1 + $0x18] sm:$0xf]
      %v227 = vld [vmem:[%s1 + $0x1c] sm:$0xf]
      %v228 = vld [vmem:[%s1 + $0x20] sm:$0xf]
      %v229 = vld [vmem:[%s1 + $0x24] sm:$0xf]
      %v230 = vld [vmem:[%s1 + $0x28] sm:$0xf]
      %v231 = vld [vmem:[%s1 + $0x2c] sm:$0xf]
      %v232 = vld [vmem:[%s1 + $0x30] sm:$0xf]
      %v233 = vld [vmem:[%s1 + $0x34] sm:$0xf]
      %v234 = vld [vmem:[%s1 + $0x38] sm:$0xf]
      %v235 = vld [vmem:[%s1 + $0x3c] sm:$0xf]
      %v236 = vld [vmem:[%s199 + $0x28] sm:$0x1]
      %v237 = vld [vmem:[%s1 + $0x40] sm:$0xf]
      %v238 = vld [vmem:[%s1 + $0x44] sm:$0xf]
      %v239 = vld [vmem:[%s1 + $0x48] sm:$0xf]
      %v240 = vld [vmem:[%s1 + $0x4c] sm:$0xf]
      %v241 = vld [vmem:[%s1 + $0x50] sm:$0xf]
      %v242 = vld [vmem:[%s1 + $0x54] sm:$0xf]
      %v243 = vld [vmem:[%s1 + $0x58] sm:$0xf]
      %v244 = vld [vmem:[%s1 + $0x5c] sm:$0xf]
      %v245 = vld [vmem:[%s1 + $0x60] sm:$0xf]
      %v246 = vld [vmem:[%s1 + $0x64] sm:$0xf]
      %v247 = vld [vmem:[%s1 + $0x68] sm:$0xf]
      %v248 = vld [vmem:[%s1 + $0x6c] sm:$0xf]
      %v249 = vld [vmem:[%s1 + $0x70] sm:$0xf]
      %v250 = vld [vmem:[%s1 + $0x74] sm:$0xf]
      %v251 = vld [vmem:[%s1 + $0x78] sm:$0xf]
      %v252 = vld [vmem:[%s1 + $0x7c] sm:$0xf]
      %v264 = vunpack.c.l.b16 %v210
      %v265 = vunpack.c.l.b16 %v211
      %v266 = vunpack.c.l.b16 %v212
      %v267 = vunpack.c.l.b16 %v213
      %v268 = vunpack.c.l.b16 %v214
      %v269 = vunpack.c.l.b16 %v215
      %v270 = vunpack.c.l.b16 %v216
      %v271 = vunpack.c.l.b16 %v217
      %v272 = vunpack.c.l.b16 %v218
      %v273 = vunpack.c.l.b16 %v219
      %v274 = vunpack.c.l.b16 %v236
      %v275 = vpack.c.b16 %v265, %v264
      %v276 = vpack.c.b16 %v267, %v266
      %v277 = vpack.c.b16 %v269, %v268
      %v278 = vpack.c.b16 %v271, %v270
      %v279 = vpack.c.b16 %v273, %v272
      %v280 = vpack.c.b16 %v274, %v274
      %vm281 = vsmask.f32 7424
      %v283 = vshrl.u32 %v275, 16
      %v285 = vshll.u32 %v275, 16
      %v287 = vrot.slane %v285, 1
      %v288 = vor.u32 %v283, %v287
      %v290 = vshll.u32 %v276, 16
      %v292 = vrot.slane %v290, 1
      %v293 = vsel %vm281, %v288, %v292
      %v294 = vshrl.u32 %v276, 16
      %v296 = vor.u32 %v294, %v292
      %v298 = vshll.u32 %v277, 16
      %v300 = vrot.slane %v298, 1
      %v301 = vsel %vm281, %v296, %v300
      %v302 = vshrl.u32 %v277, 16
      %v304 = vor.u32 %v302, %v300
      %v306 = vshll.u32 %v278, 16
      %v308 = vrot.slane %v306, 1
      %v309 = vsel %vm281, %v304, %v308
      %v310 = vshrl.u32 %v278, 16
      %v312 = vor.u32 %v310, %v308
      %v314 = vshll.u32 %v279, 16
      %v316 = vrot.slane %v314, 1
      %v317 = vsel %vm281, %v312, %v316
      %v318 = vshrl.u32 %v279, 16
      %v320 = vor.u32 %v318, %v316
      %v322 = vshll.u32 %v280, 16
      %v324 = vrot.slane %v322, 1
      %v325 = vsel %vm281, %v320, %v324
      %v347 = vunpack.c.l.b16 %v237
      %v348 = vunpack.c.l.b16 %v238
      %v349 = vunpack.c.l.b16 %v239
      %v350 = vunpack.c.l.b16 %v240
      %v351 = vunpack.c.l.b16 %v241
      %v352 = vunpack.c.l.b16 %v242
      %v353 = vunpack.c.l.b16 %v243
      %v354 = vunpack.c.l.b16 %v244
      %v355 = vunpack.c.l.b16 %v245
      %v356 = vunpack.c.l.b16 %v246
      %v357 = vunpack.c.l.b16 %v247
      %v358 = vunpack.c.l.b16 %v248
      %v359 = vunpack.c.l.b16 %v249
      %v360 = vunpack.c.l.b16 %v250
      %v361 = vunpack.c.l.b16 %v251
      %v362 = vunpack.c.l.b16 %v252
      %v363 = vpack.c.b16 %v348, %v347
      %v364 = vpack.c.b16 %v350, %v349
      %v365 = vpack.c.b16 %v352, %v351
      %v366 = vpack.c.b16 %v354, %v353
      %v367 = vpack.c.b16 %v356, %v355
      %v368 = vpack.c.b16 %v358, %v357
      %v369 = vpack.c.b16 %v360, %v359
      %v370 = vpack.c.b16 %v362, %v361
      %379 = vmatprep.subr.bf16.mxu0 0
      %380 = vmatpush1.bf16.msra.mxu0 %v363
      %381 = vmatprep.subr.bf16.mxu0 0
      %382 = vmatpush1.bf16.msra.mxu0 %v364
      %383 = vmatprep.subr.bf16.mxu0 0
      %384 = vmatpush1.bf16.msra.mxu0 %v365
      %385 = vmatprep.subr.bf16.mxu0 0
      %386 = vmatpush1.bf16.msra.mxu0 %v366
      %387 = vmatprep.subr.bf16.mxu0 0
      %388 = vmatpush1.bf16.msra.mxu0 %v367
      %389 = vmatprep.subr.bf16.mxu0 0
      %390 = vmatpush1.bf16.msra.mxu0 %v368
      %391 = vmatprep.subr.bf16.mxu0 0
      %392 = vmatpush1.bf16.msra.mxu0 %v369
      %393 = vmatprep.subr.bf16.mxu0 0
      %394 = vmatpush1.bf16.msra.mxu0 %v370
      %395 = vmatprep.subr.bf16.mxu0 0
      %396 = vmatpush1.bf16.msra.mxu0 0
      %397 = vmatprep.subr.bf16.mxu0 0
      %398 = vmatpush1.bf16.msra.mxu0 0
      %399 = vmatprep.subr.bf16.mxu0 0
      %400 = vmatpush1.bf16.msra.mxu0 0
      %401 = vmatprep.subr.bf16.mxu0 0
      %402 = vmatpush1.bf16.msra.mxu0 0
      %403 = vmatprep.subr.bf16.mxu0 0
      %404 = vmatpush1.bf16.msra.mxu0 0
      %405 = vmatprep.subr.bf16.mxu0 0
      %406 = vmatpush1.bf16.msra.mxu0 0
      %407 = vmatprep.subr.bf16.mxu0 0
      %408 = vmatpush1.bf16.msra.mxu0 0
      %409 = vmatprep.subr.bf16.mxu0 0
      %410 = vmatpush1.bf16.msra.mxu0 0
      %411 = vmatprep.mubr.bf16.mxu0 0
      %412 = vmatmul.mubr.bf16.gmra.mrb[0].mxu0 %v293
      %v413 = vpop.f32.mrb[0].mxu0
      %v414 = vadd.f32 0.0, %v413
      %v415 = vpop.f32.mrb[0].mxu0
      %v416 = vpop.f32.mrb[0].mxu0
      %v417 = vadd.f32 0.0, %v416
      %v418 = vpop.f32.mrb[0].mxu0
      %419 = vmatprep.mubr.bf16.mxu0 0
      %420 = vmatmul.mubr.bf16.gmra.mrb[0].mxu0 %v301
      %v421 = vpop.f32.mrb[0].mxu0
      %v422 = vadd.f32 0.0, %v421
      %v423 = vpop.f32.mrb[0].mxu0
      %v424 = vpop.f32.mrb[0].mxu0
      %v425 = vadd.f32 0.0, %v424
      %v426 = vpop.f32.mrb[0].mxu0
      %427 = vmatprep.mubr.bf16.mxu0 0
      %428 = vmatmul.mubr.bf16.gmra.mrb[0].mxu0 %v309
      %v429 = vpop.f32.mrb[0].mxu0
      %v430 = vadd.f32 0.0, %v429
      %v431 = vpop.f32.mrb[0].mxu0
      %v432 = vpop.f32.mrb[0].mxu0
      %v433 = vadd.f32 0.0, %v432
      %v434 = vpop.f32.mrb[0].mxu0
      %435 = vmatprep.mubr.bf16.mxu0 0
      %436 = vmatmul.mubr.bf16.gmra.mrb[0].mxu0 %v317
      %v437 = vpop.f32.mrb[0].mxu0
      %v438 = vadd.f32 0.0, %v437
      %v439 = vpop.f32.mrb[0].mxu0
      %v440 = vpop.f32.mrb[0].mxu0
      %v441 = vadd.f32 0.0, %v440
      %v442 = vpop.f32.mrb[0].mxu0
      %443 = vmatprep.mubr.bf16.mxu0 0
      %444 = vmatmul.mubr.bf16.gmra.mrb[0].mxu0 %v325
      %v445 = vpop.f32.mrb[0].mxu0
      %v446 = vadd.f32 0.0, %v445
      %v447 = vpop.f32.mrb[0].mxu0
      %v448 = vpop.f32.mrb[0].mxu0
      %v449 = vadd.f32 0.0, %v448
      %v450 = vpop.f32.mrb[0].mxu0
      %451 = vdwg.mxu0
      %v473 = vunpack.c.l.b16 %v220
      %v474 = vunpack.c.l.b16 %v221
      %v475 = vunpack.c.l.b16 %v222
      %v476 = vunpack.c.l.b16 %v223
      %v477 = vunpack.c.l.b16 %v224
      %v478 = vunpack.c.l.b16 %v225
      %v479 = vunpack.c.l.b16 %v226
      %v480 = vunpack.c.l.b16 %v227
      %v481 = vunpack.c.l.b16 %v228
      %v482 = vunpack.c.l.b16 %v229
      %v483 = vunpack.c.l.b16 %v230
      %v484 = vunpack.c.l.b16 %v231
      %v485 = vunpack.c.l.b16 %v232
      %v486 = vunpack.c.l.b16 %v233
      %v487 = vunpack.c.l.b16 %v234
      %v488 = vunpack.c.l.b16 %v235
      %v489 = vpack.c.b16 %v474, %v473
      %v490 = vpack.c.b16 %v476, %v475
      %v491 = vpack.c.b16 %v478, %v477
      %v492 = vpack.c.b16 %v480, %v479
      %v493 = vpack.c.b16 %v482, %v481
      %v494 = vpack.c.b16 %v484, %v483
      %v495 = vpack.c.b16 %v486, %v485
      %v496 = vpack.c.b16 %v488, %v487
      %505 = vmatprep.subr.bf16.mxu0 0
      %506 = vmatpush1.bf16.msra.mxu0 %v489
      %507 = vmatprep.subr.bf16.mxu0 0
      %508 = vmatpush1.bf16.msra.mxu0 %v490
      %509 = vmatprep.subr.bf16.mxu0 0
      %510 = vmatpush1.bf16.msra.mxu0 %v491
      %511 = vmatprep.subr.bf16.mxu0 0
      %512 = vmatpush1.bf16.msra.mxu0 %v492
      %513 = vmatprep.subr.bf16.mxu0 0
      %514 = vmatpush1.bf16.msra.mxu0 %v493
      %515 = vmatprep.subr.bf16.mxu0 0
      %516 = vmatpush1.bf16.msra.mxu0 %v494
      %517 = vmatprep.subr.bf16.mxu0 0
      %518 = vmatpush1.bf16.msra.mxu0 %v495
      %519 = vmatprep.subr.bf16.mxu0 0
      %520 = vmatpush1.bf16.msra.mxu0 %v496
      %521 = vmatprep.subr.bf16.mxu0 0
      %522 = vmatpush1.bf16.msra.mxu0 0
      %523 = vmatprep.subr.bf16.mxu0 0
      %524 = vmatpush1.bf16.msra.mxu0 0
      %525 = vmatprep.subr.bf16.mxu0 0
      %526 = vmatpush1.bf16.msra.mxu0 0
      %527 = vmatprep.subr.bf16.mxu0 0
      %528 = vmatpush1.bf16.msra.mxu0 0
      %529 = vmatprep.subr.bf16.mxu0 0
      %530 = vmatpush1.bf16.msra.mxu0 0
      %531 = vmatprep.subr.bf16.mxu0 0
      %532 = vmatpush1.bf16.msra.mxu0 0
      %533 = vmatprep.subr.bf16.mxu0 0
      %534 = vmatpush1.bf16.msra.mxu0 0
      %535 = vmatprep.subr.bf16.mxu0 0
      %536 = vmatpush1.bf16.msra.mxu0 0
      %537 = vmatprep.mubr.bf16.mxu0 0
      %538 = vmatmul.mubr.bf16.gmra.mrb[0].mxu0 %v275
      %v539 = vpop.f32.mrb[0].mxu0
      %v540 = vadd.f32 %v414, %v539
      %v541 = vpop.f32.mrb[0].mxu0
      %v542 = vpop.f32.mrb[0].mxu0
      %v543 = vadd.f32 %v417, %v542
      %v544 = vpop.f32.mrb[0].mxu0
      %545 = vmatprep.mubr.bf16.mxu0 0
      %546 = vmatmul.mubr.bf16.gmra.mrb[0].mxu0 %v276
      %v547 = vpop.f32.mrb[0].mxu0
      %v548 = vadd.f32 %v422, %v547
      %v549 = vpop.f32.mrb[0].mxu0
      %v550 = vpop.f32.mrb[0].mxu0
      %v551 = vadd.f32 %v425, %v550
      %v552 = vpop.f32.mrb[0].mxu0
      %553 = vmatprep.mubr.bf16.mxu0 0
      %554 = vmatmul.mubr.bf16.gmra.mrb[0].mxu0 %v277
      %v555 = vpop.f32.mrb[0].mxu0
      %v556 = vadd.f32 %v430, %v555
      %v557 = vpop.f32.mrb[0].mxu0
      %v558 = vpop.f32.mrb[0].mxu0
      %v559 = vadd.f32 %v433, %v558
      %v560 = vpop.f32.mrb[0].mxu0
      %561 = vmatprep.mubr.bf16.mxu0 0
      %562 = vmatmul.mubr.bf16.gmra.mrb[0].mxu0 %v278
      %v563 = vpop.f32.mrb[0].mxu0
      %v564 = vadd.f32 %v438, %v563
      %v565 = vpop.f32.mrb[0].mxu0
      %v566 = vpop.f32.mrb[0].mxu0
      %v567 = vadd.f32 %v441, %v566
      %v568 = vpop.f32.mrb[0].mxu0
      %569 = vmatprep.mubr.bf16.mxu0 0
      %570 = vmatmul.mubr.bf16.gmra.mrb[0].mxu0 %v279
      %v571 = vpop.f32.mrb[0].mxu0
      %v572 = vadd.f32 %v446, %v571
      %v573 = vpop.f32.mrb[0].mxu0
      %v574 = vpop.f32.mrb[0].mxu0
      %v575 = vadd.f32 %v449, %v574
      %v576 = vpop.f32.mrb[0].mxu0
      %577 = vdwg.mxu0
      %v578 = vld [vmem:[%s199] sm:$0xe]
      %v579 = vld [vmem:[%s1 + $0x80] sm:$0xf]
      %v580 = vld [vmem:[%s1 + $0x84] sm:$0xf]
      %v581 = vld [vmem:[%s1 + $0x88] sm:$0xf]
      %v582 = vld [vmem:[%s1 + $0x8c] sm:$0xf]
      %v583 = vld [vmem:[%s1 + $0x90] sm:$0xf]
      %v584 = vld [vmem:[%s1 + $0x94] sm:$0xf]
      %v585 = vld [vmem:[%s1 + $0x98] sm:$0xf]
      %v586 = vld [vmem:[%s1 + $0x9c] sm:$0xf]
      %v587 = vld [vmem:[%s1 + $0xa0] sm:$0xf]
      %v588 = vld [vmem:[%s1 + $0xa4] sm:$0xf]
      %v589 = vld [vmem:[%s1 + $0xa8] sm:$0xf]
      %v590 = vld [vmem:[%s1 + $0xac] sm:$0xf]
      %v591 = vld [vmem:[%s1 + $0xb0] sm:$0xf]
      %v592 = vld [vmem:[%s1 + $0xb4] sm:$0xf]
      %v593 = vld [vmem:[%s1 + $0xb8] sm:$0xf]
      %v594 = vld [vmem:[%s1 + $0xbc] sm:$0xf]
      %v596 = vunpack.c.l.b16 %v578
      %v597 = vpack.c.b16 %v265, %v596
      %vm598 = vcmask 1046528
      %v599 = vrot.slane %v597, 1
      %v600 = vrot.slane %v276, 1
      %v601 = vsel %vm598, %v599, %v600
      %v602 = vrot.slane %v277, 1
      %v603 = vsel %vm598, %v600, %v602
      %v604 = vrot.slane %v278, 1
      %v605 = vsel %vm598, %v602, %v604
      %v606 = vrot.slane %v279, 1
      %v607 = vsel %vm598, %v604, %v606
      %v608 = vrot.slane %v280, 1
      %v609 = vsel %vm598, %v606, %v608
      %v631 = vunpack.c.l.b16 %v579
      %v632 = vunpack.c.l.b16 %v580
      %v633 = vunpack.c.l.b16 %v581
      %v634 = vunpack.c.l.b16 %v582
      %v635 = vunpack.c.l.b16 %v583
      %v636 = vunpack.c.l.b16 %v584
      %v637 = vunpack.c.l.b16 %v585
      %v638 = vunpack.c.l.b16 %v586
      %v639 = vunpack.c.l.b16 %v587
      %v640 = vunpack.c.l.b16 %v588
      %v641 = vunpack.c.l.b16 %v589
      %v642 = vunpack.c.l.b16 %v590
      %v643 = vunpack.c.l.b16 %v591
      %v644 = vunpack.c.l.b16 %v592
      %v645 = vunpack.c.l.b16 %v593
      %v646 = vunpack.c.l.b16 %v594
      %v647 = vpack.c.b16 %v632, %v631
      %v648 = vpack.c.b16 %v634, %v633
      %v649 = vpack.c.b16 %v636, %v635
      %v650 = vpack.c.b16 %v638, %v637
      %v651 = vpack.c.b16 %v640, %v639
      %v652 = vpack.c.b16 %v642, %v641
      %v653 = vpack.c.b16 %v644, %v643
      %v654 = vpack.c.b16 %v646, %v645
      %663 = vmatprep.subr.bf16.mxu0 0
      %664 = vmatpush1.bf16.msra.mxu0 %v647
      %665 = vmatprep.subr.bf16.mxu0 0
      %666 = vmatpush1.bf16.msra.mxu0 %v648
      %667 = vmatprep.subr.bf16.mxu0 0
      %668 = vmatpush1.bf16.msra.mxu0 %v649
      %669 = vmatprep.subr.bf16.mxu0 0
      %670 = vmatpush1.bf16.msra.mxu0 %v650
      %671 = vmatprep.subr.bf16.mxu0 0
      %672 = vmatpush1.bf16.msra.mxu0 %v651
      %673 = vmatprep.subr.bf16.mxu0 0
      %674 = vmatpush1.bf16.msra.mxu0 %v652
      %675 = vmatprep.subr.bf16.mxu0 0
      %676 = vmatpush1.bf16.msra.mxu0 %v653
      %677 = vmatprep.subr.bf16.mxu0 0
      %678 = vmatpush1.bf16.msra.mxu0 %v654
      %679 = vmatprep.subr.bf16.mxu0 0
      %680 = vmatpush1.bf16.msra.mxu0 0
      %681 = vmatprep.subr.bf16.mxu0 0
      %682 = vmatpush1.bf16.msra.mxu0 0
      %683 = vmatprep.subr.bf16.mxu0 0
      %684 = vmatpush1.bf16.msra.mxu0 0
      %685 = vmatprep.subr.bf16.mxu0 0
      %686 = vmatpush1.bf16.msra.mxu0 0
      %687 = vmatprep.subr.bf16.mxu0 0
      %688 = vmatpush1.bf16.msra.mxu0 0
      %689 = vmatprep.subr.bf16.mxu0 0
      %690 = vmatpush1.bf16.msra.mxu0 0
      %691 = vmatprep.subr.bf16.mxu0 0
      %692 = vmatpush1.bf16.msra.mxu0 0
      %693 = vmatprep.subr.bf16.mxu0 0
      %694 = vmatpush1.bf16.msra.mxu0 0
      %695 = vmatprep.mubr.bf16.mxu0 0
      %696 = vmatmul.mubr.bf16.gmra.mrb[0].mxu0 %v601
      %v697 = vpop.f32.mrb[0].mxu0
      %v698 = vadd.f32 0.0, %v697
      %v699 = vpop.f32.mrb[0].mxu0
      %v700 = vpop.f32.mrb[0].mxu0
      %v701 = vadd.f32 0.0, %v700
      %v702 = vpop.f32.mrb[0].mxu0
      %703 = vmatprep.mubr.bf16.mxu0 0
      %704 = vmatmul.mubr.bf16.gmra.mrb[0].mxu0 %v603
      %v705 = vpop.f32.mrb[0].mxu0
      %v706 = vadd.f32 0.0, %v705
      %v707 = vpop.f32.mrb[0].mxu0
      %v708 = vpop.f32.mrb[0].mxu0
      %v709 = vadd.f32 0.0, %v708
      %v710 = vpop.f32.mrb[0].mxu0
      %711 = vmatprep.mubr.bf16.mxu0 0
      %712 = vmatmul.mubr.bf16.gmra.mrb[0].mxu0 %v605
      %v713 = vpop.f32.mrb[0].mxu0
      %v714 = vadd.f32 0.0, %v713
      %v715 = vpop.f32.mrb[0].mxu0
      %v716 = vpop.f32.mrb[0].mxu0
      %v717 = vadd.f32 0.0, %v716
      %v718 = vpop.f32.mrb[0].mxu0
      %719 = vmatprep.mubr.bf16.mxu0 0
      %720 = vmatmul.mubr.bf16.gmra.mrb[0].mxu0 %v607
      %v721 = vpop.f32.mrb[0].mxu0
      %v722 = vadd.f32 0.0, %v721
      %v723 = vpop.f32.mrb[0].mxu0
      %v724 = vpop.f32.mrb[0].mxu0
      %v725 = vadd.f32 0.0, %v724
      %v726 = vpop.f32.mrb[0].mxu0
      %727 = vmatprep.mubr.bf16.mxu0 0
      %728 = vmatmul.mubr.bf16.gmra.mrb[0].mxu0 %v609
      %v729 = vpop.f32.mrb[0].mxu0
      %v730 = vadd.f32 0.0, %v729
      %v731 = vpop.f32.mrb[0].mxu0
      %v732 = vpop.f32.mrb[0].mxu0
      %v733 = vadd.f32 0.0, %v732
      %v734 = vpop.f32.mrb[0].mxu0
      %735 = vdwg.mxu0
      %v736 = vadd.f32 %v540, %v698
      %v737 = vadd.f32 %v543, %v701
      %v738 = vadd.f32 %v548, %v706
      %v739 = vadd.f32 %v551, %v709
      %v740 = vadd.f32 %v556, %v714
      %v741 = vadd.f32 %v559, %v717
      %v742 = vadd.f32 %v564, %v722
      %v743 = vadd.f32 %v567, %v725
      %v744 = vadd.f32 %v572, %v730
      %v745 = vadd.f32 %v575, %v733
      %v746 = vld [vmem:[%s199 + $0x4] sm:$0xe]
      %v747 = vld [vmem:[%s199 + $0x8] sm:$0xf]
      %v748 = vld [vmem:[%s199 + $0xc] sm:$0xf]
      %v749 = vld [vmem:[%s199 + $0x10] sm:$0xf]
      %v750 = vld [vmem:[%s199 + $0x14] sm:$0xf]
      %v751 = vld [vmem:[%s199 + $0x18] sm:$0xf]
      %v752 = vld [vmem:[%s199 + $0x1c] sm:$0xf]
      %v753 = vld [vmem:[%s199 + $0x20] sm:$0xf]
      %v754 = vld [vmem:[%s199 + $0x24] sm:$0xf]
      %v755 = vld [vmem:[%s199 + $0x28] sm:$0xf]
      %v756 = vld [vmem:[%s199 + $0x2c] sm:$0x1]
      %v757 = vld [vmem:[%s1 + $0xc0] sm:$0xf]
      %v758 = vld [vmem:[%s1 + $0xc4] sm:$0xf]
      %v759 = vld [vmem:[%s1 + $0xc8] sm:$0xf]
      %v760 = vld [vmem:[%s1 + $0xcc] sm:$0xf]
      %v761 = vld [vmem:[%s1 + $0xd0] sm:$0xf]
      %v762 = vld [vmem:[%s1 + $0xd4] sm:$0xf]
      %v763 = vld [vmem:[%s1 + $0xd8] sm:$0xf]
      %v764 = vld [vmem:[%s1 + $0xdc] sm:$0xf]
      %v765 = vld [vmem:[%s1 + $0xe0] sm:$0xf]
      %v766 = vld [vmem:[%s1 + $0xe4] sm:$0xf]
      %v767 = vld [vmem:[%s1 + $0xe8] sm:$0xf]
      %v768 = vld [vmem:[%s1 + $0xec] sm:$0xf]
      %v769 = vld [vmem:[%s1 + $0xf0] sm:$0xf]
      %v770 = vld [vmem:[%s1 + $0xf4] sm:$0xf]
      %v771 = vld [vmem:[%s1 + $0xf8] sm:$0xf]
      %v772 = vld [vmem:[%s1 + $0xfc] sm:$0xf]
      %v784 = vunpack.c.l.b16 %v746
      %v785 = vunpack.c.l.b16 %v747
      %v786 = vunpack.c.l.b16 %v748
      %v787 = vunpack.c.l.b16 %v749
      %v788 = vunpack.c.l.b16 %v750
      %v789 = vunpack.c.l.b16 %v751
      %v790 = vunpack.c.l.b16 %v752
      %v791 = vunpack.c.l.b16 %v753
      %v792 = vunpack.c.l.b16 %v754
      %v793 = vunpack.c.l.b16 %v755
      %v794 = vunpack.c.l.b16 %v756
      %v795 = vpack.c.b16 %v785, %v784
      %v796 = vpack.c.b16 %v787, %v786
      %v797 = vpack.c.b16 %v789, %v788
      %v798 = vpack.c.b16 %v791, %v790
      %v799 = vpack.c.b16 %v793, %v792
      %v800 = vpack.c.b16 %v794, %v794
      %v801 = vrot.slane %v795, 1
      %v802 = vrot.slane %v796, 1
      %v803 = vsel %vm598, %v801, %v802
      %v804 = vrot.slane %v797, 1
      %v805 = vsel %vm598, %v802, %v804
      %v806 = vrot.slane %v798, 1
      %v807 = vsel %vm598, %v804, %v806
      %v808 = vrot.slane %v799, 1
      %v809 = vsel %vm598, %v806, %v808
      %v810 = vrot.slane %v800, 1
      %v811 = vsel %vm598, %v808, %v810
      %v833 = vunpack.c.l.b16 %v757
      %v834 = vunpack.c.l.b16 %v758
      %v835 = vunpack.c.l.b16 %v759
      %v836 = vunpack.c.l.b16 %v760
      %v837 = vunpack.c.l.b16 %v761
      %v838 = vunpack.c.l.b16 %v762
      %v839 = vunpack.c.l.b16 %v763
      %v840 = vunpack.c.l.b16 %v764
      %v841 = vunpack.c.l.b16 %v765
      %v842 = vunpack.c.l.b16 %v766
      %v843 = vunpack.c.l.b16 %v767
      %v844 = vunpack.c.l.b16 %v768
      %v845 = vunpack.c.l.b16 %v769
      %v846 = vunpack.c.l.b16 %v770
      %v847 = vunpack.c.l.b16 %v771
      %v848 = vunpack.c.l.b16 %v772
      %v849 = vpack.c.b16 %v834, %v833
      %v850 = vpack.c.b16 %v836, %v835
      %v851 = vpack.c.b16 %v838, %v837
      %v852 = vpack.c.b16 %v840, %v839
      %v853 = vpack.c.b16 %v842, %v841
      %v854 = vpack.c.b16 %v844, %v843
      %v855 = vpack.c.b16 %v846, %v845
      %v856 = vpack.c.b16 %v848, %v847
      %865 = vmatprep.subr.bf16.mxu0 0
      %866 = vmatpush1.bf16.msra.mxu0 %v849
      %867 = vmatprep.subr.bf16.mxu0 0
      %868 = vmatpush1.bf16.msra.mxu0 %v850
      %869 = vmatprep.subr.bf16.mxu0 0
      %870 = vmatpush1.bf16.msra.mxu0 %v851
      %871 = vmatprep.subr.bf16.mxu0 0
      %872 = vmatpush1.bf16.msra.mxu0 %v852
      %873 = vmatprep.subr.bf16.mxu0 0
      %874 = vmatpush1.bf16.msra.mxu0 %v853
      %875 = vmatprep.subr.bf16.mxu0 0
      %876 = vmatpush1.bf16.msra.mxu0 %v854
      %877 = vmatprep.subr.bf16.mxu0 0
      %878 = vmatpush1.bf16.msra.mxu0 %v855
      %879 = vmatprep.subr.bf16.mxu0 0
      %880 = vmatpush1.bf16.msra.mxu0 %v856
      %881 = vmatprep.subr.bf16.mxu0 0
      %882 = vmatpush1.bf16.msra.mxu0 0
      %883 = vmatprep.subr.bf16.mxu0 0
      %884 = vmatpush1.bf16.msra.mxu0 0
      %885 = vmatprep.subr.bf16.mxu0 0
      %886 = vmatpush1.bf16.msra.mxu0 0
      %887 = vmatprep.subr.bf16.mxu0 0
      %888 = vmatpush1.bf16.msra.mxu0 0
      %889 = vmatprep.subr.bf16.mxu0 0
      %890 = vmatpush1.bf16.msra.mxu0 0
      %891 = vmatprep.subr.bf16.mxu0 0
      %892 = vmatpush1.bf16.msra.mxu0 0
      %893 = vmatprep.subr.bf16.mxu0 0
      %894 = vmatpush1.bf16.msra.mxu0 0
      %895 = vmatprep.subr.bf16.mxu0 0
      %896 = vmatpush1.bf16.msra.mxu0 0
      %897 = vmatprep.mubr.bf16.mxu0 0
      %898 = vmatmul.mubr.bf16.gmra.mrb[0].mxu0 %v803
      %v899 = vpop.f32.mrb[0].mxu0
      %v900 = vadd.f32 0.0, %v899
      %v901 = vpop.f32.mrb[0].mxu0
      %v902 = vpop.f32.mrb[0].mxu0
      %v903 = vadd.f32 0.0, %v902
      %v904 = vpop.f32.mrb[0].mxu0
      %905 = vmatprep.mubr.bf16.mxu0 0
      %906 = vmatmul.mubr.bf16.gmra.mrb[0].mxu0 %v805
      %v907 = vpop.f32.mrb[0].mxu0
      %v908 = vadd.f32 0.0, %v907
      %v909 = vpop.f32.mrb[0].mxu0
      %v910 = vpop.f32.mrb[0].mxu0
      %v911 = vadd.f32 0.0, %v910
      %v912 = vpop.f32.mrb[0].mxu0
      %913 = vmatprep.mubr.bf16.mxu0 0
      %914 = vmatmul.mubr.bf16.gmra.mrb[0].mxu0 %v807
      %v915 = vpop.f32.mrb[0].mxu0
      %v916 = vadd.f32 0.0, %v915
      %v917 = vpop.f32.mrb[0].mxu0
      %v918 = vpop.f32.mrb[0].mxu0
      %v919 = vadd.f32 0.0, %v918
      %v920 = vpop.f32.mrb[0].mxu0
      %921 = vmatprep.mubr.bf16.mxu0 0
      %922 = vmatmul.mubr.bf16.gmra.mrb[0].mxu0 %v809
      %v923 = vpop.f32.mrb[0].mxu0
      %v924 = vadd.f32 0.0, %v923
      %v925 = vpop.f32.mrb[0].mxu0
      %v926 = vpop.f32.mrb[0].mxu0
      %v927 = vadd.f32 0.0, %v926
      %v928 = vpop.f32.mrb[0].mxu0
      %929 = vmatprep.mubr.bf16.mxu0 0
      %930 = vmatmul.mubr.bf16.gmra.mrb[0].mxu0 %v811
      %v931 = vpop.f32.mrb[0].mxu0
      %v932 = vadd.f32 0.0, %v931
      %v933 = vpop.f32.mrb[0].mxu0
      %v934 = vpop.f32.mrb[0].mxu0
      %v935 = vadd.f32 0.0, %v934
      %v936 = vpop.f32.mrb[0].mxu0
      %937 = vdwg.mxu0
      %v938 = vadd.f32 %v736, %v900
      %v939 = vadd.f32 %v737, %v903
      %v940 = vadd.f32 %v738, %v908
      %v941 = vadd.f32 %v739, %v911
      %v942 = vadd.f32 %v740, %v916
      %v943 = vadd.f32 %v741, %v919
      %v944 = vadd.f32 %v742, %v924
      %v945 = vadd.f32 %v743, %v927
      %v946 = vadd.f32 %v744, %v932
      %v947 = vadd.f32 %v745, %v935
      %v948 = vld [vmem:[%s199 + $0x2c] sm:$0x3]
      %v949 = vld [vmem:[%s1 + $0x100] sm:$0xf]
      %v950 = vld [vmem:[%s1 + $0x104] sm:$0xf]
      %v951 = vld [vmem:[%s1 + $0x108] sm:$0xf]
      %v952 = vld [vmem:[%s1 + $0x10c] sm:$0xf]
      %v953 = vld [vmem:[%s1 + $0x110] sm:$0xf]
      %v954 = vld [vmem:[%s1 + $0x114] sm:$0xf]
      %v955 = vld [vmem:[%s1 + $0x118] sm:$0xf]
      %v956 = vld [vmem:[%s1 + $0x11c] sm:$0xf]
      %v957 = vld [vmem:[%s1 + $0x120] sm:$0xf]
      %v958 = vld [vmem:[%s1 + $0x124] sm:$0xf]
      %v959 = vld [vmem:[%s1 + $0x128] sm:$0xf]
      %v960 = vld [vmem:[%s1 + $0x12c] sm:$0xf]
      %v961 = vld [vmem:[%s1 + $0x130] sm:$0xf]
      %v962 = vld [vmem:[%s1 + $0x134] sm:$0xf]
      %v963 = vld [vmem:[%s1 + $0x138] sm:$0xf]
      %v964 = vld [vmem:[%s1 + $0x13c] sm:$0xf]
      %v966 = vunpack.c.l.b16 %v948
      %v967 = vpack.c.b16 %v966, %v966
      %vm968 = vsmask.f32 6400
      %v970 = vshrl.u32 %v795, 16
      %v972 = vrot.slane %v970, 1
      %v973 = vshll.u32 %v795, 16
      %v975 = vrot.slane %v973, 2
      %v976 = vor.u32 %v972, %v975
      %v978 = vshrl.u32 %v796, 16
      %v980 = vrot.slane %v978, 1
      %v981 = vshll.u32 %v796, 16
      %v983 = vrot.slane %v981, 2
      %v984 = vor.u32 %v980, %v983
      %v985 = vsel %vm968, %v976, %v984
      %v987 = vshrl.u32 %v797, 16
      %v989 = vrot.slane %v987, 1
      %v990 = vshll.u32 %v797, 16
      %v992 = vrot.slane %v990, 2
      %v993 = vor.u32 %v989, %v992
      %v994 = vsel %vm968, %v984, %v993
      %v996 = vshrl.u32 %v798, 16
      %v998 = vrot.slane %v996, 1
      %v999 = vshll.u32 %v798, 16
      %v1001 = vrot.slane %v999, 2
      %v1002 = vor.u32 %v998, %v1001
      %v1003 = vsel %vm968, %v993, %v1002
      %v1005 = vshrl.u32 %v799, 16
      %v1007 = vrot.slane %v1005, 1
      %v1008 = vshll.u32 %v799, 16
      %v1010 = vrot.slane %v1008, 2
      %v1011 = vor.u32 %v1007, %v1010
      %v1012 = vsel %vm968, %v1002, %v1011
      %v1014 = vshrl.u32 %v967, 16
      %v1016 = vrot.slane %v1014, 1
      %v1017 = vshll.u32 %v967, 16
      %v1019 = vrot.slane %v1017, 2
      %v1020 = vor.u32 %v1016, %v1019
      %v1021 = vsel %vm968, %v1011, %v1020
      %v1043 = vunpack.c.l.b16 %v949
      %v1044 = vunpack.c.l.b16 %v950
      %v1045 = vunpack.c.l.b16 %v951
      %v1046 = vunpack.c.l.b16 %v952
      %v1047 = vunpack.c.l.b16 %v953
      %v1048 = vunpack.c.l.b16 %v954
      %v1049 = vunpack.c.l.b16 %v955
      %v1050 = vunpack.c.l.b16 %v956
      %v1051 = vunpack.c.l.b16 %v957
      %v1052 = vunpack.c.l.b16 %v958
      %v1053 = vunpack.c.l.b16 %v959
      %v1054 = vunpack.c.l.b16 %v960
      %v1055 = vunpack.c.l.b16 %v961
      %v1056 = vunpack.c.l.b16 %v962
      %v1057 = vunpack.c.l.b16 %v963
      %v1058 = vunpack.c.l.b16 %v964
      %v1059 = vpack.c.b16 %v1044, %v1043
      %v1060 = vpack.c.b16 %v1046, %v1045
      %v1061 = vpack.c.b16 %v1048, %v1047
      %v1062 = vpack.c.b16 %v1050, %v1049
      %v1063 = vpack.c.b16 %v1052, %v1051
      %v1064 = vpack.c.b16 %v1054, %v1053
      %v1065 = vpack.c.b16 %v1056, %v1055
      %v1066 = vpack.c.b16 %v1058, %v1057
      %1075 = vmatprep.subr.bf16.mxu0 0
      %1076 = vmatpush1.bf16.msra.mxu0 %v1059
      %1077 = vmatprep.subr.bf16.mxu0 0
      %1078 = vmatpush1.bf16.msra.mxu0 %v1060
      %1079 = vmatprep.subr.bf16.mxu0 0
      %1080 = vmatpush1.bf16.msra.mxu0 %v1061
      %1081 = vmatprep.subr.bf16.mxu0 0
      %1082 = vmatpush1.bf16.msra.mxu0 %v1062
      %1083 = vmatprep.subr.bf16.mxu0 0
      %1084 = vmatpush1.bf16.msra.mxu0 %v1063
      %1085 = vmatprep.subr.bf16.mxu0 0
      %1086 = vmatpush1.bf16.msra.mxu0 %v1064
      %1087 = vmatprep.subr.bf16.mxu0 0
      %1088 = vmatpush1.bf16.msra.mxu0 %v1065
      %1089 = vmatprep.subr.bf16.mxu0 0
      %1090 = vmatpush1.bf16.msra.mxu0 %v1066
      %1091 = vmatprep.subr.bf16.mxu0 0
      %1092 = vmatpush1.bf16.msra.mxu0 0
      %1093 = vmatprep.subr.bf16.mxu0 0
      %1094 = vmatpush1.bf16.msra.mxu0 0
      %1095 = vmatprep.subr.bf16.mxu0 0
      %1096 = vmatpush1.bf16.msra.mxu0 0
      %1097 = vmatprep.subr.bf16.mxu0 0
      %1098 = vmatpush1.bf16.msra.mxu0 0
      %1099 = vmatprep.subr.bf16.mxu0 0
      %1100 = vmatpush1.bf16.msra.mxu0 0
      %1101 = vmatprep.subr.bf16.mxu0 0
      %1102 = vmatpush1.bf16.msra.mxu0 0
      %1103 = vmatprep.subr.bf16.mxu0 0
      %1104 = vmatpush1.bf16.msra.mxu0 0
      %1105 = vmatprep.subr.bf16.mxu0 0
      %1106 = vmatpush1.bf16.msra.mxu0 0
      %1107 = vmatprep.mubr.bf16.mxu0 0
      %1108 = vmatmul.mubr.bf16.gmra.mrb[0].mxu0 %v985
      %v1109 = vpop.f32.mrb[0].mxu0
      %v1110 = vadd.f32 0.0, %v1109
      %v1111 = vpop.f32.mrb[0].mxu0
      %v1112 = vpop.f32.mrb[0].mxu0
      %v1113 = vadd.f32 0.0, %v1112
      %v1114 = vpop.f32.mrb[0].mxu0
      %1115 = vmatprep.mubr.bf16.mxu0 0
      %1116 = vmatmul.mubr.bf16.gmra.mrb[0].mxu0 %v994
      %v1117 = vpop.f32.mrb[0].mxu0
      %v1118 = vadd.f32 0.0, %v1117
      %v1119 = vpop.f32.mrb[0].mxu0
      %v1120 = vpop.f32.mrb[0].mxu0
      %v1121 = vadd.f32 0.0, %v1120
      %v1122 = vpop.f32.mrb[0].mxu0
      %1123 = vmatprep.mubr.bf16.mxu0 0
      %1124 = vmatmul.mubr.bf16.gmra.mrb[0].mxu0 %v1003
      %v1125 = vpop.f32.mrb[0].mxu0
      %v1126 = vadd.f32 0.0, %v1125
      %v1127 = vpop.f32.mrb[0].mxu0
      %v1128 = vpop.f32.mrb[0].mxu0
      %v1129 = vadd.f32 0.0, %v1128
      %v1130 = vpop.f32.mrb[0].mxu0
      %1131 = vmatprep.mubr.bf16.mxu0 0
      %1132 = vmatmul.mubr.bf16.gmra.mrb[0].mxu0 %v1012
      %v1133 = vpop.f32.mrb[0].mxu0
      %v1134 = vadd.f32 0.0, %v1133
      %v1135 = vpop.f32.mrb[0].mxu0
      %v1136 = vpop.f32.mrb[0].mxu0
      %v1137 = vadd.f32 0.0, %v1136
      %v1138 = vpop.f32.mrb[0].mxu0
      %1139 = vmatprep.mubr.bf16.mxu0 0
      %1140 = vmatmul.mubr.bf16.gmra.mrb[0].mxu0 %v1021
      %v1141 = vpop.f32.mrb[0].mxu0
      %v1142 = vadd.f32 0.0, %v1141
      %v1143 = vpop.f32.mrb[0].mxu0
      %v1144 = vpop.f32.mrb[0].mxu0
      %v1145 = vadd.f32 0.0, %v1144
      %v1146 = vpop.f32.mrb[0].mxu0
      %1147 = vdwg.mxu0
      %v1148 = vadd.f32 %v938, %v1110
      %v1149 = vadd.f32 %v939, %v1113
      %v1150 = vadd.f32 %v940, %v1118
      %v1151 = vadd.f32 %v941, %v1121
      %v1152 = vadd.f32 %v942, %v1126
      %v1153 = vadd.f32 %v943, %v1129
      %v1154 = vadd.f32 %v944, %v1134
      %v1155 = vadd.f32 %v945, %v1137
      %v1156 = vadd.f32 %v946, %v1142
      %v1157 = vadd.f32 %v947, %v1145
      %v1158 = vld [vmem:[%s199 + $0x4] sm:$0xc]
      %v1159 = vld [vmem:[%s1 + $0x140] sm:$0xf]
      %v1160 = vld [vmem:[%s1 + $0x144] sm:$0xf]
      %v1161 = vld [vmem:[%s1 + $0x148] sm:$0xf]
      %v1162 = vld [vmem:[%s1 + $0x14c] sm:$0xf]
      %v1163 = vld [vmem:[%s1 + $0x150] sm:$0xf]
      %v1164 = vld [vmem:[%s1 + $0x154] sm:$0xf]
      %v1165 = vld [vmem:[%s1 + $0x158] sm:$0xf]
      %v1166 = vld [vmem:[%s1 + $0x15c] sm:$0xf]
      %v1167 = vld [vmem:[%s1 + $0x160] sm:$0xf]
      %v1168 = vld [vmem:[%s1 + $0x164] sm:$0xf]
      %v1169 = vld [vmem:[%s1 + $0x168] sm:$0xf]
      %v1170 = vld [vmem:[%s1 + $0x16c] sm:$0xf]
      %v1171 = vld [vmem:[%s1 + $0x170] sm:$0xf]
      %v1172 = vld [vmem:[%s1 + $0x174] sm:$0xf]
      %v1173 = vld [vmem:[%s1 + $0x178] sm:$0xf]
      %v1174 = vld [vmem:[%s1 + $0x17c] sm:$0xf]
      %v1176 = vunpack.c.l.b16 %v1158
      %v1177 = vpack.c.b16 %v785, %v1176
      %vm1178 = vcmask 1045504
      %v1179 = vrot.slane %v1177, 2
      %v1180 = vrot.slane %v796, 2
      %v1181 = vsel %vm1178, %v1179, %v1180
      %v1182 = vrot.slane %v797, 2
      %v1183 = vsel %vm1178, %v1180, %v1182
      %v1184 = vrot.slane %v798, 2
      %v1185 = vsel %vm1178, %v1182, %v1184
      %v1186 = vrot.slane %v799, 2
      %v1187 = vsel %vm1178, %v1184, %v1186
      %v1188 = vrot.slane %v967, 2
      %v1189 = vsel %vm1178, %v1186, %v1188
      %v1211 = vunpack.c.l.b16 %v1159
      %v1212 = vunpack.c.l.b16 %v1160
      %v1213 = vunpack.c.l.b16 %v1161
      %v1214 = vunpack.c.l.b16 %v1162
      %v1215 = vunpack.c.l.b16 %v1163
      %v1216 = vunpack.c.l.b16 %v1164
      %v1217 = vunpack.c.l.b16 %v1165
      %v1218 = vunpack.c.l.b16 %v1166
      %v1219 = vunpack.c.l.b16 %v1167
      %v1220 = vunpack.c.l.b16 %v1168
      %v1221 = vunpack.c.l.b16 %v1169
      %v1222 = vunpack.c.l.b16 %v1170
      %v1223 = vunpack.c.l.b16 %v1171
      %v1224 = vunpack.c.l.b16 %v1172
      %v1225 = vunpack.c.l.b16 %v1173
      %v1226 = vunpack.c.l.b16 %v1174
      %v1227 = vpack.c.b16 %v1212, %v1211
      %v1228 = vpack.c.b16 %v1214, %v1213
      %v1229 = vpack.c.b16 %v1216, %v1215
      %v1230 = vpack.c.b16 %v1218, %v1217
      %v1231 = vpack.c.b16 %v1220, %v1219
      %v1232 = vpack.c.b16 %v1222, %v1221
      %v1233 = vpack.c.b16 %v1224, %v1223
      %v1234 = vpack.c.b16 %v1226, %v1225
      %1243 = vmatprep.subr.bf16.mxu0 0
      %1244 = vmatpush1.bf16.msra.mxu0 %v1227
      %1245 = vmatprep.subr.bf16.mxu0 0
      %1246 = vmatpush1.bf16.msra.mxu0 %v1228
      %1247 = vmatprep.subr.bf16.mxu0 0
      %1248 = vmatpush1.bf16.msra.mxu0 %v1229
      %1249 = vmatprep.subr.bf16.mxu0 0
      %1250 = vmatpush1.bf16.msra.mxu0 %v1230
      %1251 = vmatprep.subr.bf16.mxu0 0
      %1252 = vmatpush1.bf16.msra.mxu0 %v1231
      %1253 = vmatprep.subr.bf16.mxu0 0
      %1254 = vmatpush1.bf16.msra.mxu0 %v1232
      %1255 = vmatprep.subr.bf16.mxu0 0
      %1256 = vmatpush1.bf16.msra.mxu0 %v1233
      %1257 = vmatprep.subr.bf16.mxu0 0
      %1258 = vmatpush1.bf16.msra.mxu0 %v1234
      %1259 = vmatprep.subr.bf16.mxu0 0
      %1260 = vmatpush1.bf16.msra.mxu0 0
      %1261 = vmatprep.subr.bf16.mxu0 0
      %1262 = vmatpush1.bf16.msra.mxu0 0
      %1263 = vmatprep.subr.bf16.mxu0 0
      %1264 = vmatpush1.bf16.msra.mxu0 0
      %1265 = vmatprep.subr.bf16.mxu0 0
      %1266 = vmatpush1.bf16.msra.mxu0 0
      %1267 = vmatprep.subr.bf16.mxu0 0
      %1268 = vmatpush1.bf16.msra.mxu0 0
      %1269 = vmatprep.subr.bf16.mxu0 0
      %1270 = vmatpush1.bf16.msra.mxu0 0
      %1271 = vmatprep.subr.bf16.mxu0 0
      %1272 = vmatpush1.bf16.msra.mxu0 0
      %1273 = vmatprep.subr.bf16.mxu0 0
      %1274 = vmatpush1.bf16.msra.mxu0 0
      %1275 = vmatprep.mubr.bf16.mxu0 0
      %1276 = vmatmul.mubr.bf16.gmra.mrb[0].mxu0 %v1181
      %v1277 = vpop.f32.mrb[0].mxu0
      %v1278 = vadd.f32 0.0, %v1277
      %v1279 = vpop.f32.mrb[0].mxu0
      %v1280 = vpop.f32.mrb[0].mxu0
      %v1281 = vadd.f32 0.0, %v1280
      %v1282 = vpop.f32.mrb[0].mxu0
      %1283 = vmatprep.mubr.bf16.mxu0 0
      %1284 = vmatmul.mubr.bf16.gmra.mrb[0].mxu0 %v1183
      %v1285 = vpop.f32.mrb[0].mxu0
      %v1286 = vadd.f32 0.0, %v1285
      %v1287 = vpop.f32.mrb[0].mxu0
      %v1288 = vpop.f32.mrb[0].mxu0
      %v1289 = vadd.f32 0.0, %v1288
      %v1290 = vpop.f32.mrb[0].mxu0
      %1291 = vmatprep.mubr.bf16.mxu0 0
      %1292 = vmatmul.mubr.bf16.gmra.mrb[0].mxu0 %v1185
      %v1293 = vpop.f32.mrb[0].mxu0
      %v1294 = vadd.f32 0.0, %v1293
      %v1295 = vpop.f32.mrb[0].mxu0
      %v1296 = vpop.f32.mrb[0].mxu0
      %v1297 = vadd.f32 0.0, %v1296
      %v1298 = vpop.f32.mrb[0].mxu0
      %1299 = vmatprep.mubr.bf16.mxu0 0
      %1300 = vmatmul.mubr.bf16.gmra.mrb[0].mxu0 %v1187
      %v1301 = vpop.f32.mrb[0].mxu0
      %v1302 = vadd.f32 0.0, %v1301
      %v1303 = vpop.f32.mrb[0].mxu0
      %v1304 = vpop.f32.mrb[0].mxu0
      %v1305 = vadd.f32 0.0, %v1304
      %v1306 = vpop.f32.mrb[0].mxu0
      %1307 = vmatprep.mubr.bf16.mxu0 0
      %1308 = vmatmul.mubr.bf16.gmra.mrb[0].mxu0 %v1189
      %v1309 = vpop.f32.mrb[0].mxu0
      %v1310 = vadd.f32 0.0, %v1309
      %v1311 = vpop.f32.mrb[0].mxu0
      %v1312 = vpop.f32.mrb[0].mxu0
      %v1313 = vadd.f32 0.0, %v1312
      %v1314 = vpop.f32.mrb[0].mxu0
      %1315 = vdwg.mxu0
      %v1316 = vadd.f32 %v1148, %v1278
      %v1317 = vadd.f32 %v1149, %v1281
      %v1318 = vadd.f32 %v1150, %v1286
      %v1319 = vadd.f32 %v1151, %v1289
      %v1320 = vadd.f32 %v1152, %v1294
      %v1321 = vadd.f32 %v1153, %v1297
      %v1322 = vadd.f32 %v1154, %v1302
      %v1323 = vadd.f32 %v1155, %v1305
      %v1324 = vadd.f32 %v1156, %v1310
      %v1325 = vadd.f32 %v1157, %v1313
      %v1326 = vld [vmem:[%s199 + $0x8] sm:$0xc]
      %v1327 = vld [vmem:[%s199 + $0xc] sm:$0xf]
      %v1328 = vld [vmem:[%s199 + $0x10] sm:$0xf]
      %v1329 = vld [vmem:[%s199 + $0x14] sm:$0xf]
      %v1330 = vld [vmem:[%s199 + $0x18] sm:$0xf]
      %v1331 = vld [vmem:[%s199 + $0x1c] sm:$0xf]
      %v1332 = vld [vmem:[%s199 + $0x20] sm:$0xf]
      %v1333 = vld [vmem:[%s199 + $0x24] sm:$0xf]
      %v1334 = vld [vmem:[%s199 + $0x28] sm:$0xf]
      %v1335 = vld [vmem:[%s199 + $0x2c] sm:$0xf]
      %v1336 = vld [vmem:[%s199 + $0x30] sm:$0x3]
      %v1337 = vld [vmem:[%s1 + $0x180] sm:$0xf]
      %v1338 = vld [vmem:[%s1 + $0x184] sm:$0xf]
      %v1339 = vld [vmem:[%s1 + $0x188] sm:$0xf]
      %v1340 = vld [vmem:[%s1 + $0x18c] sm:$0xf]
      %v1341 = vld [vmem:[%s1 + $0x190] sm:$0xf]
      %v1342 = vld [vmem:[%s1 + $0x194] sm:$0xf]
      %v1343 = vld [vmem:[%s1 + $0x198] sm:$0xf]
      %v1344 = vld [vmem:[%s1 + $0x19c] sm:$0xf]
      %v1345 = vld [vmem:[%s1 + $0x1a0] sm:$0xf]
      %v1346 = vld [vmem:[%s1 + $0x1a4] sm:$0xf]
      %v1347 = vld [vmem:[%s1 + $0x1a8] sm:$0xf]
      %v1348 = vld [vmem:[%s1 + $0x1ac] sm:$0xf]
      %v1349 = vld [vmem:[%s1 + $0x1b0] sm:$0xf]
      %v1350 = vld [vmem:[%s1 + $0x1b4] sm:$0xf]
      %v1351 = vld [vmem:[%s1 + $0x1b8] sm:$0xf]
      %v1352 = vld [vmem:[%s1 + $0x1bc] sm:$0xf]
      %v1364 = vunpack.c.l.b16 %v1326
      %v1365 = vunpack.c.l.b16 %v1327
      %v1366 = vunpack.c.l.b16 %v1328
      %v1367 = vunpack.c.l.b16 %v1329
      %v1368 = vunpack.c.l.b16 %v1330
      %v1369 = vunpack.c.l.b16 %v1331
      %v1370 = vunpack.c.l.b16 %v1332
      %v1371 = vunpack.c.l.b16 %v1333
      %v1372 = vunpack.c.l.b16 %v1334
      %v1373 = vunpack.c.l.b16 %v1335
      %v1374 = vunpack.c.l.b16 %v1336
      %v1375 = vpack.c.b16 %v1365, %v1364
      %v1376 = vpack.c.b16 %v1367, %v1366
      %v1377 = vpack.c.b16 %v1369, %v1368
      %v1378 = vpack.c.b16 %v1371, %v1370
      %v1379 = vpack.c.b16 %v1373, %v1372
      %v1380 = vpack.c.b16 %v1374, %v1374
      %v1381 = vrot.slane %v1375, 2
      %v1382 = vrot.slane %v1376, 2
      %v1383 = vsel %vm1178, %v1381, %v1382
      %v1384 = vrot.slane %v1377, 2
      %v1385 = vsel %vm1178, %v1382, %v1384
      %v1386 = vrot.slane %v1378, 2
      %v1387 = vsel %vm1178, %v1384, %v1386
      %v1388 = vrot.slane %v1379, 2
      %v1389 = vsel %vm1178, %v1386, %v1388
      %v1390 = vrot.slane %v1380, 2
      %v1391 = vsel %vm1178, %v1388, %v1390
      %v1413 = vunpack.c.l.b16 %v1337
      %v1414 = vunpack.c.l.b16 %v1338
      %v1415 = vunpack.c.l.b16 %v1339
      %v1416 = vunpack.c.l.b16 %v1340
      %v1417 = vunpack.c.l.b16 %v1341
      %v1418 = vunpack.c.l.b16 %v1342
      %v1419 = vunpack.c.l.b16 %v1343
      %v1420 = vunpack.c.l.b16 %v1344
      %v1421 = vunpack.c.l.b16 %v1345
      %v1422 = vunpack.c.l.b16 %v1346
      %v1423 = vunpack.c.l.b16 %v1347
      %v1424 = vunpack.c.l.b16 %v1348
      %v1425 = vunpack.c.l.b16 %v1349
      %v1426 = vunpack.c.l.b16 %v1350
      %v1427 = vunpack.c.l.b16 %v1351
      %v1428 = vunpack.c.l.b16 %v1352
      %v1429 = vpack.c.b16 %v1414, %v1413
      %v1430 = vpack.c.b16 %v1416, %v1415
      %v1431 = vpack.c.b16 %v1418, %v1417
      %v1432 = vpack.c.b16 %v1420, %v1419
      %v1433 = vpack.c.b16 %v1422, %v1421
      %v1434 = vpack.c.b16 %v1424, %v1423
      %v1435 = vpack.c.b16 %v1426, %v1425
      %v1436 = vpack.c.b16 %v1428, %v1427
      %1445 = vmatprep.subr.bf16.mxu0 0
      %1446 = vmatpush1.bf16.msra.mxu0 %v1429
      %1447 = vmatprep.subr.bf16.mxu0 0
      %1448 = vmatpush1.bf16.msra.mxu0 %v1430
      %1449 = vmatprep.subr.bf16.mxu0 0
      %1450 = vmatpush1.bf16.msra.mxu0 %v1431
      %1451 = vmatprep.subr.bf16.mxu0 0
      %1452 = vmatpush1.bf16.msra.mxu0 %v1432
      %1453 = vmatprep.subr.bf16.mxu0 0
      %1454 = vmatpush1.bf16.msra.mxu0 %v1433
      %1455 = vmatprep.subr.bf16.mxu0 0
      %1456 = vmatpush1.bf16.msra.mxu0 %v1434
      %1457 = vmatprep.subr.bf16.mxu0 0
      %1458 = vmatpush1.bf16.msra.mxu0 %v1435
      %1459 = vmatprep.subr.bf16.mxu0 0
      %1460 = vmatpush1.bf16.msra.mxu0 %v1436
      %1461 = vmatprep.subr.bf16.mxu0 0
      %1462 = vmatpush1.bf16.msra.mxu0 0
      %1463 = vmatprep.subr.bf16.mxu0 0
      %1464 = vmatpush1.bf16.msra.mxu0 0
      %1465 = vmatprep.subr.bf16.mxu0 0
      %1466 = vmatpush1.bf16.msra.mxu0 0
      %1467 = vmatprep.subr.bf16.mxu0 0
      %1468 = vmatpush1.bf16.msra.mxu0 0
      %1469 = vmatprep.subr.bf16.mxu0 0
      %1470 = vmatpush1.bf16.msra.mxu0 0
      %1471 = vmatprep.subr.bf16.mxu0 0
      %1472 = vmatpush1.bf16.msra.mxu0 0
      %1473 = vmatprep.subr.bf16.mxu0 0
      %1474 = vmatpush1.bf16.msra.mxu0 0
      %1475 = vmatprep.subr.bf16.mxu0 0
      %1476 = vmatpush1.bf16.msra.mxu0 0
      %1477 = vmatprep.mubr.bf16.mxu0 0
      %1478 = vmatmul.mubr.bf16.gmra.mrb[0].mxu0 %v1383
      %v1479 = vpop.f32.mrb[0].mxu0
      %v1480 = vadd.f32 0.0, %v1479
      %v1481 = vpop.f32.mrb[0].mxu0
      %v1482 = vpop.f32.mrb[0].mxu0
      %v1483 = vadd.f32 0.0, %v1482
      %v1484 = vpop.f32.mrb[0].mxu0
      %1485 = vmatprep.mubr.bf16.mxu0 0
      %1486 = vmatmul.mubr.bf16.gmra.mrb[0].mxu0 %v1385
      %v1487 = vpop.f32.mrb[0].mxu0
      %v1488 = vadd.f32 0.0, %v1487
      %v1489 = vpop.f32.mrb[0].mxu0
      %v1490 = vpop.f32.mrb[0].mxu0
      %v1491 = vadd.f32 0.0, %v1490
      %v1492 = vpop.f32.mrb[0].mxu0
      %1493 = vmatprep.mubr.bf16.mxu0 0
      %1494 = vmatmul.mubr.bf16.gmra.mrb[0].mxu0 %v1387
      %v1495 = vpop.f32.mrb[0].mxu0
      %v1496 = vadd.f32 0.0, %v1495
      %v1497 = vpop.f32.mrb[0].mxu0
      %v1498 = vpop.f32.mrb[0].mxu0
      %v1499 = vadd.f32 0.0, %v1498
      %v1500 = vpop.f32.mrb[0].mxu0
      %1501 = vmatprep.mubr.bf16.mxu0 0
      %1502 = vmatmul.mubr.bf16.gmra.mrb[0].mxu0 %v1389
      %v1503 = vpop.f32.mrb[0].mxu0
      %v1504 = vadd.f32 0.0, %v1503
      %v1505 = vpop.f32.mrb[0].mxu0
      %v1506 = vpop.f32.mrb[0].mxu0
      %v1507 = vadd.f32 0.0, %v1506
      %v1508 = vpop.f32.mrb[0].mxu0
      %1509 = vmatprep.mubr.bf16.mxu0 0
      %1510 = vmatmul.mubr.bf16.gmra.mrb[0].mxu0 %v1391
      %v1511 = vpop.f32.mrb[0].mxu0
      %v1512 = vadd.f32 0.0, %v1511
      %v1513 = vpop.f32.mrb[0].mxu0
      %v1514 = vpop.f32.mrb[0].mxu0
      %v1515 = vadd.f32 0.0, %v1514
      %v1516 = vpop.f32.mrb[0].mxu0
      %1517 = vdwg.mxu0
      %v1518 = vadd.f32 %v1316, %v1480
      %v1519 = vadd.f32 %v1317, %v1483
      %v1520 = vadd.f32 %v1318, %v1488
      %v1521 = vadd.f32 %v1319, %v1491
      %v1522 = vadd.f32 %v1320, %v1496
      %v1523 = vadd.f32 %v1321, %v1499
      %v1524 = vadd.f32 %v1322, %v1504
      %v1525 = vadd.f32 %v1323, %v1507
      %v1526 = vadd.f32 %v1324, %v1512
      %v1527 = vadd.f32 %v1325, %v1515
      %v1528 = vld [vmem:[%s199 + $0x30] sm:$0x7]
      %v1529 = vld [vmem:[%s1 + $0x1c0] sm:$0xf]
      %v1530 = vld [vmem:[%s1 + $0x1c4] sm:$0xf]
      %v1531 = vld [vmem:[%s1 + $0x1c8] sm:$0xf]
      %v1532 = vld [vmem:[%s1 + $0x1cc] sm:$0xf]
      %v1533 = vld [vmem:[%s1 + $0x1d0] sm:$0xf]
      %v1534 = vld [vmem:[%s1 + $0x1d4] sm:$0xf]
      %v1535 = vld [vmem:[%s1 + $0x1d8] sm:$0xf]
      %v1536 = vld [vmem:[%s1 + $0x1dc] sm:$0xf]
      %v1537 = vld [vmem:[%s1 + $0x1e0] sm:$0xf]
      %v1538 = vld [vmem:[%s1 + $0x1e4] sm:$0xf]
      %v1539 = vld [vmem:[%s1 + $0x1e8] sm:$0xf]
      %v1540 = vld [vmem:[%s1 + $0x1ec] sm:$0xf]
      %v1541 = vld [vmem:[%s1 + $0x1f0] sm:$0xf]
      %v1542 = vld [vmem:[%s1 + $0x1f4] sm:$0xf]
      %v1543 = vld [vmem:[%s1 + $0x1f8] sm:$0xf]
      %v1544 = vld [vmem:[%s1 + $0x1fc] sm:$0xf]
      %v1546 = vunpack.c.l.b16 %v1528
      %v1547 = vpack.c.b16 %v1546, %v1546
      %vm1548 = vsmask.f32 5376
      %v1550 = vshrl.u32 %v1375, 16
      %v1552 = vrot.slane %v1550, 2
      %v1553 = vshll.u32 %v1375, 16
      %v1555 = vrot.slane %v1553, 3
      %v1556 = vor.u32 %v1552, %v1555
      %v1558 = vshrl.u32 %v1376, 16
      %v1560 = vrot.slane %v1558, 2
      %v1561 = vshll.u32 %v1376, 16
      %v1563 = vrot.slane %v1561, 3
      %v1564 = vor.u32 %v1560, %v1563
      %v1565 = vsel %vm1548, %v1556, %v1564
      %v1567 = vshrl.u32 %v1377, 16
      %v1569 = vrot.slane %v1567, 2
      %v1570 = vshll.u32 %v1377, 16
      %v1572 = vrot.slane %v1570, 3
      %v1573 = vor.u32 %v1569, %v1572
      %v1574 = vsel %vm1548, %v1564, %v1573
      %v1576 = vshrl.u32 %v1378, 16
      %v1578 = vrot.slane %v1576, 2
      %v1579 = vshll.u32 %v1378, 16
      %v1581 = vrot.slane %v1579, 3
      %v1582 = vor.u32 %v1578, %v1581
      %v1583 = vsel %vm1548, %v1573, %v1582
      %v1585 = vshrl.u32 %v1379, 16
      %v1587 = vrot.slane %v1585, 2
      %v1588 = vshll.u32 %v1379, 16
      %v1590 = vrot.slane %v1588, 3
      %v1591 = vor.u32 %v1587, %v1590
      %v1592 = vsel %vm1548, %v1582, %v1591
      %v1594 = vshrl.u32 %v1547, 16
      %v1596 = vrot.slane %v1594, 2
      %v1597 = vshll.u32 %v1547, 16
      %v1599 = vrot.slane %v1597, 3
      %v1600 = vor.u32 %v1596, %v1599
      %v1601 = vsel %vm1548, %v1591, %v1600
      %v1623 = vunpack.c.l.b16 %v1529
      %v1624 = vunpack.c.l.b16 %v1530
      %v1625 = vunpack.c.l.b16 %v1531
      %v1626 = vunpack.c.l.b16 %v1532
      %v1627 = vunpack.c.l.b16 %v1533
      %v1628 = vunpack.c.l.b16 %v1534
      %v1629 = vunpack.c.l.b16 %v1535
      %v1630 = vunpack.c.l.b16 %v1536
      %v1631 = vunpack.c.l.b16 %v1537
      %v1632 = vunpack.c.l.b16 %v1538
      %v1633 = vunpack.c.l.b16 %v1539
      %v1634 = vunpack.c.l.b16 %v1540
      %v1635 = vunpack.c.l.b16 %v1541
      %v1636 = vunpack.c.l.b16 %v1542
      %v1637 = vunpack.c.l.b16 %v1543
      %v1638 = vunpack.c.l.b16 %v1544
      %v1639 = vpack.c.b16 %v1624, %v1623
      %v1640 = vpack.c.b16 %v1626, %v1625
      %v1641 = vpack.c.b16 %v1628, %v1627
      %v1642 = vpack.c.b16 %v1630, %v1629
      %v1643 = vpack.c.b16 %v1632, %v1631
      %v1644 = vpack.c.b16 %v1634, %v1633
      %v1645 = vpack.c.b16 %v1636, %v1635
      %v1646 = vpack.c.b16 %v1638, %v1637
      %1655 = vmatprep.subr.bf16.mxu0 0
      %1656 = vmatpush1.bf16.msra.mxu0 %v1639
      %1657 = vmatprep.subr.bf16.mxu0 0
      %1658 = vmatpush1.bf16.msra.mxu0 %v1640
      %1659 = vmatprep.subr.bf16.mxu0 0
      %1660 = vmatpush1.bf16.msra.mxu0 %v1641
      %1661 = vmatprep.subr.bf16.mxu0 0
      %1662 = vmatpush1.bf16.msra.mxu0 %v1642
      %1663 = vmatprep.subr.bf16.mxu0 0
      %1664 = vmatpush1.bf16.msra.mxu0 %v1643
      %1665 = vmatprep.subr.bf16.mxu0 0
      %1666 = vmatpush1.bf16.msra.mxu0 %v1644
      %1667 = vmatprep.subr.bf16.mxu0 0
      %1668 = vmatpush1.bf16.msra.mxu0 %v1645
      %1669 = vmatprep.subr.bf16.mxu0 0
      %1670 = vmatpush1.bf16.msra.mxu0 %v1646
      %1671 = vmatprep.subr.bf16.mxu0 0
      %1672 = vmatpush1.bf16.msra.mxu0 0
      %1673 = vmatprep.subr.bf16.mxu0 0
      %1674 = vmatpush1.bf16.msra.mxu0 0
      %1675 = vmatprep.subr.bf16.mxu0 0
      %1676 = vmatpush1.bf16.msra.mxu0 0
      %1677 = vmatprep.subr.bf16.mxu0 0
      %1678 = vmatpush1.bf16.msra.mxu0 0
      %1679 = vmatprep.subr.bf16.mxu0 0
      %1680 = vmatpush1.bf16.msra.mxu0 0
      %1681 = vmatprep.subr.bf16.mxu0 0
      %1682 = vmatpush1.bf16.msra.mxu0 0
      %1683 = vmatprep.subr.bf16.mxu0 0
      %1684 = vmatpush1.bf16.msra.mxu0 0
      %1685 = vmatprep.subr.bf16.mxu0 0
      %1686 = vmatpush1.bf16.msra.mxu0 0
      %1687 = vmatprep.mubr.bf16.mxu0 0
      %1688 = vmatmul.mubr.bf16.gmra.mrb[0].mxu0 %v1565
      %v1689 = vpop.f32.mrb[0].mxu0
      %v1690 = vadd.f32 0.0, %v1689
      %v1691 = vpop.f32.mrb[0].mxu0
      %v1692 = vpop.f32.mrb[0].mxu0
      %v1693 = vadd.f32 0.0, %v1692
      %v1694 = vpop.f32.mrb[0].mxu0
      %1695 = vmatprep.mubr.bf16.mxu0 0
      %1696 = vmatmul.mubr.bf16.gmra.mrb[0].mxu0 %v1574
      %v1697 = vpop.f32.mrb[0].mxu0
      %v1698 = vadd.f32 0.0, %v1697
      %v1699 = vpop.f32.mrb[0].mxu0
      %v1700 = vpop.f32.mrb[0].mxu0
      %v1701 = vadd.f32 0.0, %v1700
      %v1702 = vpop.f32.mrb[0].mxu0
      %1703 = vmatprep.mubr.bf16.mxu0 0
      %1704 = vmatmul.mubr.bf16.gmra.mrb[0].mxu0 %v1583
      %v1705 = vpop.f32.mrb[0].mxu0
      %v1706 = vadd.f32 0.0, %v1705
      %v1707 = vpop.f32.mrb[0].mxu0
      %v1708 = vpop.f32.mrb[0].mxu0
      %v1709 = vadd.f32 0.0, %v1708
      %v1710 = vpop.f32.mrb[0].mxu0
      %1711 = vmatprep.mubr.bf16.mxu0 0
      %1712 = vmatmul.mubr.bf16.gmra.mrb[0].mxu0 %v1592
      %v1713 = vpop.f32.mrb[0].mxu0
      %v1714 = vadd.f32 0.0, %v1713
      %v1715 = vpop.f32.mrb[0].mxu0
      %v1716 = vpop.f32.mrb[0].mxu0
      %v1717 = vadd.f32 0.0, %v1716
      %v1718 = vpop.f32.mrb[0].mxu0
      %1719 = vmatprep.mubr.bf16.mxu0 0
      %1720 = vmatmul.mubr.bf16.gmra.mrb[0].mxu0 %v1601
      %v1721 = vpop.f32.mrb[0].mxu0
      %v1722 = vadd.f32 0.0, %v1721
      %v1723 = vpop.f32.mrb[0].mxu0
      %v1724 = vpop.f32.mrb[0].mxu0
      %v1725 = vadd.f32 0.0, %v1724
      %v1726 = vpop.f32.mrb[0].mxu0
      %1727 = vdwg.mxu0
      %v1728 = vadd.f32 %v1518, %v1690
      %v1729 = vadd.f32 %v1519, %v1693
      %v1730 = vadd.f32 %v1520, %v1698
      %v1731 = vadd.f32 %v1521, %v1701
      %v1732 = vadd.f32 %v1522, %v1706
      %v1733 = vadd.f32 %v1523, %v1709
      %v1734 = vadd.f32 %v1524, %v1714
      %v1735 = vadd.f32 %v1525, %v1717
      %v1736 = vadd.f32 %v1526, %v1722
      %v1737 = vadd.f32 %v1527, %v1725
      %v1738 = vld [vmem:[%s199 + $0x8] sm:$0x8]
      %v1739 = vld [vmem:[%s1 + $0x200] sm:$0xf]
      %v1740 = vld [vmem:[%s1 + $0x204] sm:$0xf]
      %v1741 = vld [vmem:[%s1 + $0x208] sm:$0xf]
      %v1742 = vld [vmem:[%s1 + $0x20c] sm:$0xf]
      %v1743 = vld [vmem:[%s1 + $0x210] sm:$0xf]
      %v1744 = vld [vmem:[%s1 + $0x214] sm:$0xf]
      %v1745 = vld [vmem:[%s1 + $0x218] sm:$0xf]
      %v1746 = vld [vmem:[%s1 + $0x21c] sm:$0xf]
      %v1747 = vld [vmem:[%s1 + $0x220] sm:$0xf]
      %v1748 = vld [vmem:[%s1 + $0x224] sm:$0xf]
      %v1749 = vld [vmem:[%s1 + $0x228] sm:$0xf]
      %v1750 = vld [vmem:[%s1 + $0x22c] sm:$0xf]
      %v1751 = vld [vmem:[%s1 + $0x230] sm:$0xf]
      %v1752 = vld [vmem:[%s1 + $0x234] sm:$0xf]
      %v1753 = vld [vmem:[%s1 + $0x238] sm:$0xf]
      %v1754 = vld [vmem:[%s1 + $0x23c] sm:$0xf]
      %v1756 = vunpack.c.l.b16 %v1738
      %v1757 = vpack.c.b16 %v1365, %v1756
      %vm1758 = vcmask 1044480
      %v1759 = vrot.slane %v1757, 3
      %v1760 = vrot.slane %v1376, 3
      %v1761 = vsel %vm1758, %v1759, %v1760
      %v1762 = vrot.slane %v1377, 3
      %v1763 = vsel %vm1758, %v1760, %v1762
      %v1764 = vrot.slane %v1378, 3
      %v1765 = vsel %vm1758, %v1762, %v1764
      %v1766 = vrot.slane %v1379, 3
      %v1767 = vsel %vm1758, %v1764, %v1766
      %v1768 = vrot.slane %v1547, 3
      %v1769 = vsel %vm1758, %v1766, %v1768
      %v1791 = vunpack.c.l.b16 %v1739
      %v1792 = vunpack.c.l.b16 %v1740
      %v1793 = vunpack.c.l.b16 %v1741
      %v1794 = vunpack.c.l.b16 %v1742
      %v1795 = vunpack.c.l.b16 %v1743
      %v1796 = vunpack.c.l.b16 %v1744
      %v1797 = vunpack.c.l.b16 %v1745
      %v1798 = vunpack.c.l.b16 %v1746
      %v1799 = vunpack.c.l.b16 %v1747
      %v1800 = vunpack.c.l.b16 %v1748
      %v1801 = vunpack.c.l.b16 %v1749
      %v1802 = vunpack.c.l.b16 %v1750
      %v1803 = vunpack.c.l.b16 %v1751
      %v1804 = vunpack.c.l.b16 %v1752
      %v1805 = vunpack.c.l.b16 %v1753
      %v1806 = vunpack.c.l.b16 %v1754
      %v1807 = vpack.c.b16 %v1792, %v1791
      %v1808 = vpack.c.b16 %v1794, %v1793
      %v1809 = vpack.c.b16 %v1796, %v1795
      %v1810 = vpack.c.b16 %v1798, %v1797
      %v1811 = vpack.c.b16 %v1800, %v1799
      %v1812 = vpack.c.b16 %v1802, %v1801
      %v1813 = vpack.c.b16 %v1804, %v1803
      %v1814 = vpack.c.b16 %v1806, %v1805
      %1823 = vmatprep.subr.bf16.mxu0 0
      %1824 = vmatpush1.bf16.msra.mxu0 %v1807
      %1825 = vmatprep.subr.bf16.mxu0 0
      %1826 = vmatpush1.bf16.msra.mxu0 %v1808
      %1827 = vmatprep.subr.bf16.mxu0 0
      %1828 = vmatpush1.bf16.msra.mxu0 %v1809
      %1829 = vmatprep.subr.bf16.mxu0 0
      %1830 = vmatpush1.bf16.msra.mxu0 %v1810
      %1831 = vmatprep.subr.bf16.mxu0 0
      %1832 = vmatpush1.bf16.msra.mxu0 %v1811
      %1833 = vmatprep.subr.bf16.mxu0 0
      %1834 = vmatpush1.bf16.msra.mxu0 %v1812
      %1835 = vmatprep.subr.bf16.mxu0 0
      %1836 = vmatpush1.bf16.msra.mxu0 %v1813
      %1837 = vmatprep.subr.bf16.mxu0 0
      %1838 = vmatpush1.bf16.msra.mxu0 %v1814
      %1839 = vmatprep.subr.bf16.mxu0 0
      %1840 = vmatpush1.bf16.msra.mxu0 0
      %1841 = vmatprep.subr.bf16.mxu0 0
      %1842 = vmatpush1.bf16.msra.mxu0 0
      %1843 = vmatprep.subr.bf16.mxu0 0
      %1844 = vmatpush1.bf16.msra.mxu0 0
      %1845 = vmatprep.subr.bf16.mxu0 0
      %1846 = vmatpush1.bf16.msra.mxu0 0
      %1847 = vmatprep.subr.bf16.mxu0 0
      %1848 = vmatpush1.bf16.msra.mxu0 0
      %1849 = vmatprep.subr.bf16.mxu0 0
      %1850 = vmatpush1.bf16.msra.mxu0 0
      %1851 = vmatprep.subr.bf16.mxu0 0
      %1852 = vmatpush1.bf16.msra.mxu0 0
      %1853 = vmatprep.subr.bf16.mxu0 0
      %1854 = vmatpush1.bf16.msra.mxu0 0
      %1855 = vmatprep.mubr.bf16.mxu0 0
      %1856 = vmatmul.mubr.bf16.gmra.mrb[0].mxu0 %v1761
      %v1857 = vpop.f32.mrb[0].mxu0
      %v1858 = vadd.f32 0.0, %v1857
      %v1859 = vpop.f32.mrb[0].mxu0
      %v1860 = vpop.f32.mrb[0].mxu0
      %v1861 = vadd.f32 0.0, %v1860
      %v1862 = vpop.f32.mrb[0].mxu0
      %1863 = vmatprep.mubr.bf16.mxu0 0
      %1864 = vmatmul.mubr.bf16.gmra.mrb[0].mxu0 %v1763
      %v1865 = vpop.f32.mrb[0].mxu0
      %v1866 = vadd.f32 0.0, %v1865
      %v1867 = vpop.f32.mrb[0].mxu0
      %v1868 = vpop.f32.mrb[0].mxu0
      %v1869 = vadd.f32 0.0, %v1868
      %v1870 = vpop.f32.mrb[0].mxu0
      %1871 = vmatprep.mubr.bf16.mxu0 0
      %1872 = vmatmul.mubr.bf16.gmra.mrb[0].mxu0 %v1765
      %v1873 = vpop.f32.mrb[0].mxu0
      %v1874 = vadd.f32 0.0, %v1873
      %v1875 = vpop.f32.mrb[0].mxu0
      %v1876 = vpop.f32.mrb[0].mxu0
      %v1877 = vadd.f32 0.0, %v1876
      %v1878 = vpop.f32.mrb[0].mxu0
      %1879 = vmatprep.mubr.bf16.mxu0 0
      %1880 = vmatmul.mubr.bf16.gmra.mrb[0].mxu0 %v1767
      %v1881 = vpop.f32.mrb[0].mxu0
      %v1882 = vadd.f32 0.0, %v1881
      %v1883 = vpop.f32.mrb[0].mxu0
      %v1884 = vpop.f32.mrb[0].mxu0
      %v1885 = vadd.f32 0.0, %v1884
      %v1886 = vpop.f32.mrb[0].mxu0
      %1887 = vmatprep.mubr.bf16.mxu0 0
      %1888 = vmatmul.mubr.bf16.gmra.mrb[0].mxu0 %v1769
      %v1889 = vpop.f32.mrb[0].mxu0
      %v1890 = vadd.f32 0.0, %v1889
      %v1891 = vpop.f32.mrb[0].mxu0
      %v1892 = vpop.f32.mrb[0].mxu0
      %v1893 = vadd.f32 0.0, %v1892
      %v1894 = vpop.f32.mrb[0].mxu0
      %1895 = vdwg.mxu0
      %v1896 = vadd.f32 %v1728, %v1858
      %v1897 = vadd.f32 %v1729, %v1861
      %v1898 = vadd.f32 %v1730, %v1866
      %v1899 = vadd.f32 %v1731, %v1869
      %v1900 = vadd.f32 %v1732, %v1874
      %v1901 = vadd.f32 %v1733, %v1877
      %v1902 = vadd.f32 %v1734, %v1882
      %v1903 = vadd.f32 %v1735, %v1885
      %v1904 = vadd.f32 %v1736, %v1890
      %v1905 = vadd.f32 %v1737, %v1893
      %v1906 = vpack.c.bf16 %v1897, %v1896
      %v1907 = vpack.c.bf16 %v1899, %v1898
      %v1908 = vpack.c.bf16 %v1901, %v1900
      %v1909 = vpack.c.bf16 %v1903, %v1902
      %v1910 = vpack.c.bf16 %v1905, %v1904
      %v1916 = vunpack.c.l.b16 %v1906
      %v1917 = vunpack.c.h.b16 %v1906
      %v1918 = vunpack.c.l.b16 %v1907
      %v1919 = vunpack.c.h.b16 %v1907
      %v1920 = vunpack.c.l.b16 %v1908
      %v1921 = vunpack.c.h.b16 %v1908
      %v1922 = vunpack.c.l.b16 %v1909
      %v1923 = vunpack.c.h.b16 %v1909
      %v1924 = vunpack.c.l.b16 %v1910
      %v1925 = vunpack.c.h.b16 %v1910
      %v1926 = vpack.c.b16 %v1916, %v1916
      %v1927 = vpack.c.b16 %v1917, %v1917
      %v1928 = vpack.c.b16 %v1918, %v1918
      %v1929 = vpack.c.b16 %v1919, %v1919
      %v1930 = vpack.c.b16 %v1920, %v1920
      %v1931 = vpack.c.b16 %v1921, %v1921
      %v1932 = vpack.c.b16 %v1922, %v1922
      %v1933 = vpack.c.b16 %v1923, %v1923
      %v1934 = vpack.c.b16 %v1924, %v1924
      %v1935 = vpack.c.b16 %v1925, %v1925
      %1946 = vst [vmem:[%s204] sm:$0xf] %v1926
      %1947 = vst [vmem:[%s204 + $0x4] sm:$0xf] %v1927
      %1948 = vst [vmem:[%s204 + $0x8] sm:$0xf] %v1928
      %1949 = vst [vmem:[%s204 + $0xc] sm:$0xf] %v1929
      %1950 = vst [vmem:[%s204 + $0x10] sm:$0xf] %v1930
      %1951 = vst [vmem:[%s204 + $0x14] sm:$0xf] %v1931
      %1952 = vst [vmem:[%s204 + $0x18] sm:$0xf] %v1932
      %1953 = vst [vmem:[%s204 + $0x1c] sm:$0xf] %v1933
      %1954 = vst [vmem:[%s204 + $0x20] sm:$0xf] %v1934
      %1955 = vst [vmem:[%s204 + $0x24] sm:$0xf] %v1935
      %v1956 = vld [vmem:[%s2] sm:$0xff]
      %v1957 = vld [vmem:[%s2 + $0x8] sm:$0xff]
      %v1958 = vld [vmem:[%s2 + $0x10] sm:$0xff]
      %v1959 = vld [vmem:[%s2 + $0x18] sm:$0xff]
      %v1960 = vld [vmem:[%s2 + $0x20] sm:$0xff]
      %v1961 = vld [vmem:[%s2 + $0x28] sm:$0xff]
      %v1962 = vld [vmem:[%s2 + $0x30] sm:$0xff]
      %v1963 = vld [vmem:[%s2 + $0x38] sm:$0xff]
      %v1964 = vld [vmem:[%s2 + $0x40] sm:$0xff]
      %v1965 = vld [vmem:[%s2 + $0x48] sm:$0xff]
      %1967 = vset.pattern.permute.xlu0 0
      %1968 = vperm.xlu0 %1967, %v1956
      %v1969 = vpop.permute.xlu0 %1968
      %1972 = vset.pattern.permute.xlu0 0
      %1973 = vperm.xlu0 %1972, %v1957
      %v1974 = vpop.permute.xlu0 %1973
      %1977 = vset.pattern.permute.xlu0 0
      %1978 = vperm.xlu0 %1977, %v1958
      %v1979 = vpop.permute.xlu0 %1978
      %1982 = vset.pattern.permute.xlu0 0
      %1983 = vperm.xlu0 %1982, %v1959
      %v1984 = vpop.permute.xlu0 %1983
      %1987 = vset.pattern.permute.xlu0 0
      %1988 = vperm.xlu0 %1987, %v1960
      %v1989 = vpop.permute.xlu0 %1988
      %1992 = vset.pattern.permute.xlu0 0
      %1993 = vperm.xlu0 %1992, %v1961
      %v1994 = vpop.permute.xlu0 %1993
      %1997 = vset.pattern.permute.xlu0 0
      %1998 = vperm.xlu0 %1997, %v1962
      %v1999 = vpop.permute.xlu0 %1998
      %2002 = vset.pattern.permute.xlu0 0
      %2003 = vperm.xlu0 %2002, %v1963
      %v2004 = vpop.permute.xlu0 %2003
      %2007 = vset.pattern.permute.xlu0 0
      %2008 = vperm.xlu0 %2007, %v1964
      %v2009 = vpop.permute.xlu0 %2008
      %2012 = vset.pattern.permute.xlu0 0
      %2013 = vperm.xlu0 %2012, %v1965
      %v2014 = vpop.permute.xlu0 %2013
      %v2016 = vmul.f32 %v1896, %v1969
      %v2017 = vmul.f32 %v1897, %v1974
      %v2018 = vmul.f32 %v1898, %v1979
      %v2019 = vmul.f32 %v1899, %v1984
      %v2020 = vmul.f32 %v1900, %v1989
      %v2021 = vmul.f32 %v1901, %v1994
      %v2022 = vmul.f32 %v1902, %v1999
      %v2023 = vmul.f32 %v1903, %v2004
      %v2024 = vmul.f32 %v1904, %v2009
      %v2025 = vmul.f32 %v1905, %v2014
      %v2026 = vadd.f32 %v2016, %v2017
      %v2027 = vadd.f32 %v2026, %v2018
      %v2028 = vadd.f32 %v2027, %v2019
      %v2029 = vadd.f32 %v2028, %v2020
      %v2030 = vadd.f32 %v2029, %v2021
      %v2031 = vadd.f32 %v2030, %v2022
      %v2032 = vadd.f32 %v2031, %v2023
      %v2033 = vadd.f32 %v2032, %v2024
      %v2034 = vadd.f32 %v2033, %v2025
      %v2035 = vrot.slane %v2034, 4
      %v2036 = vadd.f32 %v2034, %v2035
      %v2037 = vrot.slane %v2036, 2
      %v2038 = vadd.f32 %v2036, %v2037
      %v2039 = vrot.slane %v2038, 1
      %v2040 = vadd.f32 %v2038, %v2039
      %2041 = vst [vmem:[%s208] sm:$0x1] %v2040
      %v2042 = vmul.f32 %v2016, %v1896
      %v2043 = vmul.f32 %v2017, %v1897
      %v2044 = vmul.f32 %v2018, %v1898
      %v2045 = vmul.f32 %v2019, %v1899
      %v2046 = vmul.f32 %v2020, %v1900
      %v2047 = vmul.f32 %v2021, %v1901
      %v2048 = vmul.f32 %v2022, %v1902
      %v2049 = vmul.f32 %v2023, %v1903
      %v2050 = vmul.f32 %v2024, %v1904
      %v2051 = vmul.f32 %v2025, %v1905
      %v2052 = vadd.f32 %v2042, %v2043
      %v2053 = vadd.f32 %v2052, %v2044
      %v2054 = vadd.f32 %v2053, %v2045
      %v2055 = vadd.f32 %v2054, %v2046
      %v2056 = vadd.f32 %v2055, %v2047
      %v2057 = vadd.f32 %v2056, %v2048
      %v2058 = vadd.f32 %v2057, %v2049
      %v2059 = vadd.f32 %v2058, %v2050
      %v2060 = vadd.f32 %v2059, %v2051
      %v2061 = vrot.slane %v2060, 4
      %v2062 = vadd.f32 %v2060, %v2061
      %v2063 = vrot.slane %v2062, 2
      %v2064 = vadd.f32 %v2062, %v2063
      %v2065 = vrot.slane %v2064, 1
      %v2066 = vadd.f32 %v2064, %v2065
      %2067 = vst [vmem:[%s208 + $0x1] sm:$0x1] %v2066
      %p2068 = scmp.lt.s32.totalorder %s16, 1
      %s2069 = scalar_select %p2068, %s16, 1
      %s2070 = smul.addr %s2069, 10
      %s2071 = smul.addr %s2070, 4
      %s2072 = scalar_lea.vmem %s3, %s2071
      %p2073 = scmp.lt.s32.totalorder %s16, 1
      %s2074 = scalar_select %p2073, %s16, 1
      %s2075 = smul.addr %s2074, 8
      %s2076 = scalar_lea.vmem %s4, %s2075
      // Predicated region
      $region33: #{basic_block_forward.6} parent=31 // pred_check
        %p2077 = pneg %p102
      $region34: #{basic_block_forward.6} parent=31 // pred_check_branch
        %2079 = sbr.rel (%p2077) target = $region36
      $region35: #{basic_block_forward.6} parent=31 // pred_region
        _
      $region36: #{basic_block_forward.6} parent=31 // pred_fallthru
        _
      // Predicated region
      $region37: #{basic_block_forward.6} parent=31 // pred_check
        %p2080 = pneg %p128
      $region38: #{basic_block_forward.6} parent=31 // pred_check_branch
        %2082 = sbr.rel (%p2080) target = $region40
      $region39: #{basic_block_forward.6} parent=31 // pred_region
        _
      $region40: #{basic_block_forward.6} parent=31 // pred_fallthru
        _
    $region32: #{basic_block_forward.6} parent=5 // pred_fallthru
      _
    %p2083 = scmp.le.s32.totalorder 2, %s11
    // Predicated region
    $region41: #{basic_block_forward.6} parent=5 // pred_check
      %p2084 = pneg %p2083
    $region42: #{basic_block_forward.6} parent=5 // pred_check_branch
      %2086 = sbr.rel (%p2084) target = $region44
    $region43: #{basic_block_forward.6} parent=5 // pred_region
      %s2087 = ssub.s32 %s11, 2
      // Predicated region
      $region45: #{basic_block_forward.6} parent=43 // pred_check
        %p2088 = pneg %p108
      $region46: #{basic_block_forward.6} parent=43 // pred_check_branch
        %2090 = sbr.rel (%p2088) target = $region48
      $region47: #{basic_block_forward.6} parent=43 // pred_region
        %p2091 = scmp.lt.s32.totalorder %s17, 1
        %s2092 = scalar_select %p2091, %s17, 1
        %s2093 = smul.addr %s2092, 10
        %s2094 = smul.addr %s2093, 4
        %s2095 = scalar_lea.vmem %s3, %s2094
      $region48: #{basic_block_forward.6} parent=43 // pred_fallthru
        _
      // Predicated region
      $region49: #{basic_block_forward.6} parent=43 // pred_check
        %p2096 = pneg %p134
      $region50: #{basic_block_forward.6} parent=43 // pred_check_branch
        %2098 = sbr.rel (%p2096) target = $region52
      $region51: #{basic_block_forward.6} parent=43 // pred_region
        %p2099 = scmp.lt.s32.totalorder %s17, 1
        %s2100 = scalar_select %p2099, %s17, 1
        %s2101 = smul.addr %s2100, 8
        %s2102 = scalar_lea.vmem %s4, %s2101
      $region52: #{basic_block_forward.6} parent=43 // pred_fallthru
        _
    $region44: #{basic_block_forward.6} parent=5 // pred_fallthru
      _
  $region6: #{basic_block_forward.6} parent=0 // loop_footer
    %s15 = sadd.s32 1, %s11
  $region7: #{basic_block_forward.6} parent=0 // loop_footer_branch
    %10 = sbr.rel target = $region3
  $region8: #{basic_block_forward.6} parent=0 // loop_exit
    _

</llo_original>
